<compile_context>
chip_gen: v7x
topology: tpu7x:2x2x1
jax: 0.10.0
libtpu: 0.0.40
codegen_flags: <defaults>
</compile_context>

<pallas_src>
import jax
import jax.numpy as jnp
from jax import lax
from jax.experimental import pallas as pl
from jax.experimental.pallas import tpu as pltpu

D_MODEL = 32
N_HEAD = 4
D_HEAD = D_MODEL // N_HEAD
FFN_HIDDEN = 64
LN_EPS = 1e-12          # same eps as the reference LayerNorm
B = 2
S_DEC = 8
S_ENC = 8


# ---------------------------------------------------------------------------
# In-kernel helpers (operate on jnp values)
# ---------------------------------------------------------------------------
def _add_norm(y, res, gamma, beta):
    """LayerNorm(y + res) over the last dim (biased variance, eps=LN_EPS)."""
    z = y + res
    mean = jnp.mean(z, axis=-1, keepdims=True)
    var = jnp.mean((z - mean) ** 2, axis=-1, keepdims=True)
    return (z - mean) * jax.lax.rsqrt(var + jnp.float32(LN_EPS)) * gamma + beta


def _mha(q, k, v, keep, wo, bo):
    """Multi-head attention over batch-stacked rows with a block-diag keep mask.

    q: (Nq, D), k/v: (Nk, D), keep: (Nq, Nk) with 1=keep / 0=mask,
    wo: (D, D), bo: (1, D).  Head outputs are folded directly into the output
    projection (no lane-dim concat).
    """
    qs = q * jnp.float32(1.0 / (D_HEAD ** 0.5))      # pre-scale q once
    is_keep = keep != 0.0                            # hoisted out of head loop
    neg = jnp.float32(-10000.0)
    out = None
    for h in range(N_HEAD):
        lo, hi = h * D_HEAD, (h + 1) * D_HEAD
        s = lax.dot_general(qs[:, lo:hi], k[:, lo:hi],
                            dimension_numbers=(((1,), (1,)), ((), ())),
                            preferred_element_type=jnp.float32)      # (Nq, Nk)
        s = jnp.where(is_keep, s, neg)
        s = s - jnp.max(s, axis=-1, keepdims=True)
        p = jnp.exp(s)
        p = p * pl.reciprocal(jnp.sum(p, axis=-1, keepdims=True), approx=False)
        oh = jnp.dot(p, v[:, lo:hi], preferred_element_type=jnp.float32)
        c = jnp.dot(oh, wo[lo:hi, :], preferred_element_type=jnp.float32)
        out = c if out is None else out + c
    return out + bo


# ---------------------------------------------------------------------------
# Fused decoder-layer kernels (gridless, single invocation, all-VMEM)
# ---------------------------------------------------------------------------
# Packed weight slab wA (D, 10D), column layout:
#   [0:3D]   self-attn Wq|Wk|Wv       [3D:4D]  self-attn Wo
#   [4D:5D]  cross-attn Wq            [5D:7D]  cross-attn Wk|Wv
#   [7D:8D]  cross-attn Wo            [8D:8D+H] FFN W1
# Packed bias slab (13, 128), row layout (first `width` lanes of each row):
#   0 sa_bqkv(3D) 1 sa_bo(D) 2 ca_bq(D) 3 ca_bkv(2D) 4 ca_bo(D)
#   5 b1(H) 6 b2(D) 7/8 ln1 g/b 9/10 ln2 g/b 11/12 ln3 g/b

def _decoder_layer_xattn_kernel(x_ref, enc_ref, mself_ref, mcross_ref,
                                wA_ref, w2_ref, b_ref, out_ref):
    D, H = D_MODEL, FFN_HIDDEN
    x = x_ref[...]          # (B*S, D)
    enc = enc_ref[...]      # (B*Se, D)
    wA = wA_ref[...]        # (D, 10D)
    w2 = w2_ref[...]        # (H, D)
    bs = b_ref[...]         # (13, 128)

    sa_wqkv = wA[:, 0:3 * D]
    sa_wo = wA[:, 3 * D:4 * D]
    ca_wq = wA[:, 4 * D:5 * D]
    ca_wkv = wA[:, 5 * D:7 * D]
    ca_wo = wA[:, 7 * D:8 * D]
    w1 = wA[:, 8 * D:8 * D + H]

    sa_bqkv = bs[0:1, 0:3 * D]
    sa_bo = bs[1:2, 0:D]
    ca_bq = bs[2:3, 0:D]
    ca_bkv = bs[3:4, 0:2 * D]
    ca_bo = bs[4:5, 0:D]
    b1 = bs[5:6, 0:H]
    b2 = bs[6:7, 0:D]
    ln1_g, ln1_b = bs[7:8, 0:D], bs[8:9, 0:D]
    ln2_g, ln2_b = bs[9:10, 0:D], bs[10:11, 0:D]
    ln3_g, ln3_b = bs[11:12, 0:D], bs[12:13, 0:D]

    # ---------------- self-attention (fused QKV) + add&norm ----------------
    qkv = jnp.dot(x, sa_wqkv, preferred_element_type=jnp.float32) + sa_bqkv
    sa = _mha(qkv[:, 0:D], qkv[:, D:2 * D], qkv[:, 2 * D:3 * D],
              mself_ref[...], sa_wo, sa_bo)
    x = _add_norm(sa, x, ln1_g, ln1_b)                        # dropout1 = id

    # ---------------- cross-attention (fused KV) + add&norm ----------------
    qx = jnp.dot(x, ca_wq, preferred_element_type=jnp.float32) + ca_bq
    kv = jnp.dot(enc, ca_wkv, preferred_element_type=jnp.float32) + ca_bkv
    ca = _mha(qx, kv[:, 0:D], kv[:, D:2 * D],
              mcross_ref[...], ca_wo, ca_bo)
    x = _add_norm(ca, x, ln2_g, ln2_b)                        # dropout2 = id

    # ---------------- position-wise feed-forward + add&norm ----------------
    hdn = jnp.maximum(jnp.dot(x, w1, preferred_element_type=jnp.float32) + b1, 0.0)
    y = jnp.dot(hdn, w2, preferred_element_type=jnp.float32) + b2
    out_ref[...] = _add_norm(y, x, ln3_g, ln3_b)              # dropout3 = id


def _decoder_layer_selfonly_kernel(x_ref, mself_ref, wA_ref, w2_ref, b_ref, out_ref):
    """Variant used when encoder_output is None (cross-attention skipped)."""
    D, H = D_MODEL, FFN_HIDDEN
    x = x_ref[...]
    wA = wA_ref[...]
    w2 = w2_ref[...]
    bs = b_ref[...]

    sa_wqkv = wA[:, 0:3 * D]
    sa_wo = wA[:, 3 * D:4 * D]
    w1 = wA[:, 8 * D:8 * D + H]

    sa_bqkv = bs[0:1, 0:3 * D]
    sa_bo = bs[1:2, 0:D]
    b1 = bs[5:6, 0:H]
    b2 = bs[6:7, 0:D]
    ln1_g, ln1_b = bs[7:8, 0:D], bs[8:9, 0:D]
    ln3_g, ln3_b = bs[11:12, 0:D], bs[12:13, 0:D]

    qkv = jnp.dot(x, sa_wqkv, preferred_element_type=jnp.float32) + sa_bqkv
    sa = _mha(qkv[:, 0:D], qkv[:, D:2 * D], qkv[:, 2 * D:3 * D],
              mself_ref[...], sa_wo, sa_bo)
    x = _add_norm(sa, x, ln1_g, ln1_b)

    hdn = jnp.maximum(jnp.dot(x, w1, preferred_element_type=jnp.float32) + b1, 0.0)
    y = jnp.dot(hdn, w2, preferred_element_type=jnp.float32) + b2
    out_ref[...] = _add_norm(y, x, ln3_g, ln3_b)


# ---------------------------------------------------------------------------
# Wrapper
# ---------------------------------------------------------------------------
_VMEM_SPEC = pl.BlockSpec(memory_space=pltpu.MemorySpace.VMEM)


def _block_diag_mask(m):
    """(B, Sq, Sk) keep mask -> (B*Sq, B*Sk) block-diagonal keep mask."""
    Bm, Sq, Sk = m.shape
    eye = jnp.eye(Bm, dtype=m.dtype)
    return jnp.einsum("bc,bqk->bqck", eye, m).reshape(Bm * Sq, Bm * Sk)


def pack_params(params):
    """Pack all weights/biases/LN params into 3 slabs. Call ONCE, outside jit."""
    sa, ca, f = params["self_attn"], params["cross_attn"], params["ffn"]
    wA = jnp.concatenate(
        [sa["wq"], sa["wk"], sa["wv"], sa["wo"],
         ca["wq"], ca["wk"], ca["wv"], ca["wo"], f["w1"]], axis=1)      # (D, 10D)
    rows = [
        jnp.concatenate([sa["bq"], sa["bk"], sa["bv"]], axis=1),        # 0
        sa["bo"],                                                       # 1
        ca["bq"],                                                       # 2
        jnp.concatenate([ca["bk"], ca["bv"]], axis=1),                  # 3
        ca["bo"],                                                       # 4
        f["b1"],                                                        # 5
        f["b2"],                                                        # 6
        params["ln1"]["gamma"], params["ln1"]["beta"],                  # 7, 8
        params["ln2"]["gamma"], params["ln2"]["beta"],                  # 9, 10
        params["ln3"]["gamma"], params["ln3"]["beta"],                  # 11, 12
    ]
    b_slab = jnp.zeros((len(rows), 128), jnp.float32)
    for i, r in enumerate(rows):
        b_slab = b_slab.at[i, :r.shape[1]].set(r[0])
    return {"wA": wA.astype(jnp.float32),
            "w2": f["w2"].astype(jnp.float32),
            "b": b_slab}


def decoder_layer(x, encoder_output, trg_mask, src_mask, packed):
    Bq, S, D = x.shape
    x2 = x.reshape(Bq * S, D)                                   # contiguous, free
    keep_self = _block_diag_mask(trg_mask.astype(jnp.float32))  # (B*S, B*S)

    if encoder_output is not None:
        Se = encoder_output.shape[1]
        enc2 = encoder_output.reshape(Bq * Se, D)
        keep_cross = _block_diag_mask(src_mask.astype(jnp.float32))
        args = (x2, enc2, keep_self, keep_cross,
                packed["wA"], packed["w2"], packed["b"])
        kernel = _decoder_layer_xattn_kernel
    else:
        args = (x2, keep_self, packed["wA"], packed["w2"], packed["b"])
        kernel = _decoder_layer_selfonly_kernel

    out2 = pl.pallas_call(
        kernel,
        out_shape=jax.ShapeDtypeStruct((Bq * S, D), jnp.float32),
        in_specs=[_VMEM_SPEC] * len(args),
        out_specs=_VMEM_SPEC,
    )(*args)
    return out2.reshape(Bq, S, D)


# ---------------------------------------------------------------------------
# Deterministic parameter init (PyTorch-style separate Q/K/V/O params)
# ---------------------------------------------------------------------------
def init_params(key):
    ks = iter(jax.random.split(key, 32))

    def w(shape, scale=0.05):
        return (scale * jax.random.normal(next(ks), shape)).astype(jnp.float32)

    def attn_params():
        return {
            "wq": w((D_MODEL, D_MODEL)), "bq": w((1, D_MODEL)),
            "wk": w((D_MODEL, D_MODEL)), "bk": w((1, D_MODEL)),
            "wv": w((D_MODEL, D_MODEL)), "bv": w((1, D_MODEL)),
            "wo": w((D_MODEL, D_MODEL)), "bo": w((1, D_MODEL)),
        }

    def ln_params():
        return {"gamma": jnp.ones((1, D_MODEL), jnp.float32),
                "beta": jnp.zeros((1, D_MODEL), jnp.float32)}

    return {
        "self_attn": attn_params(),
        "cross_attn": attn_params(),
        "ln1": ln_params(), "ln2": ln_params(), "ln3": ln_params(),
        "ffn": {
            "w1": w((D_MODEL, FFN_HIDDEN)), "b1": w((1, FFN_HIDDEN)),
            "w2": w((FFN_HIDDEN, D_MODEL)), "b2": w((1, D_MODEL)),
        },
    }


# ---------------------------------------------------------------------------
# Pure-JAX reference (correctness check)
# ---------------------------------------------------------------------------
def ref_mha(q, kv, mask, p):
    Bq, Sq, D = q.shape
    Q = q @ p["wq"] + p["bq"]
    K = kv @ p["wk"] + p["bk"]
    V = kv @ p["wv"] + p["bv"]

    def split(t):
        b, s, _ = t.shape
        return t.reshape(b, s, N_HEAD, D_HEAD).transpose(0, 2, 1, 3)

    Qh, Kh, Vh = split(Q), split(K), split(V)
    s = jnp.einsum("bhqd,bhkd->bhqk", Qh, Kh) / jnp.sqrt(jnp.float32(D_HEAD))
    s = jnp.where(mask[:, None, :, :] == 0.0, jnp.float32(-10000.0), s)
    a = jax.nn.softmax(s, axis=-1)
    o = jnp.einsum("bhqk,bhkd->bhqd", a, Vh)
    o = o.transpose(0, 2, 1, 3).reshape(Bq, Sq, D)
    return o @ p["wo"] + p["bo"]


def ref_add_norm(x, res, p):
    y = x + res
    mean = jnp.mean(y, axis=-1, keepdims=True)
    var = jnp.mean((y - mean) ** 2, axis=-1, keepdims=True)
    return (y - mean) / jnp.sqrt(var + LN_EPS) * p["gamma"] + p["beta"]


def ref_decoder_layer(x, enc, trg_mask, src_mask, params):
    _x = x
    x = ref_mha(x, x, trg_mask, params["self_attn"])
    x = ref_add_norm(x, _x, params["ln1"])
    if enc is not None:
        _x = x
        x = ref_mha(x, enc, src_mask, params["cross_attn"])
        x = ref_add_norm(x, _x, params["ln2"])
    _x = x
    h = jnp.maximum(x @ params["ffn"]["w1"] + params["ffn"]["b1"], 0.0)
    x = h @ params["ffn"]["w2"] + params["ffn"]["b2"]
    x = ref_add_norm(x, _x, params["ln3"])
    return x


# ---------------------------------------------------------------------------
if __name__ == "__main__":
    key = jax.random.PRNGKey(0)
    k_x, k_enc, k_p = jax.random.split(key, 3)

    x = jax.random.normal(k_x, (B, S_DEC, D_MODEL), jnp.float32)
    encoder_output = jax.random.normal(k_enc, (B, S_ENC, D_MODEL), jnp.float32)
    params = init_params(k_p)
    packed = pack_params(params)            # weight packing done ONCE, not per call

    # causal target mask (B, S_dec, S_dec); full source mask (B, S_dec, S_enc)
    trg_mask = jnp.broadcast_to(jnp.tril(jnp.ones((S_DEC, S_DEC), jnp.float32)),
                                (B, S_DEC, S_DEC))
    src_mask = jnp.ones((B, S_DEC, S_ENC), jnp.float32)

    # full path (with cross-attention)
    out = jax.jit(decoder_layer)(x, encoder_output, trg_mask, src_mask, packed)
    out = jax.block_until_ready(out)
    ref = ref_decoder_layer(x, encoder_output, trg_mask, src_mask, params)
    assert out.shape == (B, S_DEC, D_MODEL)
    assert jnp.allclose(out, ref, atol=2e-4, rtol=2e-4), \
        f"max abs err = {jnp.max(jnp.abs(out - ref))}"

    # encoder_output=None path (cross-attention skipped, as in the reference)
    out2 = jax.jit(lambda xx, m, p: decoder_layer(xx, None, m, None, p))(
        x, trg_mask, packed)
    out2 = jax.block_until_ready(out2)
    ref2 = ref_decoder_layer(x, None, trg_mask, None, params)
    assert jnp.allclose(out2, ref2, atol=2e-4, rtol=2e-4), \
        f"max abs err (no-cross) = {jnp.max(jnp.abs(out2 - ref2))}"

    print("KERNEL_OK")
</pallas_src>

<mosaic_0001>
module attributes {stable_mosaic.version = 11 : i64} {
  func.func @_decoder_layer_xattn_kernel(%arg0: memref<16x32xf32, #tpu.memory_space<vmem>>, %arg1: memref<16x32xf32, #tpu.memory_space<vmem>>, %arg2: memref<16x16xf32, #tpu.memory_space<vmem>>, %arg3: memref<16x16xf32, #tpu.memory_space<vmem>>, %arg4: memref<32x320xf32, #tpu.memory_space<vmem>>, %arg5: memref<64x32xf32, #tpu.memory_space<vmem>>, %arg6: memref<13x128xf32, #tpu.memory_space<vmem>>, %arg7: memref<16x32xf32, #tpu.memory_space<vmem>>) attributes {dimension_semantics = [], scalar_prefetch = 0 : i64, scratch_operands = 0 : i64, tpu.core_type = #tpu.core_type<tc>} {
    %c0 = arith.constant 0 : index
    %c0_0 = arith.constant 0 : index
    %0 = vector.load %arg0[%c0, %c0_0] : memref<16x32xf32, #tpu.memory_space<vmem>>, vector<16x32xf32>
    %c0_1 = arith.constant 0 : index
    %c0_2 = arith.constant 0 : index
    %1 = vector.load %arg1[%c0_1, %c0_2] : memref<16x32xf32, #tpu.memory_space<vmem>>, vector<16x32xf32>
    %c0_3 = arith.constant 0 : index
    %c0_4 = arith.constant 0 : index
    %2 = vector.load %arg4[%c0_3, %c0_4] : memref<32x320xf32, #tpu.memory_space<vmem>>, vector<32x320xf32>
    %c0_5 = arith.constant 0 : index
    %c0_6 = arith.constant 0 : index
    %3 = vector.load %arg5[%c0_5, %c0_6] : memref<64x32xf32, #tpu.memory_space<vmem>>, vector<64x32xf32>
    %c0_7 = arith.constant 0 : index
    %c0_8 = arith.constant 0 : index
    %4 = vector.load %arg6[%c0_7, %c0_8] : memref<13x128xf32, #tpu.memory_space<vmem>>, vector<13x128xf32>
    %5 = vector.extract_strided_slice %2 {offsets = [0, 0], sizes = [32, 96], strides = [1, 1]} : vector<32x320xf32> to vector<32x96xf32>
    %6 = vector.extract_strided_slice %2 {offsets = [0, 96], sizes = [32, 32], strides = [1, 1]} : vector<32x320xf32> to vector<32x32xf32>
    %7 = vector.extract_strided_slice %2 {offsets = [0, 128], sizes = [32, 32], strides = [1, 1]} : vector<32x320xf32> to vector<32x32xf32>
    %8 = vector.extract_strided_slice %2 {offsets = [0, 160], sizes = [32, 64], strides = [1, 1]} : vector<32x320xf32> to vector<32x64xf32>
    %9 = vector.extract_strided_slice %2 {offsets = [0, 224], sizes = [32, 32], strides = [1, 1]} : vector<32x320xf32> to vector<32x32xf32>
    %10 = vector.extract_strided_slice %2 {offsets = [0, 256], sizes = [32, 64], strides = [1, 1]} : vector<32x320xf32> to vector<32x64xf32>
    %11 = vector.extract_strided_slice %4 {offsets = [0, 0], sizes = [1, 96], strides = [1, 1]} : vector<13x128xf32> to vector<1x96xf32>
    %12 = vector.extract_strided_slice %4 {offsets = [1, 0], sizes = [1, 32], strides = [1, 1]} : vector<13x128xf32> to vector<1x32xf32>
    %13 = vector.extract_strided_slice %4 {offsets = [2, 0], sizes = [1, 32], strides = [1, 1]} : vector<13x128xf32> to vector<1x32xf32>
    %14 = vector.extract_strided_slice %4 {offsets = [3, 0], sizes = [1, 64], strides = [1, 1]} : vector<13x128xf32> to vector<1x64xf32>
    %15 = vector.extract_strided_slice %4 {offsets = [4, 0], sizes = [1, 32], strides = [1, 1]} : vector<13x128xf32> to vector<1x32xf32>
    %16 = vector.extract_strided_slice %4 {offsets = [5, 0], sizes = [1, 64], strides = [1, 1]} : vector<13x128xf32> to vector<1x64xf32>
    %17 = vector.extract_strided_slice %4 {offsets = [6, 0], sizes = [1, 32], strides = [1, 1]} : vector<13x128xf32> to vector<1x32xf32>
    %18 = vector.extract_strided_slice %4 {offsets = [7, 0], sizes = [1, 32], strides = [1, 1]} : vector<13x128xf32> to vector<1x32xf32>
    %19 = vector.extract_strided_slice %4 {offsets = [8, 0], sizes = [1, 32], strides = [1, 1]} : vector<13x128xf32> to vector<1x32xf32>
    %20 = vector.extract_strided_slice %4 {offsets = [9, 0], sizes = [1, 32], strides = [1, 1]} : vector<13x128xf32> to vector<1x32xf32>
    %21 = vector.extract_strided_slice %4 {offsets = [10, 0], sizes = [1, 32], strides = [1, 1]} : vector<13x128xf32> to vector<1x32xf32>
    %22 = vector.extract_strided_slice %4 {offsets = [11, 0], sizes = [1, 32], strides = [1, 1]} : vector<13x128xf32> to vector<1x32xf32>
    %23 = vector.extract_strided_slice %4 {offsets = [12, 0], sizes = [1, 32], strides = [1, 1]} : vector<13x128xf32> to vector<1x32xf32>
    %cst = arith.constant dense<0.000000e+00> : vector<16x96xf32>
    %24 = tpu.matmul %0, %5, %cst {dimension_numbers = #tpu.dot_dimension_numbers<[1], [0], [0], [1], [0, 0, 1, 1], [], []>} : vector<16x32xf32>, vector<32x96xf32>, vector<16x96xf32> -> vector<16x96xf32>
    %25 = vector.broadcast %11 : vector<1x96xf32> to vector<16x96xf32>
    %26 = arith.addf %24, %25 : vector<16x96xf32>
    %27 = vector.extract_strided_slice %26 {offsets = [0, 0], sizes = [16, 32], strides = [1, 1]} : vector<16x96xf32> to vector<16x32xf32>
    %28 = vector.extract_strided_slice %26 {offsets = [0, 32], sizes = [16, 32], strides = [1, 1]} : vector<16x96xf32> to vector<16x32xf32>
    %29 = vector.extract_strided_slice %26 {offsets = [0, 64], sizes = [16, 32], strides = [1, 1]} : vector<16x96xf32> to vector<16x32xf32>
    %c0_9 = arith.constant 0 : index
    %c0_10 = arith.constant 0 : index
    %30 = vector.load %arg2[%c0_9, %c0_10] : memref<16x16xf32, #tpu.memory_space<vmem>>, vector<16x16xf32>
    %cst_11 = arith.constant 0.353553385 : f32
    %31 = vector.broadcast %cst_11 : f32 to vector<16x32xf32>
    %32 = arith.mulf %27, %31 : vector<16x32xf32>
    %cst_12 = arith.constant 0.000000e+00 : f32
    %33 = vector.broadcast %cst_12 : f32 to vector<16x16xf32>
    %34 = arith.cmpf one, %30, %33 : vector<16x16xf32>
    %35 = vector.extract_strided_slice %32 {offsets = [0, 0], sizes = [16, 8], strides = [1, 1]} : vector<16x32xf32> to vector<16x8xf32>
    %36 = vector.extract_strided_slice %28 {offsets = [0, 0], sizes = [16, 8], strides = [1, 1]} : vector<16x32xf32> to vector<16x8xf32>
    %cst_13 = arith.constant dense<0.000000e+00> : vector<16x16xf32>
    %37 = tpu.matmul %35, %36, %cst_13 {dimension_numbers = #tpu.dot_dimension_numbers<[1], [1], [0], [0], [0, 0, 1, 0], [], []>} : vector<16x8xf32>, vector<16x8xf32>, vector<16x16xf32> -> vector<16x16xf32>
    %cst_14 = arith.constant -1.000000e+04 : f32
    %38 = vector.broadcast %cst_14 : f32 to vector<16x16xf32>
    %39 = arith.select %34, %37, %38 : vector<16x16xi1>, vector<16x16xf32>
    %cst_15 = arith.constant dense<0xFF800000> : vector<16xf32>
    %40 = vector.multi_reduction <maximumf>, %39, %cst_15 [1] : vector<16x16xf32> to vector<16xf32>
    %41 = vector.shape_cast %40 : vector<16xf32> to vector<16x1xf32>
    %42 = vector.broadcast %41 : vector<16x1xf32> to vector<16x16xf32>
    %43 = arith.subf %39, %42 : vector<16x16xf32>
    %44 = math.exp %43 : vector<16x16xf32>
    %cst_16 = arith.constant dense<0.000000e+00> : vector<16xf32>
    %45 = vector.multi_reduction <add>, %44, %cst_16 [1] : vector<16x16xf32> to vector<16xf32>
    %46 = vector.shape_cast %45 : vector<16xf32> to vector<16x1xf32>
    %47 = tpu.reciprocal %46 : vector<16x1xf32> -> vector<16x1xf32>
    %48 = vector.broadcast %47 : vector<16x1xf32> to vector<16x16xf32>
    %49 = arith.mulf %44, %48 : vector<16x16xf32>
    %50 = vector.extract_strided_slice %29 {offsets = [0, 0], sizes = [16, 8], strides = [1, 1]} : vector<16x32xf32> to vector<16x8xf32>
    %cst_17 = arith.constant dense<0.000000e+00> : vector<16x8xf32>
    %51 = tpu.matmul %49, %50, %cst_17 {dimension_numbers = #tpu.dot_dimension_numbers<[1], [0], [0], [1], [0, 0, 1, 1], [], []>} : vector<16x16xf32>, vector<16x8xf32>, vector<16x8xf32> -> vector<16x8xf32>
    %52 = vector.extract_strided_slice %6 {offsets = [0, 0], sizes = [8, 32], strides = [1, 1]} : vector<32x32xf32> to vector<8x32xf32>
    %cst_18 = arith.constant dense<0.000000e+00> : vector<16x32xf32>
    %53 = tpu.matmul %51, %52, %cst_18 {dimension_numbers = #tpu.dot_dimension_numbers<[1], [0], [0], [1], [0, 0, 1, 1], [], []>} : vector<16x8xf32>, vector<8x32xf32>, vector<16x32xf32> -> vector<16x32xf32>
    %54 = vector.extract_strided_slice %32 {offsets = [0, 8], sizes = [16, 8], strides = [1, 1]} : vector<16x32xf32> to vector<16x8xf32>
    %55 = vector.extract_strided_slice %28 {offsets = [0, 8], sizes = [16, 8], strides = [1, 1]} : vector<16x32xf32> to vector<16x8xf32>
    %cst_19 = arith.constant dense<0.000000e+00> : vector<16x16xf32>
    %56 = tpu.matmul %54, %55, %cst_19 {dimension_numbers = #tpu.dot_dimension_numbers<[1], [1], [0], [0], [0, 0, 1, 0], [], []>} : vector<16x8xf32>, vector<16x8xf32>, vector<16x16xf32> -> vector<16x16xf32>
    %cst_20 = arith.constant -1.000000e+04 : f32
    %57 = vector.broadcast %cst_20 : f32 to vector<16x16xf32>
    %58 = arith.select %34, %56, %57 : vector<16x16xi1>, vector<16x16xf32>
    %cst_21 = arith.constant dense<0xFF800000> : vector<16xf32>
    %59 = vector.multi_reduction <maximumf>, %58, %cst_21 [1] : vector<16x16xf32> to vector<16xf32>
    %60 = vector.shape_cast %59 : vector<16xf32> to vector<16x1xf32>
    %61 = vector.broadcast %60 : vector<16x1xf32> to vector<16x16xf32>
    %62 = arith.subf %58, %61 : vector<16x16xf32>
    %63 = math.exp %62 : vector<16x16xf32>
    %cst_22 = arith.constant dense<0.000000e+00> : vector<16xf32>
    %64 = vector.multi_reduction <add>, %63, %cst_22 [1] : vector<16x16xf32> to vector<16xf32>
    %65 = vector.shape_cast %64 : vector<16xf32> to vector<16x1xf32>
    %66 = tpu.reciprocal %65 : vector<16x1xf32> -> vector<16x1xf32>
    %67 = vector.broadcast %66 : vector<16x1xf32> to vector<16x16xf32>
    %68 = arith.mulf %63, %67 : vector<16x16xf32>
    %69 = vector.extract_strided_slice %29 {offsets = [0, 8], sizes = [16, 8], strides = [1, 1]} : vector<16x32xf32> to vector<16x8xf32>
    %cst_23 = arith.constant dense<0.000000e+00> : vector<16x8xf32>
    %70 = tpu.matmul %68, %69, %cst_23 {dimension_numbers = #tpu.dot_dimension_numbers<[1], [0], [0], [1], [0, 0, 1, 1], [], []>} : vector<16x16xf32>, vector<16x8xf32>, vector<16x8xf32> -> vector<16x8xf32>
    %71 = vector.extract_strided_slice %6 {offsets = [8, 0], sizes = [8, 32], strides = [1, 1]} : vector<32x32xf32> to vector<8x32xf32>
    %cst_24 = arith.constant dense<0.000000e+00> : vector<16x32xf32>
    %72 = tpu.matmul %70, %71, %cst_24 {dimension_numbers = #tpu.dot_dimension_numbers<[1], [0], [0], [1], [0, 0, 1, 1], [], []>} : vector<16x8xf32>, vector<8x32xf32>, vector<16x32xf32> -> vector<16x32xf32>
    %73 = arith.addf %53, %72 : vector<16x32xf32>
    %74 = vector.extract_strided_slice %32 {offsets = [0, 16], sizes = [16, 8], strides = [1, 1]} : vector<16x32xf32> to vector<16x8xf32>
    %75 = vector.extract_strided_slice %28 {offsets = [0, 16], sizes = [16, 8], strides = [1, 1]} : vector<16x32xf32> to vector<16x8xf32>
    %cst_25 = arith.constant dense<0.000000e+00> : vector<16x16xf32>
    %76 = tpu.matmul %74, %75, %cst_25 {dimension_numbers = #tpu.dot_dimension_numbers<[1], [1], [0], [0], [0, 0, 1, 0], [], []>} : vector<16x8xf32>, vector<16x8xf32>, vector<16x16xf32> -> vector<16x16xf32>
    %cst_26 = arith.constant -1.000000e+04 : f32
    %77 = vector.broadcast %cst_26 : f32 to vector<16x16xf32>
    %78 = arith.select %34, %76, %77 : vector<16x16xi1>, vector<16x16xf32>
    %cst_27 = arith.constant dense<0xFF800000> : vector<16xf32>
    %79 = vector.multi_reduction <maximumf>, %78, %cst_27 [1] : vector<16x16xf32> to vector<16xf32>
    %80 = vector.shape_cast %79 : vector<16xf32> to vector<16x1xf32>
    %81 = vector.broadcast %80 : vector<16x1xf32> to vector<16x16xf32>
    %82 = arith.subf %78, %81 : vector<16x16xf32>
    %83 = math.exp %82 : vector<16x16xf32>
    %cst_28 = arith.constant dense<0.000000e+00> : vector<16xf32>
    %84 = vector.multi_reduction <add>, %83, %cst_28 [1] : vector<16x16xf32> to vector<16xf32>
    %85 = vector.shape_cast %84 : vector<16xf32> to vector<16x1xf32>
    %86 = tpu.reciprocal %85 : vector<16x1xf32> -> vector<16x1xf32>
    %87 = vector.broadcast %86 : vector<16x1xf32> to vector<16x16xf32>
    %88 = arith.mulf %83, %87 : vector<16x16xf32>
    %89 = vector.extract_strided_slice %29 {offsets = [0, 16], sizes = [16, 8], strides = [1, 1]} : vector<16x32xf32> to vector<16x8xf32>
    %cst_29 = arith.constant dense<0.000000e+00> : vector<16x8xf32>
    %90 = tpu.matmul %88, %89, %cst_29 {dimension_numbers = #tpu.dot_dimension_numbers<[1], [0], [0], [1], [0, 0, 1, 1], [], []>} : vector<16x16xf32>, vector<16x8xf32>, vector<16x8xf32> -> vector<16x8xf32>
    %91 = vector.extract_strided_slice %6 {offsets = [16, 0], sizes = [8, 32], strides = [1, 1]} : vector<32x32xf32> to vector<8x32xf32>
    %cst_30 = arith.constant dense<0.000000e+00> : vector<16x32xf32>
    %92 = tpu.matmul %90, %91, %cst_30 {dimension_numbers = #tpu.dot_dimension_numbers<[1], [0], [0], [1], [0, 0, 1, 1], [], []>} : vector<16x8xf32>, vector<8x32xf32>, vector<16x32xf32> -> vector<16x32xf32>
    %93 = arith.addf %73, %92 : vector<16x32xf32>
    %94 = vector.extract_strided_slice %32 {offsets = [0, 24], sizes = [16, 8], strides = [1, 1]} : vector<16x32xf32> to vector<16x8xf32>
    %95 = vector.extract_strided_slice %28 {offsets = [0, 24], sizes = [16, 8], strides = [1, 1]} : vector<16x32xf32> to vector<16x8xf32>
    %cst_31 = arith.constant dense<0.000000e+00> : vector<16x16xf32>
    %96 = tpu.matmul %94, %95, %cst_31 {dimension_numbers = #tpu.dot_dimension_numbers<[1], [1], [0], [0], [0, 0, 1, 0], [], []>} : vector<16x8xf32>, vector<16x8xf32>, vector<16x16xf32> -> vector<16x16xf32>
    %cst_32 = arith.constant -1.000000e+04 : f32
    %97 = vector.broadcast %cst_32 : f32 to vector<16x16xf32>
    %98 = arith.select %34, %96, %97 : vector<16x16xi1>, vector<16x16xf32>
    %cst_33 = arith.constant dense<0xFF800000> : vector<16xf32>
    %99 = vector.multi_reduction <maximumf>, %98, %cst_33 [1] : vector<16x16xf32> to vector<16xf32>
    %100 = vector.shape_cast %99 : vector<16xf32> to vector<16x1xf32>
    %101 = vector.broadcast %100 : vector<16x1xf32> to vector<16x16xf32>
    %102 = arith.subf %98, %101 : vector<16x16xf32>
    %103 = math.exp %102 : vector<16x16xf32>
    %cst_34 = arith.constant dense<0.000000e+00> : vector<16xf32>
    %104 = vector.multi_reduction <add>, %103, %cst_34 [1] : vector<16x16xf32> to vector<16xf32>
    %105 = vector.shape_cast %104 : vector<16xf32> to vector<16x1xf32>
    %106 = tpu.reciprocal %105 : vector<16x1xf32> -> vector<16x1xf32>
    %107 = vector.broadcast %106 : vector<16x1xf32> to vector<16x16xf32>
    %108 = arith.mulf %103, %107 : vector<16x16xf32>
    %109 = vector.extract_strided_slice %29 {offsets = [0, 24], sizes = [16, 8], strides = [1, 1]} : vector<16x32xf32> to vector<16x8xf32>
    %cst_35 = arith.constant dense<0.000000e+00> : vector<16x8xf32>
    %110 = tpu.matmul %108, %109, %cst_35 {dimension_numbers = #tpu.dot_dimension_numbers<[1], [0], [0], [1], [0, 0, 1, 1], [], []>} : vector<16x16xf32>, vector<16x8xf32>, vector<16x8xf32> -> vector<16x8xf32>
    %111 = vector.extract_strided_slice %6 {offsets = [24, 0], sizes = [8, 32], strides = [1, 1]} : vector<32x32xf32> to vector<8x32xf32>
    %cst_36 = arith.constant dense<0.000000e+00> : vector<16x32xf32>
    %112 = tpu.matmul %110, %111, %cst_36 {dimension_numbers = #tpu.dot_dimension_numbers<[1], [0], [0], [1], [0, 0, 1, 1], [], []>} : vector<16x8xf32>, vector<8x32xf32>, vector<16x32xf32> -> vector<16x32xf32>
    %113 = arith.addf %93, %112 : vector<16x32xf32>
    %114 = vector.broadcast %12 : vector<1x32xf32> to vector<16x32xf32>
    %115 = arith.addf %113, %114 : vector<16x32xf32>
    %116 = arith.addf %115, %0 : vector<16x32xf32>
    %cst_37 = arith.constant dense<0.000000e+00> : vector<16xf32>
    %117 = vector.multi_reduction <add>, %116, %cst_37 [1] : vector<16x32xf32> to vector<16xf32>
    %118 = vector.shape_cast %117 : vector<16xf32> to vector<16x1xf32>
    %cst_38 = arith.constant 3.200000e+01 : f32
    %119 = vector.broadcast %cst_38 : f32 to vector<16x1xf32>
    %120 = arith.divf %118, %119 : vector<16x1xf32>
    %121 = vector.broadcast %120 : vector<16x1xf32> to vector<16x32xf32>
    %122 = arith.subf %116, %121 : vector<16x32xf32>
    %123 = arith.mulf %122, %122 : vector<16x32xf32>
    %cst_39 = arith.constant dense<0.000000e+00> : vector<16xf32>
    %124 = vector.multi_reduction <add>, %123, %cst_39 [1] : vector<16x32xf32> to vector<16xf32>
    %125 = vector.shape_cast %124 : vector<16xf32> to vector<16x1xf32>
    %cst_40 = arith.constant 3.200000e+01 : f32
    %126 = vector.broadcast %cst_40 : f32 to vector<16x1xf32>
    %127 = arith.divf %125, %126 : vector<16x1xf32>
    %128 = vector.broadcast %120 : vector<16x1xf32> to vector<16x32xf32>
    %129 = arith.subf %116, %128 : vector<16x32xf32>
    %cst_41 = arith.constant 9.99999996E-13 : f32
    %130 = vector.broadcast %cst_41 : f32 to vector<16x1xf32>
    %131 = arith.addf %127, %130 : vector<16x1xf32>
    %132 = math.rsqrt %131 : vector<16x1xf32>
    %133 = vector.broadcast %132 : vector<16x1xf32> to vector<16x32xf32>
    %134 = arith.mulf %129, %133 : vector<16x32xf32>
    %135 = vector.broadcast %18 : vector<1x32xf32> to vector<16x32xf32>
    %136 = arith.mulf %134, %135 : vector<16x32xf32>
    %137 = vector.broadcast %19 : vector<1x32xf32> to vector<16x32xf32>
    %138 = arith.addf %136, %137 : vector<16x32xf32>
    %cst_42 = arith.constant dense<0.000000e+00> : vector<16x32xf32>
    %139 = tpu.matmul %138, %7, %cst_42 {dimension_numbers = #tpu.dot_dimension_numbers<[1], [0], [0], [1], [0, 0, 1, 1], [], []>} : vector<16x32xf32>, vector<32x32xf32>, vector<16x32xf32> -> vector<16x32xf32>
    %140 = vector.broadcast %13 : vector<1x32xf32> to vector<16x32xf32>
    %141 = arith.addf %139, %140 : vector<16x32xf32>
    %cst_43 = arith.constant dense<0.000000e+00> : vector<16x64xf32>
    %142 = tpu.matmul %1, %8, %cst_43 {dimension_numbers = #tpu.dot_dimension_numbers<[1], [0], [0], [1], [0, 0, 1, 1], [], []>} : vector<16x32xf32>, vector<32x64xf32>, vector<16x64xf32> -> vector<16x64xf32>
    %143 = vector.broadcast %14 : vector<1x64xf32> to vector<16x64xf32>
    %144 = arith.addf %142, %143 : vector<16x64xf32>
    %145 = vector.extract_strided_slice %144 {offsets = [0, 0], sizes = [16, 32], strides = [1, 1]} : vector<16x64xf32> to vector<16x32xf32>
    %146 = vector.extract_strided_slice %144 {offsets = [0, 32], sizes = [16, 32], strides = [1, 1]} : vector<16x64xf32> to vector<16x32xf32>
    %c0_44 = arith.constant 0 : index
    %c0_45 = arith.constant 0 : index
    %147 = vector.load %arg3[%c0_44, %c0_45] : memref<16x16xf32, #tpu.memory_space<vmem>>, vector<16x16xf32>
    %cst_46 = arith.constant 0.353553385 : f32
    %148 = vector.broadcast %cst_46 : f32 to vector<16x32xf32>
    %149 = arith.mulf %141, %148 : vector<16x32xf32>
    %cst_47 = arith.constant 0.000000e+00 : f32
    %150 = vector.broadcast %cst_47 : f32 to vector<16x16xf32>
    %151 = arith.cmpf one, %147, %150 : vector<16x16xf32>
    %152 = vector.extract_strided_slice %149 {offsets = [0, 0], sizes = [16, 8], strides = [1, 1]} : vector<16x32xf32> to vector<16x8xf32>
    %153 = vector.extract_strided_slice %145 {offsets = [0, 0], sizes = [16, 8], strides = [1, 1]} : vector<16x32xf32> to vector<16x8xf32>
    %cst_48 = arith.constant dense<0.000000e+00> : vector<16x16xf32>
    %154 = tpu.matmul %152, %153, %cst_48 {dimension_numbers = #tpu.dot_dimension_numbers<[1], [1], [0], [0], [0, 0, 1, 0], [], []>} : vector<16x8xf32>, vector<16x8xf32>, vector<16x16xf32> -> vector<16x16xf32>
    %cst_49 = arith.constant -1.000000e+04 : f32
    %155 = vector.broadcast %cst_49 : f32 to vector<16x16xf32>
    %156 = arith.select %151, %154, %155 : vector<16x16xi1>, vector<16x16xf32>
    %cst_50 = arith.constant dense<0xFF800000> : vector<16xf32>
    %157 = vector.multi_reduction <maximumf>, %156, %cst_50 [1] : vector<16x16xf32> to vector<16xf32>
    %158 = vector.shape_cast %157 : vector<16xf32> to vector<16x1xf32>
    %159 = vector.broadcast %158 : vector<16x1xf32> to vector<16x16xf32>
    %160 = arith.subf %156, %159 : vector<16x16xf32>
    %161 = math.exp %160 : vector<16x16xf32>
    %cst_51 = arith.constant dense<0.000000e+00> : vector<16xf32>
    %162 = vector.multi_reduction <add>, %161, %cst_51 [1] : vector<16x16xf32> to vector<16xf32>
    %163 = vector.shape_cast %162 : vector<16xf32> to vector<16x1xf32>
    %164 = tpu.reciprocal %163 : vector<16x1xf32> -> vector<16x1xf32>
    %165 = vector.broadcast %164 : vector<16x1xf32> to vector<16x16xf32>
    %166 = arith.mulf %161, %165 : vector<16x16xf32>
    %167 = vector.extract_strided_slice %146 {offsets = [0, 0], sizes = [16, 8], strides = [1, 1]} : vector<16x32xf32> to vector<16x8xf32>
    %cst_52 = arith.constant dense<0.000000e+00> : vector<16x8xf32>
    %168 = tpu.matmul %166, %167, %cst_52 {dimension_numbers = #tpu.dot_dimension_numbers<[1], [0], [0], [1], [0, 0, 1, 1], [], []>} : vector<16x16xf32>, vector<16x8xf32>, vector<16x8xf32> -> vector<16x8xf32>
    %169 = vector.extract_strided_slice %9 {offsets = [0, 0], sizes = [8, 32], strides = [1, 1]} : vector<32x32xf32> to vector<8x32xf32>
    %cst_53 = arith.constant dense<0.000000e+00> : vector<16x32xf32>
    %170 = tpu.matmul %168, %169, %cst_53 {dimension_numbers = #tpu.dot_dimension_numbers<[1], [0], [0], [1], [0, 0, 1, 1], [], []>} : vector<16x8xf32>, vector<8x32xf32>, vector<16x32xf32> -> vector<16x32xf32>
    %171 = vector.extract_strided_slice %149 {offsets = [0, 8], sizes = [16, 8], strides = [1, 1]} : vector<16x32xf32> to vector<16x8xf32>
    %172 = vector.extract_strided_slice %145 {offsets = [0, 8], sizes = [16, 8], strides = [1, 1]} : vector<16x32xf32> to vector<16x8xf32>
    %cst_54 = arith.constant dense<0.000000e+00> : vector<16x16xf32>
    %173 = tpu.matmul %171, %172, %cst_54 {dimension_numbers = #tpu.dot_dimension_numbers<[1], [1], [0], [0], [0, 0, 1, 0], [], []>} : vector<16x8xf32>, vector<16x8xf32>, vector<16x16xf32> -> vector<16x16xf32>
    %cst_55 = arith.constant -1.000000e+04 : f32
    %174 = vector.broadcast %cst_55 : f32 to vector<16x16xf32>
    %175 = arith.select %151, %173, %174 : vector<16x16xi1>, vector<16x16xf32>
    %cst_56 = arith.constant dense<0xFF800000> : vector<16xf32>
    %176 = vector.multi_reduction <maximumf>, %175, %cst_56 [1] : vector<16x16xf32> to vector<16xf32>
    %177 = vector.shape_cast %176 : vector<16xf32> to vector<16x1xf32>
    %178 = vector.broadcast %177 : vector<16x1xf32> to vector<16x16xf32>
    %179 = arith.subf %175, %178 : vector<16x16xf32>
    %180 = math.exp %179 : vector<16x16xf32>
    %cst_57 = arith.constant dense<0.000000e+00> : vector<16xf32>
    %181 = vector.multi_reduction <add>, %180, %cst_57 [1] : vector<16x16xf32> to vector<16xf32>
    %182 = vector.shape_cast %181 : vector<16xf32> to vector<16x1xf32>
    %183 = tpu.reciprocal %182 : vector<16x1xf32> -> vector<16x1xf32>
    %184 = vector.broadcast %183 : vector<16x1xf32> to vector<16x16xf32>
    %185 = arith.mulf %180, %184 : vector<16x16xf32>
    %186 = vector.extract_strided_slice %146 {offsets = [0, 8], sizes = [16, 8], strides = [1, 1]} : vector<16x32xf32> to vector<16x8xf32>
    %cst_58 = arith.constant dense<0.000000e+00> : vector<16x8xf32>
    %187 = tpu.matmul %185, %186, %cst_58 {dimension_numbers = #tpu.dot_dimension_numbers<[1], [0], [0], [1], [0, 0, 1, 1], [], []>} : vector<16x16xf32>, vector<16x8xf32>, vector<16x8xf32> -> vector<16x8xf32>
    %188 = vector.extract_strided_slice %9 {offsets = [8, 0], sizes = [8, 32], strides = [1, 1]} : vector<32x32xf32> to vector<8x32xf32>
    %cst_59 = arith.constant dense<0.000000e+00> : vector<16x32xf32>
    %189 = tpu.matmul %187, %188, %cst_59 {dimension_numbers = #tpu.dot_dimension_numbers<[1], [0], [0], [1], [0, 0, 1, 1], [], []>} : vector<16x8xf32>, vector<8x32xf32>, vector<16x32xf32> -> vector<16x32xf32>
    %190 = arith.addf %170, %189 : vector<16x32xf32>
    %191 = vector.extract_strided_slice %149 {offsets = [0, 16], sizes = [16, 8], strides = [1, 1]} : vector<16x32xf32> to vector<16x8xf32>
    %192 = vector.extract_strided_slice %145 {offsets = [0, 16], sizes = [16, 8], strides = [1, 1]} : vector<16x32xf32> to vector<16x8xf32>
    %cst_60 = arith.constant dense<0.000000e+00> : vector<16x16xf32>
    %193 = tpu.matmul %191, %192, %cst_60 {dimension_numbers = #tpu.dot_dimension_numbers<[1], [1], [0], [0], [0, 0, 1, 0], [], []>} : vector<16x8xf32>, vector<16x8xf32>, vector<16x16xf32> -> vector<16x16xf32>
    %cst_61 = arith.constant -1.000000e+04 : f32
    %194 = vector.broadcast %cst_61 : f32 to vector<16x16xf32>
    %195 = arith.select %151, %193, %194 : vector<16x16xi1>, vector<16x16xf32>
    %cst_62 = arith.constant dense<0xFF800000> : vector<16xf32>
    %196 = vector.multi_reduction <maximumf>, %195, %cst_62 [1] : vector<16x16xf32> to vector<16xf32>
    %197 = vector.shape_cast %196 : vector<16xf32> to vector<16x1xf32>
    %198 = vector.broadcast %197 : vector<16x1xf32> to vector<16x16xf32>
    %199 = arith.subf %195, %198 : vector<16x16xf32>
    %200 = math.exp %199 : vector<16x16xf32>
    %cst_63 = arith.constant dense<0.000000e+00> : vector<16xf32>
    %201 = vector.multi_reduction <add>, %200, %cst_63 [1] : vector<16x16xf32> to vector<16xf32>
    %202 = vector.shape_cast %201 : vector<16xf32> to vector<16x1xf32>
    %203 = tpu.reciprocal %202 : vector<16x1xf32> -> vector<16x1xf32>
    %204 = vector.broadcast %203 : vector<16x1xf32> to vector<16x16xf32>
    %205 = arith.mulf %200, %204 : vector<16x16xf32>
    %206 = vector.extract_strided_slice %146 {offsets = [0, 16], sizes = [16, 8], strides = [1, 1]} : vector<16x32xf32> to vector<16x8xf32>
    %cst_64 = arith.constant dense<0.000000e+00> : vector<16x8xf32>
    %207 = tpu.matmul %205, %206, %cst_64 {dimension_numbers = #tpu.dot_dimension_numbers<[1], [0], [0], [1], [0, 0, 1, 1], [], []>} : vector<16x16xf32>, vector<16x8xf32>, vector<16x8xf32> -> vector<16x8xf32>
    %208 = vector.extract_strided_slice %9 {offsets = [16, 0], sizes = [8, 32], strides = [1, 1]} : vector<32x32xf32> to vector<8x32xf32>
    %cst_65 = arith.constant dense<0.000000e+00> : vector<16x32xf32>
    %209 = tpu.matmul %207, %208, %cst_65 {dimension_numbers = #tpu.dot_dimension_numbers<[1], [0], [0], [1], [0, 0, 1, 1], [], []>} : vector<16x8xf32>, vector<8x32xf32>, vector<16x32xf32> -> vector<16x32xf32>
    %210 = arith.addf %190, %209 : vector<16x32xf32>
    %211 = vector.extract_strided_slice %149 {offsets = [0, 24], sizes = [16, 8], strides = [1, 1]} : vector<16x32xf32> to vector<16x8xf32>
    %212 = vector.extract_strided_slice %145 {offsets = [0, 24], sizes = [16, 8], strides = [1, 1]} : vector<16x32xf32> to vector<16x8xf32>
    %cst_66 = arith.constant dense<0.000000e+00> : vector<16x16xf32>
    %213 = tpu.matmul %211, %212, %cst_66 {dimension_numbers = #tpu.dot_dimension_numbers<[1], [1], [0], [0], [0, 0, 1, 0], [], []>} : vector<16x8xf32>, vector<16x8xf32>, vector<16x16xf32> -> vector<16x16xf32>
    %cst_67 = arith.constant -1.000000e+04 : f32
    %214 = vector.broadcast %cst_67 : f32 to vector<16x16xf32>
    %215 = arith.select %151, %213, %214 : vector<16x16xi1>, vector<16x16xf32>
    %cst_68 = arith.constant dense<0xFF800000> : vector<16xf32>
    %216 = vector.multi_reduction <maximumf>, %215, %cst_68 [1] : vector<16x16xf32> to vector<16xf32>
    %217 = vector.shape_cast %216 : vector<16xf32> to vector<16x1xf32>
    %218 = vector.broadcast %217 : vector<16x1xf32> to vector<16x16xf32>
    %219 = arith.subf %215, %218 : vector<16x16xf32>
    %220 = math.exp %219 : vector<16x16xf32>
    %cst_69 = arith.constant dense<0.000000e+00> : vector<16xf32>
    %221 = vector.multi_reduction <add>, %220, %cst_69 [1] : vector<16x16xf32> to vector<16xf32>
    %222 = vector.shape_cast %221 : vector<16xf32> to vector<16x1xf32>
    %223 = tpu.reciprocal %222 : vector<16x1xf32> -> vector<16x1xf32>
    %224 = vector.broadcast %223 : vector<16x1xf32> to vector<16x16xf32>
    %225 = arith.mulf %220, %224 : vector<16x16xf32>
    %226 = vector.extract_strided_slice %146 {offsets = [0, 24], sizes = [16, 8], strides = [1, 1]} : vector<16x32xf32> to vector<16x8xf32>
    %cst_70 = arith.constant dense<0.000000e+00> : vector<16x8xf32>
    %227 = tpu.matmul %225, %226, %cst_70 {dimension_numbers = #tpu.dot_dimension_numbers<[1], [0], [0], [1], [0, 0, 1, 1], [], []>} : vector<16x16xf32>, vector<16x8xf32>, vector<16x8xf32> -> vector<16x8xf32>
    %228 = vector.extract_strided_slice %9 {offsets = [24, 0], sizes = [8, 32], strides = [1, 1]} : vector<32x32xf32> to vector<8x32xf32>
    %cst_71 = arith.constant dense<0.000000e+00> : vector<16x32xf32>
    %229 = tpu.matmul %227, %228, %cst_71 {dimension_numbers = #tpu.dot_dimension_numbers<[1], [0], [0], [1], [0, 0, 1, 1], [], []>} : vector<16x8xf32>, vector<8x32xf32>, vector<16x32xf32> -> vector<16x32xf32>
    %230 = arith.addf %210, %229 : vector<16x32xf32>
    %231 = vector.broadcast %15 : vector<1x32xf32> to vector<16x32xf32>
    %232 = arith.addf %230, %231 : vector<16x32xf32>
    %233 = arith.addf %232, %138 : vector<16x32xf32>
    %cst_72 = arith.constant dense<0.000000e+00> : vector<16xf32>
    %234 = vector.multi_reduction <add>, %233, %cst_72 [1] : vector<16x32xf32> to vector<16xf32>
    %235 = vector.shape_cast %234 : vector<16xf32> to vector<16x1xf32>
    %cst_73 = arith.constant 3.200000e+01 : f32
    %236 = vector.broadcast %cst_73 : f32 to vector<16x1xf32>
    %237 = arith.divf %235, %236 : vector<16x1xf32>
    %238 = vector.broadcast %237 : vector<16x1xf32> to vector<16x32xf32>
    %239 = arith.subf %233, %238 : vector<16x32xf32>
    %240 = arith.mulf %239, %239 : vector<16x32xf32>
    %cst_74 = arith.constant dense<0.000000e+00> : vector<16xf32>
    %241 = vector.multi_reduction <add>, %240, %cst_74 [1] : vector<16x32xf32> to vector<16xf32>
    %242 = vector.shape_cast %241 : vector<16xf32> to vector<16x1xf32>
    %cst_75 = arith.constant 3.200000e+01 : f32
    %243 = vector.broadcast %cst_75 : f32 to vector<16x1xf32>
    %244 = arith.divf %242, %243 : vector<16x1xf32>
    %245 = vector.broadcast %237 : vector<16x1xf32> to vector<16x32xf32>
    %246 = arith.subf %233, %245 : vector<16x32xf32>
    %cst_76 = arith.constant 9.99999996E-13 : f32
    %247 = vector.broadcast %cst_76 : f32 to vector<16x1xf32>
    %248 = arith.addf %244, %247 : vector<16x1xf32>
    %249 = math.rsqrt %248 : vector<16x1xf32>
    %250 = vector.broadcast %249 : vector<16x1xf32> to vector<16x32xf32>
    %251 = arith.mulf %246, %250 : vector<16x32xf32>
    %252 = vector.broadcast %20 : vector<1x32xf32> to vector<16x32xf32>
    %253 = arith.mulf %251, %252 : vector<16x32xf32>
    %254 = vector.broadcast %21 : vector<1x32xf32> to vector<16x32xf32>
    %255 = arith.addf %253, %254 : vector<16x32xf32>
    %cst_77 = arith.constant dense<0.000000e+00> : vector<16x64xf32>
    %256 = tpu.matmul %255, %10, %cst_77 {dimension_numbers = #tpu.dot_dimension_numbers<[1], [0], [0], [1], [0, 0, 1, 1], [], []>} : vector<16x32xf32>, vector<32x64xf32>, vector<16x64xf32> -> vector<16x64xf32>
    %257 = vector.broadcast %16 : vector<1x64xf32> to vector<16x64xf32>
    %258 = arith.addf %256, %257 : vector<16x64xf32>
    %cst_78 = arith.constant 0.000000e+00 : f32
    %259 = vector.broadcast %cst_78 : f32 to vector<16x64xf32>
    %260 = arith.maximumf %258, %259 : vector<16x64xf32>
    %cst_79 = arith.constant dense<0.000000e+00> : vector<16x32xf32>
    %261 = tpu.matmul %260, %3, %cst_79 {dimension_numbers = #tpu.dot_dimension_numbers<[1], [0], [0], [1], [0, 0, 1, 1], [], []>} : vector<16x64xf32>, vector<64x32xf32>, vector<16x32xf32> -> vector<16x32xf32>
    %262 = vector.broadcast %17 : vector<1x32xf32> to vector<16x32xf32>
    %263 = arith.addf %261, %262 : vector<16x32xf32>
    %264 = arith.addf %263, %255 : vector<16x32xf32>
    %cst_80 = arith.constant dense<0.000000e+00> : vector<16xf32>
    %265 = vector.multi_reduction <add>, %264, %cst_80 [1] : vector<16x32xf32> to vector<16xf32>
    %266 = vector.shape_cast %265 : vector<16xf32> to vector<16x1xf32>
    %cst_81 = arith.constant 3.200000e+01 : f32
    %267 = vector.broadcast %cst_81 : f32 to vector<16x1xf32>
    %268 = arith.divf %266, %267 : vector<16x1xf32>
    %269 = vector.broadcast %268 : vector<16x1xf32> to vector<16x32xf32>
    %270 = arith.subf %264, %269 : vector<16x32xf32>
    %271 = arith.mulf %270, %270 : vector<16x32xf32>
    %cst_82 = arith.constant dense<0.000000e+00> : vector<16xf32>
    %272 = vector.multi_reduction <add>, %271, %cst_82 [1] : vector<16x32xf32> to vector<16xf32>
    %273 = vector.shape_cast %272 : vector<16xf32> to vector<16x1xf32>
    %cst_83 = arith.constant 3.200000e+01 : f32
    %274 = vector.broadcast %cst_83 : f32 to vector<16x1xf32>
    %275 = arith.divf %273, %274 : vector<16x1xf32>
    %276 = vector.broadcast %268 : vector<16x1xf32> to vector<16x32xf32>
    %277 = arith.subf %264, %276 : vector<16x32xf32>
    %cst_84 = arith.constant 9.99999996E-13 : f32
    %278 = vector.broadcast %cst_84 : f32 to vector<16x1xf32>
    %279 = arith.addf %275, %278 : vector<16x1xf32>
    %280 = math.rsqrt %279 : vector<16x1xf32>
    %281 = vector.broadcast %280 : vector<16x1xf32> to vector<16x32xf32>
    %282 = arith.mulf %277, %281 : vector<16x32xf32>
    %283 = vector.broadcast %22 : vector<1x32xf32> to vector<16x32xf32>
    %284 = arith.mulf %282, %283 : vector<16x32xf32>
    %285 = vector.broadcast %23 : vector<1x32xf32> to vector<16x32xf32>
    %286 = arith.addf %284, %285 : vector<16x32xf32>
    %c0_85 = arith.constant 0 : index
    %c0_86 = arith.constant 0 : index
    %287 = vector.load %arg7[%c0_85, %c0_86] : memref<16x32xf32, #tpu.memory_space<vmem>>, vector<16x32xf32>
    tpu.vector_store %arg7[%c0_85, %c0_86], %286 {strides = array<i32>} : memref<16x32xf32, #tpu.memory_space<vmem>>, vector<16x32xf32>,
    return
  }
}

</mosaic_0001>

<llo_original>
// kernel: decoder_layer.1
$region0: #{decoder_layer.1}
  #allocation0 [shape = 'u32[]', space=smem, size = 0x4, offset = 0x4, fixed_abs, tag = 'smem constant byte address 0x4 - core index']
  #allocation1 [shape = 'u32[144,128]{1,0:T(1,128)}', space=vmem, size = 0x12000, scoped, tag = 'internal scratch']
  %s0 = inlined_call_operand.vmem [shape: f32[16,32], index: 0, kind: input, shape index: {}]
  %s1 = inlined_call_operand.vmem [shape: f32[16,32], index: 1, kind: input, shape index: {}]
  %s2 = inlined_call_operand.vmem [shape: f32[16,16], index: 2, kind: input, shape index: {}]
  %s3 = inlined_call_operand.vmem [shape: f32[16,16], index: 3, kind: input, shape index: {}]
  %s4 = inlined_call_operand.vmem [shape: f32[32,320], index: 4, kind: input, shape index: {}]
  %s5 = inlined_call_operand.vmem [shape: f32[64,32], index: 5, kind: input, shape index: {}]
  %s6 = inlined_call_operand.vmem [shape: f32[13,128], index: 6, kind: input, shape index: {}]
  %s7 = inlined_call_operand.hbm [shape: f32[16,32], index: 7, kind: output, shape index: {}]
  %s8 = sld [smem:[#allocation0]]
  $region38: #{decoder_layer.1} parent=0
    _
  %s10 = ssub.s32 1, %s8
  %s11 = scalar_select 0, %s10, %s8
  $region1: #{decoder_layer.1} parent=0
    #allocation2 [shape = 'u8[8192]{0}', space=vmem, size = 0x2000, scoped, tag = 'output window, operand 0, single buffered']
    #allocation3 [shape = 's32[1]{0}', space=sflag, size = 0x4, scoped, tag = 'scoped memory for decoder_layer.1']
    %12 = vsyncpa [#allocation3], 0
    // Predicated region
    $region2: #{decoder_layer.1} parent=1 // pred_check
      _
    $region3: #{decoder_layer.1} parent=1 // pred_check_branch
      %14 = sbr.rel (0) target = $region5
    $region4: #{decoder_layer.1} parent=1 // pred_region
      _
    $region5: #{decoder_layer.1} parent=1 // pred_fallthru
      _
    // Predicated region
    $region6: #{decoder_layer.1} parent=1 // pred_check
      _
    $region7: #{decoder_layer.1} parent=1 // pred_check_branch
      %16 = sbr.rel (0) target = $region9
    $region8: #{decoder_layer.1} parent=1 // pred_region
      _
    $region9: #{decoder_layer.1} parent=1 // pred_fallthru
      _
    // Predicated region
    $region10: #{decoder_layer.1} parent=1 // pred_check
      _
    $region11: #{decoder_layer.1} parent=1 // pred_check_branch
      %18 = sbr.rel (0) target = $region13
    $region12: #{decoder_layer.1} parent=1 // pred_region
      _
    $region13: #{decoder_layer.1} parent=1 // pred_fallthru
      _
    // Predicated region
    $region14: #{decoder_layer.1} parent=1 // pred_check
      _
    $region15: #{decoder_layer.1} parent=1 // pred_check_branch
      %20 = sbr.rel (0) target = $region17
    $region16: #{decoder_layer.1} parent=1 // pred_region
      _
    $region17: #{decoder_layer.1} parent=1 // pred_fallthru
      _
    // Predicated region
    $region18: #{decoder_layer.1} parent=1 // pred_check
      _
    $region19: #{decoder_layer.1} parent=1 // pred_check_branch
      %22 = sbr.rel (0) target = $region21
    $region20: #{decoder_layer.1} parent=1 // pred_region
      _
    $region21: #{decoder_layer.1} parent=1 // pred_fallthru
      _
    // Predicated region
    $region22: #{decoder_layer.1} parent=1 // pred_check
      _
    $region23: #{decoder_layer.1} parent=1 // pred_check_branch
      %24 = sbr.rel (0) target = $region25
    $region24: #{decoder_layer.1} parent=1 // pred_region
      _
    $region25: #{decoder_layer.1} parent=1 // pred_fallthru
      _
    // Predicated region
    $region26: #{decoder_layer.1} parent=1 // pred_check
      _
    $region27: #{decoder_layer.1} parent=1 // pred_check_branch
      %26 = sbr.rel (0) target = $region29
    $region28: #{decoder_layer.1} parent=1 // pred_region
      _
    $region29: #{decoder_layer.1} parent=1 // pred_fallthru
      _
    %v27 = vld [vmem:[%s0] sm:$0xff]
    %v28 = vld [vmem:[%s0 + $0x8] sm:$0xff]
    %v29 = vld [vmem:[%s1] sm:$0xff]
    %v30 = vld [vmem:[%s1 + $0x8] sm:$0xff]
    %v31 = vld [vmem:[%s4] sm:$0xff]
    %v32 = vld [vmem:[%s4 + $0x8] sm:$0xff]
    %v33 = vld [vmem:[%s4 + $0x10] sm:$0xff]
    %v34 = vld [vmem:[%s4 + $0x18] sm:$0xff]
    %v35 = vld [vmem:[%s4 + $0x20] sm:$0xff]
    %v36 = vld [vmem:[%s4 + $0x28] sm:$0xff]
    %v37 = vld [vmem:[%s4 + $0x30] sm:$0xff]
    %v38 = vld [vmem:[%s4 + $0x38] sm:$0xff]
    %v39 = vld [vmem:[%s4 + $0x40] sm:$0xff]
    %v40 = vld [vmem:[%s4 + $0x48] sm:$0xff]
    %v41 = vld [vmem:[%s4 + $0x50] sm:$0xff]
    %v42 = vld [vmem:[%s4 + $0x58] sm:$0xff]
    %v43 = vld [vmem:[%s5] sm:$0xff]
    %v44 = vld [vmem:[%s5 + $0x8] sm:$0xff]
    %v45 = vld [vmem:[%s5 + $0x10] sm:$0xff]
    %v46 = vld [vmem:[%s5 + $0x18] sm:$0xff]
    %v47 = vld [vmem:[%s5 + $0x20] sm:$0xff]
    %v48 = vld [vmem:[%s5 + $0x28] sm:$0xff]
    %v49 = vld [vmem:[%s5 + $0x30] sm:$0xff]
    %v50 = vld [vmem:[%s5 + $0x38] sm:$0xff]
    %v51 = vld [vmem:[%s6] sm:$0xff]
    %v52 = vld [vmem:[%s6 + $0x8] sm:$0x1f]
    %v53 = vlaneseq
    %v54 = vshrl.u32 %v53, 7
    %v55 = vsub.s32 0, %v54
    %v56 = vrot.slane %v51, %v55
    %vm57 = vcmask 261120
    %v59 = vsel %vm57, %v27, 0
    %v62 = vsel %vm57, %v28, 0
    %64 = vmatprep.subr.mxu0 0.0
    %65 = vmatpush1.msra.mxu0 %v31
    %66 = vmatprep.subr.mxu0 0.0
    %67 = vmatpush1.msra.mxu0 %v34
    %68 = vmatprep.subr.mxu0 0.0
    %69 = vmatpush1.msra.mxu0 %v37
    %70 = vmatprep.subr.mxu0 0.0
    %71 = vmatpush1.msra.mxu0 %v40
    %72 = vmatprep.subr.mxu0 0.0
    %73 = vmatpush1.msra.mxu0 0.0
    %74 = vmatprep.subr.mxu0 0.0
    %75 = vmatpush1.msra.mxu0 0.0
    %76 = vmatprep.subr.mxu0 0.0
    %77 = vmatpush1.msra.mxu0 0.0
    %78 = vmatprep.subr.mxu0 0.0
    %79 = vmatpush1.msra.mxu0 0.0
    %80 = vmatprep.subr.mxu0 0.0
    %81 = vmatpush1.msra.mxu0 0.0
    %82 = vmatprep.subr.mxu0 0.0
    %83 = vmatpush1.msra.mxu0 0.0
    %84 = vmatprep.subr.mxu0 0.0
    %85 = vmatpush1.msra.mxu0 0.0
    %86 = vmatprep.subr.mxu0 0.0
    %87 = vmatpush1.msra.mxu0 0.0
    %88 = vmatprep.subr.mxu0 0.0
    %89 = vmatpush1.msra.mxu0 0.0
    %90 = vmatprep.subr.mxu0 0.0
    %91 = vmatpush1.msra.mxu0 0.0
    %92 = vmatprep.subr.mxu0 0.0
    %93 = vmatpush1.msra.mxu0 0.0
    %94 = vmatprep.subr.mxu0 0.0
    %95 = vmatpush1.msra.mxu0 0.0
    %96 = vmatprep.subr.mxu0 0.0
    %97 = vmatpush1.msra.mxu0 0.0
    %98 = vmatprep.subr.mxu0 0.0
    %99 = vmatpush1.msra.mxu0 0.0
    %100 = vmatprep.subr.mxu0 0.0
    %101 = vmatpush1.msra.mxu0 0.0
    %102 = vmatprep.subr.mxu0 0.0
    %103 = vmatpush1.msra.mxu0 0.0
    %104 = vmatprep.subr.mxu0 0.0
    %105 = vmatpush1.msra.mxu0 0.0
    %106 = vmatprep.subr.mxu0 0.0
    %107 = vmatpush1.msra.mxu0 0.0
    %108 = vmatprep.subr.mxu0 0.0
    %109 = vmatpush1.msra.mxu0 0.0
    %110 = vmatprep.subr.mxu0 0.0
    %111 = vmatpush1.msra.mxu0 0.0
    %112 = vmatprep.subr.mxu0 0.0
    %113 = vmatpush1.msra.mxu0 0.0
    %114 = vmatprep.subr.mxu0 0.0
    %115 = vmatpush1.msra.mxu0 0.0
    %116 = vmatprep.subr.mxu0 0.0
    %117 = vmatpush1.msra.mxu0 0.0
    %118 = vmatprep.subr.mxu0 0.0
    %119 = vmatpush1.msra.mxu0 0.0
    %120 = vmatprep.subr.mxu0 0.0
    %121 = vmatpush1.msra.mxu0 0.0
    %122 = vmatprep.subr.mxu0 0.0
    %123 = vmatpush1.msra.mxu0 0.0
    %124 = vmatprep.subr.mxu0 0.0
    %125 = vmatpush1.msra.mxu0 0.0
    %126 = vmatprep.subr.mxu0 0.0
    %127 = vmatpush1.msra.mxu0 0.0
    %128 = vmatprep.mubr.f32.mxu0 0.0
    %129 = vmatmul.mubr.f32.gmra.mrb[0].mxu0 %v59
    %v130 = vpop.f32.mrb[0].mxu0
    %v131 = vadd.f32 %v56, %v130
    %v132 = vpop.f32.mrb[0].mxu0
    %133 = vmatprep.mubr.f32.mxu0 0.0
    %134 = vmatmul.mubr.f32.gmra.mrb[0].mxu0 %v62
    %v135 = vpop.f32.mrb[0].mxu0
    %v136 = vadd.f32 %v56, %v135
    %v137 = vpop.f32.mrb[0].mxu0
    %138 = vdwg.mxu0
    %v139 = vld [vmem:[%s2] sm:$0xff]
    %v140 = vld [vmem:[%s2 + $0x8] sm:$0xff]
    %v141 = vmul.f32 %v131, 0.35355338
    %v142 = vmul.f32 %v136, 0.35355338
    %vm143 = vcmp.ne.f32.partialorder %v139, 0.0
    %vm144 = vcmp.ne.f32.partialorder %v140, 0.0
    %147 = vrot.lane.b32.xlu0 %v131, 96
    %v148 = vpop.permute.xlu0 %147
    %149 = vrot.lane.b32.xlu0 %v136, 96
    %v150 = vpop.permute.xlu0 %149
    %vm151 = vcmask 64512
    %v153 = vsel %vm151, %v141, 0
    %v156 = vsel %vm151, %v142, 0
    %v158 = vsel %vm151, %v148, 0
    %v160 = vsel %vm151, %v150, 0
    %162 = vmatprep.subr.mxu0 0.0
    %163 = vmatpush1.xpose.msra.mxu0 %v158
    %164 = vmatprep.subr.mxu0 0.0
    %165 = vmatpush1.xpose.msra.mxu0 %v160
    %166 = vmatprep.subr.mxu0 0.0
    %167 = vmatpush1.xpose.msra.mxu0 0.0
    %168 = vmatprep.subr.mxu0 0.0
    %169 = vmatpush1.xpose.msra.mxu0 0.0
    %170 = vmatprep.subr.mxu0 0.0
    %171 = vmatpush1.xpose.msra.mxu0 0.0
    %172 = vmatprep.subr.mxu0 0.0
    %173 = vmatpush1.xpose.msra.mxu0 0.0
    %174 = vmatprep.subr.mxu0 0.0
    %175 = vmatpush1.xpose.msra.mxu0 0.0
    %176 = vmatprep.subr.mxu0 0.0
    %177 = vmatpush1.xpose.msra.mxu0 0.0
    %178 = vmatprep.subr.mxu0 0.0
    %179 = vmatpush1.xpose.msra.mxu0 0.0
    %180 = vmatprep.subr.mxu0 0.0
    %181 = vmatpush1.xpose.msra.mxu0 0.0
    %182 = vmatprep.subr.mxu0 0.0
    %183 = vmatpush1.xpose.msra.mxu0 0.0
    %184 = vmatprep.subr.mxu0 0.0
    %185 = vmatpush1.xpose.msra.mxu0 0.0
    %186 = vmatprep.subr.mxu0 0.0
    %187 = vmatpush1.xpose.msra.mxu0 0.0
    %188 = vmatprep.subr.mxu0 0.0
    %189 = vmatpush1.xpose.msra.mxu0 0.0
    %190 = vmatprep.subr.mxu0 0.0
    %191 = vmatpush1.xpose.msra.mxu0 0.0
    %192 = vmatprep.subr.mxu0 0.0
    %193 = vmatpush1.xpose.msra.mxu0 0.0
    %194 = vmatprep.subr.mxu0 0.0
    %195 = vmatpush1.xpose.msra.mxu0 0.0
    %196 = vmatprep.subr.mxu0 0.0
    %197 = vmatpush1.xpose.msra.mxu0 0.0
    %198 = vmatprep.subr.mxu0 0.0
    %199 = vmatpush1.xpose.msra.mxu0 0.0
    %200 = vmatprep.subr.mxu0 0.0
    %201 = vmatpush1.xpose.msra.mxu0 0.0
    %202 = vmatprep.subr.mxu0 0.0
    %203 = vmatpush1.xpose.msra.mxu0 0.0
    %204 = vmatprep.subr.mxu0 0.0
    %205 = vmatpush1.xpose.msra.mxu0 0.0
    %206 = vmatprep.subr.mxu0 0.0
    %207 = vmatpush1.xpose.msra.mxu0 0.0
    %208 = vmatprep.subr.mxu0 0.0
    %209 = vmatpush1.xpose.msra.mxu0 0.0
    %210 = vmatprep.subr.mxu0 0.0
    %211 = vmatpush1.xpose.msra.mxu0 0.0
    %212 = vmatprep.subr.mxu0 0.0
    %213 = vmatpush1.xpose.msra.mxu0 0.0
    %214 = vmatprep.subr.mxu0 0.0
    %215 = vmatpush1.xpose.msra.mxu0 0.0
    %216 = vmatprep.subr.mxu0 0.0
    %217 = vmatpush1.xpose.msra.mxu0 0.0
    %218 = vmatprep.subr.mxu0 0.0
    %219 = vmatpush1.xpose.msra.mxu0 0.0
    %220 = vmatprep.subr.mxu0 0.0
    %221 = vmatpush1.xpose.msra.mxu0 0.0
    %222 = vmatprep.subr.mxu0 0.0
    %223 = vmatpush1.xpose.msra.mxu0 0.0
    %224 = vmatprep.subr.mxu0 0.0
    %225 = vmatpush1.xpose.msra.mxu0 0.0
    %226 = vmatprep.mubr.f32.mxu0 0.0
    %227 = vmatmul.mubr.f32.gmra.mrb[0].mxu0 %v153
    %v228 = vpop.f32.mrb[0].mxu0
    %v229 = vadd.f32 0.0, %v228
    %v230 = vpop.f32.mrb[0].mxu0
    %231 = vmatprep.mubr.f32.mxu0 0.0
    %232 = vmatmul.mubr.f32.gmra.mrb[0].mxu0 %v156
    %v233 = vpop.f32.mrb[0].mxu0
    %v234 = vadd.f32 0.0, %v233
    %v235 = vpop.f32.mrb[0].mxu0
    %236 = vdwg.mxu0
    %v237 = vsel %vm143, %v229, -10000.0
    %v238 = vsel %vm144, %v234, -10000.0
    %vm239 = vcmask 130048
    %v240 = vsel %vm239, %v237, -inf
    %241 = vmax.xlane.f32.xlu0 %v240
    %v242 = vpop.xlane.xlu0 %241
    %v243 = vsel %vm239, %v238, -inf
    %244 = vmax.xlane.f32.xlu0 %v243
    %v245 = vpop.xlane.xlu0 %244
    %v246 = vsub.f32 %v237, %v242
    %v247 = vsub.f32 %v238, %v245
    %v248 = vmul.f32 %v246, 1.442695
    %v249 = vpow.pop %v248
    %v250 = vmul.f32 %v247, 1.442695
    %v251 = vpow.pop %v250
    %v252 = vsel %vm239, %v249, 0.0
    %253 = vadd.xlane.f32.xlu0 %v252
    %v254 = vpop.xlane.xlu0 %253
    %v255 = vsel %vm239, %v251, 0.0
    %256 = vadd.xlane.f32.xlu0 %v255
    %v257 = vpop.xlane.xlu0 %256
    %v258 = vrcp.pop %v254
    %v259 = vrcp.pop %v257
    %v260 = vmul.f32 %v249, %v258
    %v261 = vmul.f32 %v251, %v259
    %262 = vrot.lane.b32.xlu0 %v131, 64
    %v263 = vpop.permute.xlu0 %262
    %264 = vrot.lane.b32.xlu0 %v136, 64
    %v265 = vpop.permute.xlu0 %264
    %v269 = vsel %vm239, %v260, 0
    %v272 = vsel %vm239, %v261, 0
    %274 = vmatprep.subr.mxu0 0.0
    %275 = vmatpush1.msra.mxu0 %v263
    %276 = vmatprep.subr.mxu0 0.0
    %277 = vmatpush1.msra.mxu0 %v265
    %278 = vmatprep.subr.mxu0 0.0
    %279 = vmatpush1.msra.mxu0 0.0
    %280 = vmatprep.subr.mxu0 0.0
    %281 = vmatpush1.msra.mxu0 0.0
    %282 = vmatprep.subr.mxu0 0.0
    %283 = vmatpush1.msra.mxu0 0.0
    %284 = vmatprep.subr.mxu0 0.0
    %285 = vmatpush1.msra.mxu0 0.0
    %286 = vmatprep.subr.mxu0 0.0
    %287 = vmatpush1.msra.mxu0 0.0
    %288 = vmatprep.subr.mxu0 0.0
    %289 = vmatpush1.msra.mxu0 0.0
    %290 = vmatprep.subr.mxu0 0.0
    %291 = vmatpush1.msra.mxu0 0.0
    %292 = vmatprep.subr.mxu0 0.0
    %293 = vmatpush1.msra.mxu0 0.0
    %294 = vmatprep.subr.mxu0 0.0
    %295 = vmatpush1.msra.mxu0 0.0
    %296 = vmatprep.subr.mxu0 0.0
    %297 = vmatpush1.msra.mxu0 0.0
    %298 = vmatprep.subr.mxu0 0.0
    %299 = vmatpush1.msra.mxu0 0.0
    %300 = vmatprep.subr.mxu0 0.0
    %301 = vmatpush1.msra.mxu0 0.0
    %302 = vmatprep.subr.mxu0 0.0
    %303 = vmatpush1.msra.mxu0 0.0
    %304 = vmatprep.subr.mxu0 0.0
    %305 = vmatpush1.msra.mxu0 0.0
    %306 = vmatprep.subr.mxu0 0.0
    %307 = vmatpush1.msra.mxu0 0.0
    %308 = vmatprep.subr.mxu0 0.0
    %309 = vmatpush1.msra.mxu0 0.0
    %310 = vmatprep.subr.mxu0 0.0
    %311 = vmatpush1.msra.mxu0 0.0
    %312 = vmatprep.subr.mxu0 0.0
    %313 = vmatpush1.msra.mxu0 0.0
    %314 = vmatprep.subr.mxu0 0.0
    %315 = vmatpush1.msra.mxu0 0.0
    %316 = vmatprep.subr.mxu0 0.0
    %317 = vmatpush1.msra.mxu0 0.0
    %318 = vmatprep.subr.mxu0 0.0
    %319 = vmatpush1.msra.mxu0 0.0
    %320 = vmatprep.subr.mxu0 0.0
    %321 = vmatpush1.msra.mxu0 0.0
    %322 = vmatprep.subr.mxu0 0.0
    %323 = vmatpush1.msra.mxu0 0.0
    %324 = vmatprep.subr.mxu0 0.0
    %325 = vmatpush1.msra.mxu0 0.0
    %326 = vmatprep.subr.mxu0 0.0
    %327 = vmatpush1.msra.mxu0 0.0
    %328 = vmatprep.subr.mxu0 0.0
    %329 = vmatpush1.msra.mxu0 0.0
    %330 = vmatprep.subr.mxu0 0.0
    %331 = vmatpush1.msra.mxu0 0.0
    %332 = vmatprep.subr.mxu0 0.0
    %333 = vmatpush1.msra.mxu0 0.0
    %334 = vmatprep.subr.mxu0 0.0
    %335 = vmatpush1.msra.mxu0 0.0
    %336 = vmatprep.subr.mxu0 0.0
    %337 = vmatpush1.msra.mxu0 0.0
    %338 = vmatprep.mubr.f32.mxu0 0.0
    %339 = vmatmul.mubr.f32.gmra.mrb[0].mxu0 %v269
    %v340 = vpop.f32.mrb[0].mxu0
    %v341 = vadd.f32 0.0, %v340
    %v342 = vpop.f32.mrb[0].mxu0
    %343 = vmatprep.mubr.f32.mxu0 0.0
    %344 = vmatmul.mubr.f32.gmra.mrb[0].mxu0 %v272
    %v345 = vpop.f32.mrb[0].mxu0
    %v346 = vadd.f32 0.0, %v345
    %v347 = vpop.f32.mrb[0].mxu0
    %348 = vdwg.mxu0
    %349 = vrot.lane.b32.xlu0 %v141, 120
    %v350 = vpop.permute.xlu0 %349
    %351 = vrot.lane.b32.xlu0 %v142, 120
    %v352 = vpop.permute.xlu0 %351
    %353 = vrot.lane.b32.xlu0 %v131, 88
    %v354 = vpop.permute.xlu0 %353
    %355 = vrot.lane.b32.xlu0 %v136, 88
    %v356 = vpop.permute.xlu0 %355
    %v357 = vsel %vm151, %v350, 0
    %v359 = vsel %vm151, %v352, 0
    %v361 = vsel %vm151, %v354, 0
    %v363 = vsel %vm151, %v356, 0
    %365 = vmatprep.subr.mxu0 0.0
    %366 = vmatpush1.xpose.msra.mxu0 %v361
    %367 = vmatprep.subr.mxu0 0.0
    %368 = vmatpush1.xpose.msra.mxu0 %v363
    %369 = vmatprep.subr.mxu0 0.0
    %370 = vmatpush1.xpose.msra.mxu0 0.0
    %371 = vmatprep.subr.mxu0 0.0
    %372 = vmatpush1.xpose.msra.mxu0 0.0
    %373 = vmatprep.subr.mxu0 0.0
    %374 = vmatpush1.xpose.msra.mxu0 0.0
    %375 = vmatprep.subr.mxu0 0.0
    %376 = vmatpush1.xpose.msra.mxu0 0.0
    %377 = vmatprep.subr.mxu0 0.0
    %378 = vmatpush1.xpose.msra.mxu0 0.0
    %379 = vmatprep.subr.mxu0 0.0
    %380 = vmatpush1.xpose.msra.mxu0 0.0
    %381 = vmatprep.subr.mxu0 0.0
    %382 = vmatpush1.xpose.msra.mxu0 0.0
    %383 = vmatprep.subr.mxu0 0.0
    %384 = vmatpush1.xpose.msra.mxu0 0.0
    %385 = vmatprep.subr.mxu0 0.0
    %386 = vmatpush1.xpose.msra.mxu0 0.0
    %387 = vmatprep.subr.mxu0 0.0
    %388 = vmatpush1.xpose.msra.mxu0 0.0
    %389 = vmatprep.subr.mxu0 0.0
    %390 = vmatpush1.xpose.msra.mxu0 0.0
    %391 = vmatprep.subr.mxu0 0.0
    %392 = vmatpush1.xpose.msra.mxu0 0.0
    %393 = vmatprep.subr.mxu0 0.0
    %394 = vmatpush1.xpose.msra.mxu0 0.0
    %395 = vmatprep.subr.mxu0 0.0
    %396 = vmatpush1.xpose.msra.mxu0 0.0
    %397 = vmatprep.subr.mxu0 0.0
    %398 = vmatpush1.xpose.msra.mxu0 0.0
    %399 = vmatprep.subr.mxu0 0.0
    %400 = vmatpush1.xpose.msra.mxu0 0.0
    %401 = vmatprep.subr.mxu0 0.0
    %402 = vmatpush1.xpose.msra.mxu0 0.0
    %403 = vmatprep.subr.mxu0 0.0
    %404 = vmatpush1.xpose.msra.mxu0 0.0
    %405 = vmatprep.subr.mxu0 0.0
    %406 = vmatpush1.xpose.msra.mxu0 0.0
    %407 = vmatprep.subr.mxu0 0.0
    %408 = vmatpush1.xpose.msra.mxu0 0.0
    %409 = vmatprep.subr.mxu0 0.0
    %410 = vmatpush1.xpose.msra.mxu0 0.0
    %411 = vmatprep.subr.mxu0 0.0
    %412 = vmatpush1.xpose.msra.mxu0 0.0
    %413 = vmatprep.subr.mxu0 0.0
    %414 = vmatpush1.xpose.msra.mxu0 0.0
    %415 = vmatprep.subr.mxu0 0.0
    %416 = vmatpush1.xpose.msra.mxu0 0.0
    %417 = vmatprep.subr.mxu0 0.0
    %418 = vmatpush1.xpose.msra.mxu0 0.0
    %419 = vmatprep.subr.mxu0 0.0
    %420 = vmatpush1.xpose.msra.mxu0 0.0
    %421 = vmatprep.subr.mxu0 0.0
    %422 = vmatpush1.xpose.msra.mxu0 0.0
    %423 = vmatprep.subr.mxu0 0.0
    %424 = vmatpush1.xpose.msra.mxu0 0.0
    %425 = vmatprep.subr.mxu0 0.0
    %426 = vmatpush1.xpose.msra.mxu0 0.0
    %427 = vmatprep.subr.mxu0 0.0
    %428 = vmatpush1.xpose.msra.mxu0 0.0
    %429 = vmatprep.mubr.f32.mxu0 0.0
    %430 = vmatmul.mubr.f32.gmra.mrb[0].mxu0 %v357
    %v431 = vpop.f32.mrb[0].mxu0
    %v432 = vadd.f32 0.0, %v431
    %v433 = vpop.f32.mrb[0].mxu0
    %434 = vmatprep.mubr.f32.mxu0 0.0
    %435 = vmatmul.mubr.f32.gmra.mrb[0].mxu0 %v359
    %v436 = vpop.f32.mrb[0].mxu0
    %v437 = vadd.f32 0.0, %v436
    %v438 = vpop.f32.mrb[0].mxu0
    %439 = vdwg.mxu0
    %v440 = vsel %vm143, %v432, -10000.0
    %v441 = vsel %vm144, %v437, -10000.0
    %v442 = vsel %vm239, %v440, -inf
    %443 = vmax.xlane.f32.xlu0 %v442
    %v444 = vpop.xlane.xlu0 %443
    %v445 = vsel %vm239, %v441, -inf
    %446 = vmax.xlane.f32.xlu0 %v445
    %v447 = vpop.xlane.xlu0 %446
    %v448 = vsub.f32 %v440, %v444
    %v449 = vsub.f32 %v441, %v447
    %v450 = vmul.f32 %v448, 1.442695
    %v451 = vpow.pop %v450
    %v452 = vmul.f32 %v449, 1.442695
    %v453 = vpow.pop %v452
    %v454 = vsel %vm239, %v451, 0.0
    %455 = vadd.xlane.f32.xlu0 %v454
    %v456 = vpop.xlane.xlu0 %455
    %v457 = vsel %vm239, %v453, 0.0
    %458 = vadd.xlane.f32.xlu0 %v457
    %v459 = vpop.xlane.xlu0 %458
    %v460 = vrcp.pop %v456
    %v461 = vrcp.pop %v459
    %v462 = vmul.f32 %v451, %v460
    %v463 = vmul.f32 %v453, %v461
    %464 = vrot.lane.b32.xlu0 %v131, 56
    %v465 = vpop.permute.xlu0 %464
    %466 = vrot.lane.b32.xlu0 %v136, 56
    %v467 = vpop.permute.xlu0 %466
    %v471 = vsel %vm239, %v462, 0
    %v474 = vsel %vm239, %v463, 0
    %476 = vmatprep.subr.mxu0 0.0
    %477 = vmatpush1.msra.mxu0 %v465
    %478 = vmatprep.subr.mxu0 0.0
    %479 = vmatpush1.msra.mxu0 %v467
    %480 = vmatprep.subr.mxu0 0.0
    %481 = vmatpush1.msra.mxu0 0.0
    %482 = vmatprep.subr.mxu0 0.0
    %483 = vmatpush1.msra.mxu0 0.0
    %484 = vmatprep.subr.mxu0 0.0
    %485 = vmatpush1.msra.mxu0 0.0
    %486 = vmatprep.subr.mxu0 0.0
    %487 = vmatpush1.msra.mxu0 0.0
    %488 = vmatprep.subr.mxu0 0.0
    %489 = vmatpush1.msra.mxu0 0.0
    %490 = vmatprep.subr.mxu0 0.0
    %491 = vmatpush1.msra.mxu0 0.0
    %492 = vmatprep.subr.mxu0 0.0
    %493 = vmatpush1.msra.mxu0 0.0
    %494 = vmatprep.subr.mxu0 0.0
    %495 = vmatpush1.msra.mxu0 0.0
    %496 = vmatprep.subr.mxu0 0.0
    %497 = vmatpush1.msra.mxu0 0.0
    %498 = vmatprep.subr.mxu0 0.0
    %499 = vmatpush1.msra.mxu0 0.0
    %500 = vmatprep.subr.mxu0 0.0
    %501 = vmatpush1.msra.mxu0 0.0
    %502 = vmatprep.subr.mxu0 0.0
    %503 = vmatpush1.msra.mxu0 0.0
    %504 = vmatprep.subr.mxu0 0.0
    %505 = vmatpush1.msra.mxu0 0.0
    %506 = vmatprep.subr.mxu0 0.0
    %507 = vmatpush1.msra.mxu0 0.0
    %508 = vmatprep.subr.mxu0 0.0
    %509 = vmatpush1.msra.mxu0 0.0
    %510 = vmatprep.subr.mxu0 0.0
    %511 = vmatpush1.msra.mxu0 0.0
    %512 = vmatprep.subr.mxu0 0.0
    %513 = vmatpush1.msra.mxu0 0.0
    %514 = vmatprep.subr.mxu0 0.0
    %515 = vmatpush1.msra.mxu0 0.0
    %516 = vmatprep.subr.mxu0 0.0
    %517 = vmatpush1.msra.mxu0 0.0
    %518 = vmatprep.subr.mxu0 0.0
    %519 = vmatpush1.msra.mxu0 0.0
    %520 = vmatprep.subr.mxu0 0.0
    %521 = vmatpush1.msra.mxu0 0.0
    %522 = vmatprep.subr.mxu0 0.0
    %523 = vmatpush1.msra.mxu0 0.0
    %524 = vmatprep.subr.mxu0 0.0
    %525 = vmatpush1.msra.mxu0 0.0
    %526 = vmatprep.subr.mxu0 0.0
    %527 = vmatpush1.msra.mxu0 0.0
    %528 = vmatprep.subr.mxu0 0.0
    %529 = vmatpush1.msra.mxu0 0.0
    %530 = vmatprep.subr.mxu0 0.0
    %531 = vmatpush1.msra.mxu0 0.0
    %532 = vmatprep.subr.mxu0 0.0
    %533 = vmatpush1.msra.mxu0 0.0
    %534 = vmatprep.subr.mxu0 0.0
    %535 = vmatpush1.msra.mxu0 0.0
    %536 = vmatprep.subr.mxu0 0.0
    %537 = vmatpush1.msra.mxu0 0.0
    %538 = vmatprep.subr.mxu0 0.0
    %539 = vmatpush1.msra.mxu0 0.0
    %540 = vmatprep.mubr.f32.mxu0 0.0
    %541 = vmatmul.mubr.f32.gmra.mrb[0].mxu0 %v471
    %v542 = vpop.f32.mrb[0].mxu0
    %v543 = vadd.f32 0.0, %v542
    %v544 = vpop.f32.mrb[0].mxu0
    %545 = vmatprep.mubr.f32.mxu0 0.0
    %546 = vmatmul.mubr.f32.gmra.mrb[0].mxu0 %v474
    %v547 = vpop.f32.mrb[0].mxu0
    %v548 = vadd.f32 0.0, %v547
    %v549 = vpop.f32.mrb[0].mxu0
    %550 = vdwg.mxu0
    %552 = vrot.lane.b32.xlu0 %v34, 32
    %v553 = vpop.permute.xlu0 %552
    %v556 = vsel %vm151, %v543, 0
    %v559 = vsel %vm151, %v548, 0
    %561 = vmatprep.subr.mxu0 0.0
    %562 = vmatpush1.msra.mxu0 %v553
    %563 = vmatprep.subr.mxu0 0.0
    %564 = vmatpush1.msra.mxu0 0.0
    %565 = vmatprep.subr.mxu0 0.0
    %566 = vmatpush1.msra.mxu0 0.0
    %567 = vmatprep.subr.mxu0 0.0
    %568 = vmatpush1.msra.mxu0 0.0
    %569 = vmatprep.subr.mxu0 0.0
    %570 = vmatpush1.msra.mxu0 0.0
    %571 = vmatprep.subr.mxu0 0.0
    %572 = vmatpush1.msra.mxu0 0.0
    %573 = vmatprep.subr.mxu0 0.0
    %574 = vmatpush1.msra.mxu0 0.0
    %575 = vmatprep.subr.mxu0 0.0
    %576 = vmatpush1.msra.mxu0 0.0
    %577 = vmatprep.subr.mxu0 0.0
    %578 = vmatpush1.msra.mxu0 0.0
    %579 = vmatprep.subr.mxu0 0.0
    %580 = vmatpush1.msra.mxu0 0.0
    %581 = vmatprep.subr.mxu0 0.0
    %582 = vmatpush1.msra.mxu0 0.0
    %583 = vmatprep.subr.mxu0 0.0
    %584 = vmatpush1.msra.mxu0 0.0
    %585 = vmatprep.subr.mxu0 0.0
    %586 = vmatpush1.msra.mxu0 0.0
    %587 = vmatprep.subr.mxu0 0.0
    %588 = vmatpush1.msra.mxu0 0.0
    %589 = vmatprep.subr.mxu0 0.0
    %590 = vmatpush1.msra.mxu0 0.0
    %591 = vmatprep.subr.mxu0 0.0
    %592 = vmatpush1.msra.mxu0 0.0
    %593 = vmatprep.subr.mxu0 0.0
    %594 = vmatpush1.msra.mxu0 0.0
    %595 = vmatprep.subr.mxu0 0.0
    %596 = vmatpush1.msra.mxu0 0.0
    %597 = vmatprep.subr.mxu0 0.0
    %598 = vmatpush1.msra.mxu0 0.0
    %599 = vmatprep.subr.mxu0 0.0
    %600 = vmatpush1.msra.mxu0 0.0
    %601 = vmatprep.subr.mxu0 0.0
    %602 = vmatpush1.msra.mxu0 0.0
    %603 = vmatprep.subr.mxu0 0.0
    %604 = vmatpush1.msra.mxu0 0.0
    %605 = vmatprep.subr.mxu0 0.0
    %606 = vmatpush1.msra.mxu0 0.0
    %607 = vmatprep.subr.mxu0 0.0
    %608 = vmatpush1.msra.mxu0 0.0
    %609 = vmatprep.subr.mxu0 0.0
    %610 = vmatpush1.msra.mxu0 0.0
    %611 = vmatprep.subr.mxu0 0.0
    %612 = vmatpush1.msra.mxu0 0.0
    %613 = vmatprep.subr.mxu0 0.0
    %614 = vmatpush1.msra.mxu0 0.0
    %615 = vmatprep.subr.mxu0 0.0
    %616 = vmatpush1.msra.mxu0 0.0
    %617 = vmatprep.subr.mxu0 0.0
    %618 = vmatpush1.msra.mxu0 0.0
    %619 = vmatprep.subr.mxu0 0.0
    %620 = vmatpush1.msra.mxu0 0.0
    %621 = vmatprep.subr.mxu0 0.0
    %622 = vmatpush1.msra.mxu0 0.0
    %623 = vmatprep.subr.mxu0 0.0
    %624 = vmatpush1.msra.mxu0 0.0
    %625 = vmatprep.mubr.f32.mxu0 0.0
    %626 = vmatmul.mubr.f32.gmra.mrb[0].mxu0 %v556
    %v627 = vpop.f32.mrb[0].mxu0
    %v628 = vadd.f32 0.0, %v627
    %v629 = vpop.f32.mrb[0].mxu0
    %630 = vmatprep.mubr.f32.mxu0 0.0
    %631 = vmatmul.mubr.f32.gmra.mrb[0].mxu0 %v559
    %v632 = vpop.f32.mrb[0].mxu0
    %v633 = vadd.f32 0.0, %v632
    %v634 = vpop.f32.mrb[0].mxu0
    %635 = vdwg.mxu0
    %637 = vrot.lane.b32.xlu0 %v31, 32
    %v638 = vpop.permute.xlu0 %637
    %v641 = vsel %vm151, %v341, 0
    %v644 = vsel %vm151, %v346, 0
    %646 = vmatprep.subr.mxu0 0.0
    %647 = vmatpush1.msra.mxu0 %v638
    %648 = vmatprep.subr.mxu0 0.0
    %649 = vmatpush1.msra.mxu0 0.0
    %650 = vmatprep.subr.mxu0 0.0
    %651 = vmatpush1.msra.mxu0 0.0
    %652 = vmatprep.subr.mxu0 0.0
    %653 = vmatpush1.msra.mxu0 0.0
    %654 = vmatprep.subr.mxu0 0.0
    %655 = vmatpush1.msra.mxu0 0.0
    %656 = vmatprep.subr.mxu0 0.0
    %657 = vmatpush1.msra.mxu0 0.0
    %658 = vmatprep.subr.mxu0 0.0
    %659 = vmatpush1.msra.mxu0 0.0
    %660 = vmatprep.subr.mxu0 0.0
    %661 = vmatpush1.msra.mxu0 0.0
    %662 = vmatprep.subr.mxu0 0.0
    %663 = vmatpush1.msra.mxu0 0.0
    %664 = vmatprep.subr.mxu0 0.0
    %665 = vmatpush1.msra.mxu0 0.0
    %666 = vmatprep.subr.mxu0 0.0
    %667 = vmatpush1.msra.mxu0 0.0
    %668 = vmatprep.subr.mxu0 0.0
    %669 = vmatpush1.msra.mxu0 0.0
    %670 = vmatprep.subr.mxu0 0.0
    %671 = vmatpush1.msra.mxu0 0.0
    %672 = vmatprep.subr.mxu0 0.0
    %673 = vmatpush1.msra.mxu0 0.0
    %674 = vmatprep.subr.mxu0 0.0
    %675 = vmatpush1.msra.mxu0 0.0
    %676 = vmatprep.subr.mxu0 0.0
    %677 = vmatpush1.msra.mxu0 0.0
    %678 = vmatprep.subr.mxu0 0.0
    %679 = vmatpush1.msra.mxu0 0.0
    %680 = vmatprep.subr.mxu0 0.0
    %681 = vmatpush1.msra.mxu0 0.0
    %682 = vmatprep.subr.mxu0 0.0
    %683 = vmatpush1.msra.mxu0 0.0
    %684 = vmatprep.subr.mxu0 0.0
    %685 = vmatpush1.msra.mxu0 0.0
    %686 = vmatprep.subr.mxu0 0.0
    %687 = vmatpush1.msra.mxu0 0.0
    %688 = vmatprep.subr.mxu0 0.0
    %689 = vmatpush1.msra.mxu0 0.0
    %690 = vmatprep.subr.mxu0 0.0
    %691 = vmatpush1.msra.mxu0 0.0
    %692 = vmatprep.subr.mxu0 0.0
    %693 = vmatpush1.msra.mxu0 0.0
    %694 = vmatprep.subr.mxu0 0.0
    %695 = vmatpush1.msra.mxu0 0.0
    %696 = vmatprep.subr.mxu0 0.0
    %697 = vmatpush1.msra.mxu0 0.0
    %698 = vmatprep.subr.mxu0 0.0
    %699 = vmatpush1.msra.mxu0 0.0
    %700 = vmatprep.subr.mxu0 0.0
    %701 = vmatpush1.msra.mxu0 0.0
    %702 = vmatprep.subr.mxu0 0.0
    %703 = vmatpush1.msra.mxu0 0.0
    %704 = vmatprep.subr.mxu0 0.0
    %705 = vmatpush1.msra.mxu0 0.0
    %706 = vmatprep.subr.mxu0 0.0
    %707 = vmatpush1.msra.mxu0 0.0
    %708 = vmatprep.subr.mxu0 0.0
    %709 = vmatpush1.msra.mxu0 0.0
    %710 = vmatprep.mubr.f32.mxu0 0.0
    %711 = vmatmul.mubr.f32.gmra.mrb[0].mxu0 %v641
    %v712 = vpop.f32.mrb[0].mxu0
    %v713 = vadd.f32 %v628, %v712
    %v714 = vpop.f32.mrb[0].mxu0
    %715 = vmatprep.mubr.f32.mxu0 0.0
    %716 = vmatmul.mubr.f32.gmra.mrb[0].mxu0 %v644
    %v717 = vpop.f32.mrb[0].mxu0
    %v718 = vadd.f32 %v633, %v717
    %v719 = vpop.f32.mrb[0].mxu0
    %720 = vdwg.mxu0
    %721 = vrot.lane.b32.xlu0 %v141, 112
    %v722 = vpop.permute.xlu0 %721
    %723 = vrot.lane.b32.xlu0 %v142, 112
    %v724 = vpop.permute.xlu0 %723
    %725 = vrot.lane.b32.xlu0 %v131, 80
    %v726 = vpop.permute.xlu0 %725
    %727 = vrot.lane.b32.xlu0 %v136, 80
    %v728 = vpop.permute.xlu0 %727
    %v729 = vsel %vm151, %v722, 0
    %v731 = vsel %vm151, %v724, 0
    %v733 = vsel %vm151, %v726, 0
    %v735 = vsel %vm151, %v728, 0
    %737 = vmatprep.subr.mxu0 0.0
    %738 = vmatpush1.xpose.msra.mxu0 %v733
    %739 = vmatprep.subr.mxu0 0.0
    %740 = vmatpush1.xpose.msra.mxu0 %v735
    %741 = vmatprep.subr.mxu0 0.0
    %742 = vmatpush1.xpose.msra.mxu0 0.0
    %743 = vmatprep.subr.mxu0 0.0
    %744 = vmatpush1.xpose.msra.mxu0 0.0
    %745 = vmatprep.subr.mxu0 0.0
    %746 = vmatpush1.xpose.msra.mxu0 0.0
    %747 = vmatprep.subr.mxu0 0.0
    %748 = vmatpush1.xpose.msra.mxu0 0.0
    %749 = vmatprep.subr.mxu0 0.0
    %750 = vmatpush1.xpose.msra.mxu0 0.0
    %751 = vmatprep.subr.mxu0 0.0
    %752 = vmatpush1.xpose.msra.mxu0 0.0
    %753 = vmatprep.subr.mxu0 0.0
    %754 = vmatpush1.xpose.msra.mxu0 0.0
    %755 = vmatprep.subr.mxu0 0.0
    %756 = vmatpush1.xpose.msra.mxu0 0.0
    %757 = vmatprep.subr.mxu0 0.0
    %758 = vmatpush1.xpose.msra.mxu0 0.0
    %759 = vmatprep.subr.mxu0 0.0
    %760 = vmatpush1.xpose.msra.mxu0 0.0
    %761 = vmatprep.subr.mxu0 0.0
    %762 = vmatpush1.xpose.msra.mxu0 0.0
    %763 = vmatprep.subr.mxu0 0.0
    %764 = vmatpush1.xpose.msra.mxu0 0.0
    %765 = vmatprep.subr.mxu0 0.0
    %766 = vmatpush1.xpose.msra.mxu0 0.0
    %767 = vmatprep.subr.mxu0 0.0
    %768 = vmatpush1.xpose.msra.mxu0 0.0
    %769 = vmatprep.subr.mxu0 0.0
    %770 = vmatpush1.xpose.msra.mxu0 0.0
    %771 = vmatprep.subr.mxu0 0.0
    %772 = vmatpush1.xpose.msra.mxu0 0.0
    %773 = vmatprep.subr.mxu0 0.0
    %774 = vmatpush1.xpose.msra.mxu0 0.0
    %775 = vmatprep.subr.mxu0 0.0
    %776 = vmatpush1.xpose.msra.mxu0 0.0
    %777 = vmatprep.subr.mxu0 0.0
    %778 = vmatpush1.xpose.msra.mxu0 0.0
    %779 = vmatprep.subr.mxu0 0.0
    %780 = vmatpush1.xpose.msra.mxu0 0.0
    %781 = vmatprep.subr.mxu0 0.0
    %782 = vmatpush1.xpose.msra.mxu0 0.0
    %783 = vmatprep.subr.mxu0 0.0
    %784 = vmatpush1.xpose.msra.mxu0 0.0
    %785 = vmatprep.subr.mxu0 0.0
    %786 = vmatpush1.xpose.msra.mxu0 0.0
    %787 = vmatprep.subr.mxu0 0.0
    %788 = vmatpush1.xpose.msra.mxu0 0.0
    %789 = vmatprep.subr.mxu0 0.0
    %790 = vmatpush1.xpose.msra.mxu0 0.0
    %791 = vmatprep.subr.mxu0 0.0
    %792 = vmatpush1.xpose.msra.mxu0 0.0
    %793 = vmatprep.subr.mxu0 0.0
    %794 = vmatpush1.xpose.msra.mxu0 0.0
    %795 = vmatprep.subr.mxu0 0.0
    %796 = vmatpush1.xpose.msra.mxu0 0.0
    %797 = vmatprep.subr.mxu0 0.0
    %798 = vmatpush1.xpose.msra.mxu0 0.0
    %799 = vmatprep.subr.mxu0 0.0
    %800 = vmatpush1.xpose.msra.mxu0 0.0
    %801 = vmatprep.mubr.f32.mxu0 0.0
    %802 = vmatmul.mubr.f32.gmra.mrb[0].mxu0 %v729
    %v803 = vpop.f32.mrb[0].mxu0
    %v804 = vadd.f32 0.0, %v803
    %v805 = vpop.f32.mrb[0].mxu0
    %806 = vmatprep.mubr.f32.mxu0 0.0
    %807 = vmatmul.mubr.f32.gmra.mrb[0].mxu0 %v731
    %v808 = vpop.f32.mrb[0].mxu0
    %v809 = vadd.f32 0.0, %v808
    %v810 = vpop.f32.mrb[0].mxu0
    %811 = vdwg.mxu0
    %v812 = vsel %vm143, %v804, -10000.0
    %v813 = vsel %vm144, %v809, -10000.0
    %v814 = vsel %vm239, %v812, -inf
    %815 = vmax.xlane.f32.xlu0 %v814
    %v816 = vpop.xlane.xlu0 %815
    %v817 = vsel %vm239, %v813, -inf
    %818 = vmax.xlane.f32.xlu0 %v817
    %v819 = vpop.xlane.xlu0 %818
    %v820 = vsub.f32 %v812, %v816
    %v821 = vsub.f32 %v813, %v819
    %v822 = vmul.f32 %v820, 1.442695
    %v823 = vpow.pop %v822
    %v824 = vmul.f32 %v821, 1.442695
    %v825 = vpow.pop %v824
    %v826 = vsel %vm239, %v823, 0.0
    %827 = vadd.xlane.f32.xlu0 %v826
    %v828 = vpop.xlane.xlu0 %827
    %v829 = vsel %vm239, %v825, 0.0
    %830 = vadd.xlane.f32.xlu0 %v829
    %v831 = vpop.xlane.xlu0 %830
    %v832 = vrcp.pop %v828
    %v833 = vrcp.pop %v831
    %v834 = vmul.f32 %v823, %v832
    %v835 = vmul.f32 %v825, %v833
    %836 = vrot.lane.b32.xlu0 %v131, 48
    %v837 = vpop.permute.xlu0 %836
    %838 = vrot.lane.b32.xlu0 %v136, 48
    %v839 = vpop.permute.xlu0 %838
    %v843 = vsel %vm239, %v834, 0
    %v846 = vsel %vm239, %v835, 0
    %848 = vmatprep.subr.mxu0 0.0
    %849 = vmatpush1.msra.mxu0 %v837
    %850 = vmatprep.subr.mxu0 0.0
    %851 = vmatpush1.msra.mxu0 %v839
    %852 = vmatprep.subr.mxu0 0.0
    %853 = vmatpush1.msra.mxu0 0.0
    %854 = vmatprep.subr.mxu0 0.0
    %855 = vmatpush1.msra.mxu0 0.0
    %856 = vmatprep.subr.mxu0 0.0
    %857 = vmatpush1.msra.mxu0 0.0
    %858 = vmatprep.subr.mxu0 0.0
    %859 = vmatpush1.msra.mxu0 0.0
    %860 = vmatprep.subr.mxu0 0.0
    %861 = vmatpush1.msra.mxu0 0.0
    %862 = vmatprep.subr.mxu0 0.0
    %863 = vmatpush1.msra.mxu0 0.0
    %864 = vmatprep.subr.mxu0 0.0
    %865 = vmatpush1.msra.mxu0 0.0
    %866 = vmatprep.subr.mxu0 0.0
    %867 = vmatpush1.msra.mxu0 0.0
    %868 = vmatprep.subr.mxu0 0.0
    %869 = vmatpush1.msra.mxu0 0.0
    %870 = vmatprep.subr.mxu0 0.0
    %871 = vmatpush1.msra.mxu0 0.0
    %872 = vmatprep.subr.mxu0 0.0
    %873 = vmatpush1.msra.mxu0 0.0
    %874 = vmatprep.subr.mxu0 0.0
    %875 = vmatpush1.msra.mxu0 0.0
    %876 = vmatprep.subr.mxu0 0.0
    %877 = vmatpush1.msra.mxu0 0.0
    %878 = vmatprep.subr.mxu0 0.0
    %879 = vmatpush1.msra.mxu0 0.0
    %880 = vmatprep.subr.mxu0 0.0
    %881 = vmatpush1.msra.mxu0 0.0
    %882 = vmatprep.subr.mxu0 0.0
    %883 = vmatpush1.msra.mxu0 0.0
    %884 = vmatprep.subr.mxu0 0.0
    %885 = vmatpush1.msra.mxu0 0.0
    %886 = vmatprep.subr.mxu0 0.0
    %887 = vmatpush1.msra.mxu0 0.0
    %888 = vmatprep.subr.mxu0 0.0
    %889 = vmatpush1.msra.mxu0 0.0
    %890 = vmatprep.subr.mxu0 0.0
    %891 = vmatpush1.msra.mxu0 0.0
    %892 = vmatprep.subr.mxu0 0.0
    %893 = vmatpush1.msra.mxu0 0.0
    %894 = vmatprep.subr.mxu0 0.0
    %895 = vmatpush1.msra.mxu0 0.0
    %896 = vmatprep.subr.mxu0 0.0
    %897 = vmatpush1.msra.mxu0 0.0
    %898 = vmatprep.subr.mxu0 0.0
    %899 = vmatpush1.msra.mxu0 0.0
    %900 = vmatprep.subr.mxu0 0.0
    %901 = vmatpush1.msra.mxu0 0.0
    %902 = vmatprep.subr.mxu0 0.0
    %903 = vmatpush1.msra.mxu0 0.0
    %904 = vmatprep.subr.mxu0 0.0
    %905 = vmatpush1.msra.mxu0 0.0
    %906 = vmatprep.subr.mxu0 0.0
    %907 = vmatpush1.msra.mxu0 0.0
    %908 = vmatprep.subr.mxu0 0.0
    %909 = vmatpush1.msra.mxu0 0.0
    %910 = vmatprep.subr.mxu0 0.0
    %911 = vmatpush1.msra.mxu0 0.0
    %912 = vmatprep.mubr.f32.mxu0 0.0
    %913 = vmatmul.mubr.f32.gmra.mrb[0].mxu0 %v843
    %v914 = vpop.f32.mrb[0].mxu0
    %v915 = vadd.f32 0.0, %v914
    %v916 = vpop.f32.mrb[0].mxu0
    %917 = vmatprep.mubr.f32.mxu0 0.0
    %918 = vmatmul.mubr.f32.gmra.mrb[0].mxu0 %v846
    %v919 = vpop.f32.mrb[0].mxu0
    %v920 = vadd.f32 0.0, %v919
    %v921 = vpop.f32.mrb[0].mxu0
    %922 = vdwg.mxu0
    %924 = vrot.lane.b32.xlu0 %v37, 32
    %v925 = vpop.permute.xlu0 %924
    %v928 = vsel %vm151, %v915, 0
    %v931 = vsel %vm151, %v920, 0
    %933 = vmatprep.subr.mxu0 0.0
    %934 = vmatpush1.msra.mxu0 %v925
    %935 = vmatprep.subr.mxu0 0.0
    %936 = vmatpush1.msra.mxu0 0.0
    %937 = vmatprep.subr.mxu0 0.0
    %938 = vmatpush1.msra.mxu0 0.0
    %939 = vmatprep.subr.mxu0 0.0
    %940 = vmatpush1.msra.mxu0 0.0
    %941 = vmatprep.subr.mxu0 0.0
    %942 = vmatpush1.msra.mxu0 0.0
    %943 = vmatprep.subr.mxu0 0.0
    %944 = vmatpush1.msra.mxu0 0.0
    %945 = vmatprep.subr.mxu0 0.0
    %946 = vmatpush1.msra.mxu0 0.0
    %947 = vmatprep.subr.mxu0 0.0
    %948 = vmatpush1.msra.mxu0 0.0
    %949 = vmatprep.subr.mxu0 0.0
    %950 = vmatpush1.msra.mxu0 0.0
    %951 = vmatprep.subr.mxu0 0.0
    %952 = vmatpush1.msra.mxu0 0.0
    %953 = vmatprep.subr.mxu0 0.0
    %954 = vmatpush1.msra.mxu0 0.0
    %955 = vmatprep.subr.mxu0 0.0
    %956 = vmatpush1.msra.mxu0 0.0
    %957 = vmatprep.subr.mxu0 0.0
    %958 = vmatpush1.msra.mxu0 0.0
    %959 = vmatprep.subr.mxu0 0.0
    %960 = vmatpush1.msra.mxu0 0.0
    %961 = vmatprep.subr.mxu0 0.0
    %962 = vmatpush1.msra.mxu0 0.0
    %963 = vmatprep.subr.mxu0 0.0
    %964 = vmatpush1.msra.mxu0 0.0
    %965 = vmatprep.subr.mxu0 0.0
    %966 = vmatpush1.msra.mxu0 0.0
    %967 = vmatprep.subr.mxu0 0.0
    %968 = vmatpush1.msra.mxu0 0.0
    %969 = vmatprep.subr.mxu0 0.0
    %970 = vmatpush1.msra.mxu0 0.0
    %971 = vmatprep.subr.mxu0 0.0
    %972 = vmatpush1.msra.mxu0 0.0
    %973 = vmatprep.subr.mxu0 0.0
    %974 = vmatpush1.msra.mxu0 0.0
    %975 = vmatprep.subr.mxu0 0.0
    %976 = vmatpush1.msra.mxu0 0.0
    %977 = vmatprep.subr.mxu0 0.0
    %978 = vmatpush1.msra.mxu0 0.0
    %979 = vmatprep.subr.mxu0 0.0
    %980 = vmatpush1.msra.mxu0 0.0
    %981 = vmatprep.subr.mxu0 0.0
    %982 = vmatpush1.msra.mxu0 0.0
    %983 = vmatprep.subr.mxu0 0.0
    %984 = vmatpush1.msra.mxu0 0.0
    %985 = vmatprep.subr.mxu0 0.0
    %986 = vmatpush1.msra.mxu0 0.0
    %987 = vmatprep.subr.mxu0 0.0
    %988 = vmatpush1.msra.mxu0 0.0
    %989 = vmatprep.subr.mxu0 0.0
    %990 = vmatpush1.msra.mxu0 0.0
    %991 = vmatprep.subr.mxu0 0.0
    %992 = vmatpush1.msra.mxu0 0.0
    %993 = vmatprep.subr.mxu0 0.0
    %994 = vmatpush1.msra.mxu0 0.0
    %995 = vmatprep.subr.mxu0 0.0
    %996 = vmatpush1.msra.mxu0 0.0
    %997 = vmatprep.mubr.f32.mxu0 0.0
    %998 = vmatmul.mubr.f32.gmra.mrb[0].mxu0 %v928
    %v999 = vpop.f32.mrb[0].mxu0
    %v1000 = vadd.f32 0.0, %v999
    %v1001 = vpop.f32.mrb[0].mxu0
    %1002 = vmatprep.mubr.f32.mxu0 0.0
    %1003 = vmatmul.mubr.f32.gmra.mrb[0].mxu0 %v931
    %v1004 = vpop.f32.mrb[0].mxu0
    %v1005 = vadd.f32 0.0, %v1004
    %v1006 = vpop.f32.mrb[0].mxu0
    %1007 = vdwg.mxu0
    %v1008 = vadd.f32 %v713, %v1000
    %v1009 = vadd.f32 %v718, %v1005
    %1010 = vrot.lane.b32.xlu0 %v141, 104
    %v1011 = vpop.permute.xlu0 %1010
    %1012 = vrot.lane.b32.xlu0 %v142, 104
    %v1013 = vpop.permute.xlu0 %1012
    %1014 = vrot.lane.b32.xlu0 %v131, 72
    %v1015 = vpop.permute.xlu0 %1014
    %1016 = vrot.lane.b32.xlu0 %v136, 72
    %v1017 = vpop.permute.xlu0 %1016
    %v1018 = vsel %vm151, %v1011, 0
    %v1020 = vsel %vm151, %v1013, 0
    %v1022 = vsel %vm151, %v1015, 0
    %v1024 = vsel %vm151, %v1017, 0
    %1026 = vmatprep.subr.mxu0 0.0
    %1027 = vmatpush1.xpose.msra.mxu0 %v1022
    %1028 = vmatprep.subr.mxu0 0.0
    %1029 = vmatpush1.xpose.msra.mxu0 %v1024
    %1030 = vmatprep.subr.mxu0 0.0
    %1031 = vmatpush1.xpose.msra.mxu0 0.0
    %1032 = vmatprep.subr.mxu0 0.0
    %1033 = vmatpush1.xpose.msra.mxu0 0.0
    %1034 = vmatprep.subr.mxu0 0.0
    %1035 = vmatpush1.xpose.msra.mxu0 0.0
    %1036 = vmatprep.subr.mxu0 0.0
    %1037 = vmatpush1.xpose.msra.mxu0 0.0
    %1038 = vmatprep.subr.mxu0 0.0
    %1039 = vmatpush1.xpose.msra.mxu0 0.0
    %1040 = vmatprep.subr.mxu0 0.0
    %1041 = vmatpush1.xpose.msra.mxu0 0.0
    %1042 = vmatprep.subr.mxu0 0.0
    %1043 = vmatpush1.xpose.msra.mxu0 0.0
    %1044 = vmatprep.subr.mxu0 0.0
    %1045 = vmatpush1.xpose.msra.mxu0 0.0
    %1046 = vmatprep.subr.mxu0 0.0
    %1047 = vmatpush1.xpose.msra.mxu0 0.0
    %1048 = vmatprep.subr.mxu0 0.0
    %1049 = vmatpush1.xpose.msra.mxu0 0.0
    %1050 = vmatprep.subr.mxu0 0.0
    %1051 = vmatpush1.xpose.msra.mxu0 0.0
    %1052 = vmatprep.subr.mxu0 0.0
    %1053 = vmatpush1.xpose.msra.mxu0 0.0
    %1054 = vmatprep.subr.mxu0 0.0
    %1055 = vmatpush1.xpose.msra.mxu0 0.0
    %1056 = vmatprep.subr.mxu0 0.0
    %1057 = vmatpush1.xpose.msra.mxu0 0.0
    %1058 = vmatprep.subr.mxu0 0.0
    %1059 = vmatpush1.xpose.msra.mxu0 0.0
    %1060 = vmatprep.subr.mxu0 0.0
    %1061 = vmatpush1.xpose.msra.mxu0 0.0
    %1062 = vmatprep.subr.mxu0 0.0
    %1063 = vmatpush1.xpose.msra.mxu0 0.0
    %1064 = vmatprep.subr.mxu0 0.0
    %1065 = vmatpush1.xpose.msra.mxu0 0.0
    %1066 = vmatprep.subr.mxu0 0.0
    %1067 = vmatpush1.xpose.msra.mxu0 0.0
    %1068 = vmatprep.subr.mxu0 0.0
    %1069 = vmatpush1.xpose.msra.mxu0 0.0
    %1070 = vmatprep.subr.mxu0 0.0
    %1071 = vmatpush1.xpose.msra.mxu0 0.0
    %1072 = vmatprep.subr.mxu0 0.0
    %1073 = vmatpush1.xpose.msra.mxu0 0.0
    %1074 = vmatprep.subr.mxu0 0.0
    %1075 = vmatpush1.xpose.msra.mxu0 0.0
    %1076 = vmatprep.subr.mxu0 0.0
    %1077 = vmatpush1.xpose.msra.mxu0 0.0
    %1078 = vmatprep.subr.mxu0 0.0
    %1079 = vmatpush1.xpose.msra.mxu0 0.0
    %1080 = vmatprep.subr.mxu0 0.0
    %1081 = vmatpush1.xpose.msra.mxu0 0.0
    %1082 = vmatprep.subr.mxu0 0.0
    %1083 = vmatpush1.xpose.msra.mxu0 0.0
    %1084 = vmatprep.subr.mxu0 0.0
    %1085 = vmatpush1.xpose.msra.mxu0 0.0
    %1086 = vmatprep.subr.mxu0 0.0
    %1087 = vmatpush1.xpose.msra.mxu0 0.0
    %1088 = vmatprep.subr.mxu0 0.0
    %1089 = vmatpush1.xpose.msra.mxu0 0.0
    %1090 = vmatprep.mubr.f32.mxu0 0.0
    %1091 = vmatmul.mubr.f32.gmra.mrb[0].mxu0 %v1018
    %v1092 = vpop.f32.mrb[0].mxu0
    %v1093 = vadd.f32 0.0, %v1092
    %v1094 = vpop.f32.mrb[0].mxu0
    %1095 = vmatprep.mubr.f32.mxu0 0.0
    %1096 = vmatmul.mubr.f32.gmra.mrb[0].mxu0 %v1020
    %v1097 = vpop.f32.mrb[0].mxu0
    %v1098 = vadd.f32 0.0, %v1097
    %v1099 = vpop.f32.mrb[0].mxu0
    %1100 = vdwg.mxu0
    %v1101 = vsel %vm143, %v1093, -10000.0
    %v1102 = vsel %vm144, %v1098, -10000.0
    %v1103 = vsel %vm239, %v1101, -inf
    %1104 = vmax.xlane.f32.xlu0 %v1103
    %v1105 = vpop.xlane.xlu0 %1104
    %v1106 = vsel %vm239, %v1102, -inf
    %1107 = vmax.xlane.f32.xlu0 %v1106
    %v1108 = vpop.xlane.xlu0 %1107
    %v1109 = vsub.f32 %v1101, %v1105
    %v1110 = vsub.f32 %v1102, %v1108
    %v1111 = vmul.f32 %v1109, 1.442695
    %v1112 = vpow.pop %v1111
    %v1113 = vmul.f32 %v1110, 1.442695
    %v1114 = vpow.pop %v1113
    %v1115 = vsel %vm239, %v1112, 0.0
    %1116 = vadd.xlane.f32.xlu0 %v1115
    %v1117 = vpop.xlane.xlu0 %1116
    %v1118 = vsel %vm239, %v1114, 0.0
    %1119 = vadd.xlane.f32.xlu0 %v1118
    %v1120 = vpop.xlane.xlu0 %1119
    %v1121 = vrcp.pop %v1117
    %v1122 = vrcp.pop %v1120
    %v1123 = vmul.f32 %v1112, %v1121
    %v1124 = vmul.f32 %v1114, %v1122
    %1125 = vrot.lane.b32.xlu0 %v131, 40
    %v1126 = vpop.permute.xlu0 %1125
    %1127 = vrot.lane.b32.xlu0 %v136, 40
    %v1128 = vpop.permute.xlu0 %1127
    %v1132 = vsel %vm239, %v1123, 0
    %v1135 = vsel %vm239, %v1124, 0
    %1137 = vmatprep.subr.mxu0 0.0
    %1138 = vmatpush1.msra.mxu0 %v1126
    %1139 = vmatprep.subr.mxu0 0.0
    %1140 = vmatpush1.msra.mxu0 %v1128
    %1141 = vmatprep.subr.mxu0 0.0
    %1142 = vmatpush1.msra.mxu0 0.0
    %1143 = vmatprep.subr.mxu0 0.0
    %1144 = vmatpush1.msra.mxu0 0.0
    %1145 = vmatprep.subr.mxu0 0.0
    %1146 = vmatpush1.msra.mxu0 0.0
    %1147 = vmatprep.subr.mxu0 0.0
    %1148 = vmatpush1.msra.mxu0 0.0
    %1149 = vmatprep.subr.mxu0 0.0
    %1150 = vmatpush1.msra.mxu0 0.0
    %1151 = vmatprep.subr.mxu0 0.0
    %1152 = vmatpush1.msra.mxu0 0.0
    %1153 = vmatprep.subr.mxu0 0.0
    %1154 = vmatpush1.msra.mxu0 0.0
    %1155 = vmatprep.subr.mxu0 0.0
    %1156 = vmatpush1.msra.mxu0 0.0
    %1157 = vmatprep.subr.mxu0 0.0
    %1158 = vmatpush1.msra.mxu0 0.0
    %1159 = vmatprep.subr.mxu0 0.0
    %1160 = vmatpush1.msra.mxu0 0.0
    %1161 = vmatprep.subr.mxu0 0.0
    %1162 = vmatpush1.msra.mxu0 0.0
    %1163 = vmatprep.subr.mxu0 0.0
    %1164 = vmatpush1.msra.mxu0 0.0
    %1165 = vmatprep.subr.mxu0 0.0
    %1166 = vmatpush1.msra.mxu0 0.0
    %1167 = vmatprep.subr.mxu0 0.0
    %1168 = vmatpush1.msra.mxu0 0.0
    %1169 = vmatprep.subr.mxu0 0.0
    %1170 = vmatpush1.msra.mxu0 0.0
    %1171 = vmatprep.subr.mxu0 0.0
    %1172 = vmatpush1.msra.mxu0 0.0
    %1173 = vmatprep.subr.mxu0 0.0
    %1174 = vmatpush1.msra.mxu0 0.0
    %1175 = vmatprep.subr.mxu0 0.0
    %1176 = vmatpush1.msra.mxu0 0.0
    %1177 = vmatprep.subr.mxu0 0.0
    %1178 = vmatpush1.msra.mxu0 0.0
    %1179 = vmatprep.subr.mxu0 0.0
    %1180 = vmatpush1.msra.mxu0 0.0
    %1181 = vmatprep.subr.mxu0 0.0
    %1182 = vmatpush1.msra.mxu0 0.0
    %1183 = vmatprep.subr.mxu0 0.0
    %1184 = vmatpush1.msra.mxu0 0.0
    %1185 = vmatprep.subr.mxu0 0.0
    %1186 = vmatpush1.msra.mxu0 0.0
    %1187 = vmatprep.subr.mxu0 0.0
    %1188 = vmatpush1.msra.mxu0 0.0
    %1189 = vmatprep.subr.mxu0 0.0
    %1190 = vmatpush1.msra.mxu0 0.0
    %1191 = vmatprep.subr.mxu0 0.0
    %1192 = vmatpush1.msra.mxu0 0.0
    %1193 = vmatprep.subr.mxu0 0.0
    %1194 = vmatpush1.msra.mxu0 0.0
    %1195 = vmatprep.subr.mxu0 0.0
    %1196 = vmatpush1.msra.mxu0 0.0
    %1197 = vmatprep.subr.mxu0 0.0
    %1198 = vmatpush1.msra.mxu0 0.0
    %1199 = vmatprep.subr.mxu0 0.0
    %1200 = vmatpush1.msra.mxu0 0.0
    %1201 = vmatprep.mubr.f32.mxu0 0.0
    %1202 = vmatmul.mubr.f32.gmra.mrb[0].mxu0 %v1132
    %v1203 = vpop.f32.mrb[0].mxu0
    %v1204 = vadd.f32 0.0, %v1203
    %v1205 = vpop.f32.mrb[0].mxu0
    %1206 = vmatprep.mubr.f32.mxu0 0.0
    %1207 = vmatmul.mubr.f32.gmra.mrb[0].mxu0 %v1135
    %v1208 = vpop.f32.mrb[0].mxu0
    %v1209 = vadd.f32 0.0, %v1208
    %v1210 = vpop.f32.mrb[0].mxu0
    %1211 = vdwg.mxu0
    %1213 = vrot.lane.b32.xlu0 %v40, 32
    %v1214 = vpop.permute.xlu0 %1213
    %v1217 = vsel %vm151, %v1204, 0
    %v1220 = vsel %vm151, %v1209, 0
    %1222 = vmatprep.subr.mxu0 0.0
    %1223 = vmatpush1.msra.mxu0 %v1214
    %1224 = vmatprep.subr.mxu0 0.0
    %1225 = vmatpush1.msra.mxu0 0.0
    %1226 = vmatprep.subr.mxu0 0.0
    %1227 = vmatpush1.msra.mxu0 0.0
    %1228 = vmatprep.subr.mxu0 0.0
    %1229 = vmatpush1.msra.mxu0 0.0
    %1230 = vmatprep.subr.mxu0 0.0
    %1231 = vmatpush1.msra.mxu0 0.0
    %1232 = vmatprep.subr.mxu0 0.0
    %1233 = vmatpush1.msra.mxu0 0.0
    %1234 = vmatprep.subr.mxu0 0.0
    %1235 = vmatpush1.msra.mxu0 0.0
    %1236 = vmatprep.subr.mxu0 0.0
    %1237 = vmatpush1.msra.mxu0 0.0
    %1238 = vmatprep.subr.mxu0 0.0
    %1239 = vmatpush1.msra.mxu0 0.0
    %1240 = vmatprep.subr.mxu0 0.0
    %1241 = vmatpush1.msra.mxu0 0.0
    %1242 = vmatprep.subr.mxu0 0.0
    %1243 = vmatpush1.msra.mxu0 0.0
    %1244 = vmatprep.subr.mxu0 0.0
    %1245 = vmatpush1.msra.mxu0 0.0
    %1246 = vmatprep.subr.mxu0 0.0
    %1247 = vmatpush1.msra.mxu0 0.0
    %1248 = vmatprep.subr.mxu0 0.0
    %1249 = vmatpush1.msra.mxu0 0.0
    %1250 = vmatprep.subr.mxu0 0.0
    %1251 = vmatpush1.msra.mxu0 0.0
    %1252 = vmatprep.subr.mxu0 0.0
    %1253 = vmatpush1.msra.mxu0 0.0
    %1254 = vmatprep.subr.mxu0 0.0
    %1255 = vmatpush1.msra.mxu0 0.0
    %1256 = vmatprep.subr.mxu0 0.0
    %1257 = vmatpush1.msra.mxu0 0.0
    %1258 = vmatprep.subr.mxu0 0.0
    %1259 = vmatpush1.msra.mxu0 0.0
    %1260 = vmatprep.subr.mxu0 0.0
    %1261 = vmatpush1.msra.mxu0 0.0
    %1262 = vmatprep.subr.mxu0 0.0
    %1263 = vmatpush1.msra.mxu0 0.0
    %1264 = vmatprep.subr.mxu0 0.0
    %1265 = vmatpush1.msra.mxu0 0.0
    %1266 = vmatprep.subr.mxu0 0.0
    %1267 = vmatpush1.msra.mxu0 0.0
    %1268 = vmatprep.subr.mxu0 0.0
    %1269 = vmatpush1.msra.mxu0 0.0
    %1270 = vmatprep.subr.mxu0 0.0
    %1271 = vmatpush1.msra.mxu0 0.0
    %1272 = vmatprep.subr.mxu0 0.0
    %1273 = vmatpush1.msra.mxu0 0.0
    %1274 = vmatprep.subr.mxu0 0.0
    %1275 = vmatpush1.msra.mxu0 0.0
    %1276 = vmatprep.subr.mxu0 0.0
    %1277 = vmatpush1.msra.mxu0 0.0
    %1278 = vmatprep.subr.mxu0 0.0
    %1279 = vmatpush1.msra.mxu0 0.0
    %1280 = vmatprep.subr.mxu0 0.0
    %1281 = vmatpush1.msra.mxu0 0.0
    %1282 = vmatprep.subr.mxu0 0.0
    %1283 = vmatpush1.msra.mxu0 0.0
    %1284 = vmatprep.subr.mxu0 0.0
    %1285 = vmatpush1.msra.mxu0 0.0
    %1286 = vmatprep.mubr.f32.mxu0 0.0
    %1287 = vmatmul.mubr.f32.gmra.mrb[0].mxu0 %v1217
    %v1288 = vpop.f32.mrb[0].mxu0
    %v1289 = vadd.f32 0.0, %v1288
    %v1290 = vpop.f32.mrb[0].mxu0
    %1291 = vmatprep.mubr.f32.mxu0 0.0
    %1292 = vmatmul.mubr.f32.gmra.mrb[0].mxu0 %v1220
    %v1293 = vpop.f32.mrb[0].mxu0
    %v1294 = vadd.f32 0.0, %v1293
    %v1295 = vpop.f32.mrb[0].mxu0
    %1296 = vdwg.mxu0
    %v1297 = vadd.f32 %v1008, %v1289
    %v1298 = vadd.f32 %v1009, %v1294
    %v1299 = vlaneseq
    %v1300 = vshrl.u32 %v1299, 7
    %v1301 = vsub.s32 1, %v1300
    %v1302 = vrot.slane %v51, %v1301
    %v1303 = vadd.f32 %v1297, %v1302
    %v1304 = vadd.f32 %v1298, %v1302
    %v1305 = vadd.f32 %v1303, %v27
    %v1306 = vadd.f32 %v1304, %v28
    %v1307 = vsel %vm57, %v1305, 0.0
    %1308 = vadd.xlane.f32.xlu0 %v1307
    %v1309 = vpop.xlane.xlu0 %1308
    %v1310 = vsel %vm57, %v1306, 0.0
    %1311 = vadd.xlane.f32.xlu0 %v1310
    %v1312 = vpop.xlane.xlu0 %1311
    %v1313 = vrcp.pop 32.0
    %v1314 = vmul.f32 %v1309, %v1313
    %v1315 = vmul.f32 %v1312, %v1313
    %v1316 = vsub.f32 %v1305, %v1314
    %v1317 = vsub.f32 %v1306, %v1315
    %v1318 = vmul.f32 %v1316, %v1316
    %v1319 = vmul.f32 %v1317, %v1317
    %v1320 = vsel %vm57, %v1318, 0.0
    %1321 = vadd.xlane.f32.xlu0 %v1320
    %v1322 = vpop.xlane.xlu0 %1321
    %v1323 = vsel %vm57, %v1319, 0.0
    %1324 = vadd.xlane.f32.xlu0 %v1323
    %v1325 = vpop.xlane.xlu0 %1324
    %v1326 = vmul.f32 %v1322, %v1313
    %v1327 = vmul.f32 %v1325, %v1313
    %v1328 = vadd.f32 %v1326, 1e-12
    %v1329 = vadd.f32 %v1327, 1e-12
    %v1330 = vrsqrt.pop %v1328
    %v1331 = vrsqrt.pop %v1329
    %v1332 = vmul.f32 %v1316, %v1330
    %v1333 = vmul.f32 %v1317, %v1331
    %v1334 = vlaneseq
    %v1335 = vshrl.u32 %v1334, 7
    %v1336 = vsub.s32 7, %v1335
    %v1337 = vrot.slane %v51, %v1336
    %v1338 = vmul.f32 %v1332, %v1337
    %v1339 = vmul.f32 %v1333, %v1337
    %v1340 = vlaneseq
    %v1341 = vshrl.u32 %v1340, 7
    %v1342 = vsub.s32 0, %v1341
    %v1343 = vrot.slane %v52, %v1342
    %v1344 = vadd.f32 %v1338, %v1343
    %v1345 = vadd.f32 %v1339, %v1343
    %v1346 = vlaneseq
    %v1347 = vshrl.u32 %v1346, 7
    %v1348 = vsub.s32 2, %v1347
    %v1349 = vrot.slane %v51, %v1348
    %v1351 = vsel %vm57, %v1344, 0
    %v1354 = vsel %vm57, %v1345, 0
    %1356 = vmatprep.subr.mxu0 0.0
    %1357 = vmatpush1.msra.mxu0 %v32
    %1358 = vmatprep.subr.mxu0 0.0
    %1359 = vmatpush1.msra.mxu0 %v35
    %1360 = vmatprep.subr.mxu0 0.0
    %1361 = vmatpush1.msra.mxu0 %v38
    %1362 = vmatprep.subr.mxu0 0.0
    %1363 = vmatpush1.msra.mxu0 %v41
    %1364 = vmatprep.subr.mxu0 0.0
    %1365 = vmatpush1.msra.mxu0 0.0
    %1366 = vmatprep.subr.mxu0 0.0
    %1367 = vmatpush1.msra.mxu0 0.0
    %1368 = vmatprep.subr.mxu0 0.0
    %1369 = vmatpush1.msra.mxu0 0.0
    %1370 = vmatprep.subr.mxu0 0.0
    %1371 = vmatpush1.msra.mxu0 0.0
    %1372 = vmatprep.subr.mxu0 0.0
    %1373 = vmatpush1.msra.mxu0 0.0
    %1374 = vmatprep.subr.mxu0 0.0
    %1375 = vmatpush1.msra.mxu0 0.0
    %1376 = vmatprep.subr.mxu0 0.0
    %1377 = vmatpush1.msra.mxu0 0.0
    %1378 = vmatprep.subr.mxu0 0.0
    %1379 = vmatpush1.msra.mxu0 0.0
    %1380 = vmatprep.subr.mxu0 0.0
    %1381 = vmatpush1.msra.mxu0 0.0
    %1382 = vmatprep.subr.mxu0 0.0
    %1383 = vmatpush1.msra.mxu0 0.0
    %1384 = vmatprep.subr.mxu0 0.0
    %1385 = vmatpush1.msra.mxu0 0.0
    %1386 = vmatprep.subr.mxu0 0.0
    %1387 = vmatpush1.msra.mxu0 0.0
    %1388 = vmatprep.subr.mxu0 0.0
    %1389 = vmatpush1.msra.mxu0 0.0
    %1390 = vmatprep.subr.mxu0 0.0
    %1391 = vmatpush1.msra.mxu0 0.0
    %1392 = vmatprep.subr.mxu0 0.0
    %1393 = vmatpush1.msra.mxu0 0.0
    %1394 = vmatprep.subr.mxu0 0.0
    %1395 = vmatpush1.msra.mxu0 0.0
    %1396 = vmatprep.subr.mxu0 0.0
    %1397 = vmatpush1.msra.mxu0 0.0
    %1398 = vmatprep.subr.mxu0 0.0
    %1399 = vmatpush1.msra.mxu0 0.0
    %1400 = vmatprep.subr.mxu0 0.0
    %1401 = vmatpush1.msra.mxu0 0.0
    %1402 = vmatprep.subr.mxu0 0.0
    %1403 = vmatpush1.msra.mxu0 0.0
    %1404 = vmatprep.subr.mxu0 0.0
    %1405 = vmatpush1.msra.mxu0 0.0
    %1406 = vmatprep.subr.mxu0 0.0
    %1407 = vmatpush1.msra.mxu0 0.0
    %1408 = vmatprep.subr.mxu0 0.0
    %1409 = vmatpush1.msra.mxu0 0.0
    %1410 = vmatprep.subr.mxu0 0.0
    %1411 = vmatpush1.msra.mxu0 0.0
    %1412 = vmatprep.subr.mxu0 0.0
    %1413 = vmatpush1.msra.mxu0 0.0
    %1414 = vmatprep.subr.mxu0 0.0
    %1415 = vmatpush1.msra.mxu0 0.0
    %1416 = vmatprep.subr.mxu0 0.0
    %1417 = vmatpush1.msra.mxu0 0.0
    %1418 = vmatprep.subr.mxu0 0.0
    %1419 = vmatpush1.msra.mxu0 0.0
    %1420 = vmatprep.mubr.f32.mxu0 0.0
    %1421 = vmatmul.mubr.f32.gmra.mrb[0].mxu0 %v1351
    %v1422 = vpop.f32.mrb[0].mxu0
    %v1423 = vadd.f32 %v1349, %v1422
    %v1424 = vpop.f32.mrb[0].mxu0
    %1425 = vmatprep.mubr.f32.mxu0 0.0
    %1426 = vmatmul.mubr.f32.gmra.mrb[0].mxu0 %v1354
    %v1427 = vpop.f32.mrb[0].mxu0
    %v1428 = vadd.f32 %v1349, %v1427
    %v1429 = vpop.f32.mrb[0].mxu0
    %1430 = vdwg.mxu0
    %v1431 = vlaneseq
    %v1432 = vshrl.u32 %v1431, 7
    %v1433 = vsub.s32 3, %v1432
    %v1434 = vrot.slane %v51, %v1433
    %1439 = vrot.lane.b32.xlu0 %v32, 96
    %v1440 = vpop.permute.xlu0 %1439
    %1441 = vrot.lane.b32.xlu0 %v35, 96
    %v1442 = vpop.permute.xlu0 %1441
    %1443 = vrot.lane.b32.xlu0 %v38, 96
    %v1444 = vpop.permute.xlu0 %1443
    %1445 = vrot.lane.b32.xlu0 %v41, 96
    %v1446 = vpop.permute.xlu0 %1445
    %v1452 = vsel %vm57, %v29, 0
    %v1455 = vsel %vm57, %v30, 0
    %1457 = vmatprep.subr.mxu0 0.0
    %1458 = vmatpush1.msra.mxu0 %v1440
    %1459 = vmatprep.subr.mxu0 0.0
    %1460 = vmatpush1.msra.mxu0 %v1442
    %1461 = vmatprep.subr.mxu0 0.0
    %1462 = vmatpush1.msra.mxu0 %v1444
    %1463 = vmatprep.subr.mxu0 0.0
    %1464 = vmatpush1.msra.mxu0 %v1446
    %1465 = vmatprep.subr.mxu0 0.0
    %1466 = vmatpush1.msra.mxu0 0.0
    %1467 = vmatprep.subr.mxu0 0.0
    %1468 = vmatpush1.msra.mxu0 0.0
    %1469 = vmatprep.subr.mxu0 0.0
    %1470 = vmatpush1.msra.mxu0 0.0
    %1471 = vmatprep.subr.mxu0 0.0
    %1472 = vmatpush1.msra.mxu0 0.0
    %1473 = vmatprep.subr.mxu0 0.0
    %1474 = vmatpush1.msra.mxu0 0.0
    %1475 = vmatprep.subr.mxu0 0.0
    %1476 = vmatpush1.msra.mxu0 0.0
    %1477 = vmatprep.subr.mxu0 0.0
    %1478 = vmatpush1.msra.mxu0 0.0
    %1479 = vmatprep.subr.mxu0 0.0
    %1480 = vmatpush1.msra.mxu0 0.0
    %1481 = vmatprep.subr.mxu0 0.0
    %1482 = vmatpush1.msra.mxu0 0.0
    %1483 = vmatprep.subr.mxu0 0.0
    %1484 = vmatpush1.msra.mxu0 0.0
    %1485 = vmatprep.subr.mxu0 0.0
    %1486 = vmatpush1.msra.mxu0 0.0
    %1487 = vmatprep.subr.mxu0 0.0
    %1488 = vmatpush1.msra.mxu0 0.0
    %1489 = vmatprep.subr.mxu0 0.0
    %1490 = vmatpush1.msra.mxu0 0.0
    %1491 = vmatprep.subr.mxu0 0.0
    %1492 = vmatpush1.msra.mxu0 0.0
    %1493 = vmatprep.subr.mxu0 0.0
    %1494 = vmatpush1.msra.mxu0 0.0
    %1495 = vmatprep.subr.mxu0 0.0
    %1496 = vmatpush1.msra.mxu0 0.0
    %1497 = vmatprep.subr.mxu0 0.0
    %1498 = vmatpush1.msra.mxu0 0.0
    %1499 = vmatprep.subr.mxu0 0.0
    %1500 = vmatpush1.msra.mxu0 0.0
    %1501 = vmatprep.subr.mxu0 0.0
    %1502 = vmatpush1.msra.mxu0 0.0
    %1503 = vmatprep.subr.mxu0 0.0
    %1504 = vmatpush1.msra.mxu0 0.0
    %1505 = vmatprep.subr.mxu0 0.0
    %1506 = vmatpush1.msra.mxu0 0.0
    %1507 = vmatprep.subr.mxu0 0.0
    %1508 = vmatpush1.msra.mxu0 0.0
    %1509 = vmatprep.subr.mxu0 0.0
    %1510 = vmatpush1.msra.mxu0 0.0
    %1511 = vmatprep.subr.mxu0 0.0
    %1512 = vmatpush1.msra.mxu0 0.0
    %1513 = vmatprep.subr.mxu0 0.0
    %1514 = vmatpush1.msra.mxu0 0.0
    %1515 = vmatprep.subr.mxu0 0.0
    %1516 = vmatpush1.msra.mxu0 0.0
    %1517 = vmatprep.subr.mxu0 0.0
    %1518 = vmatpush1.msra.mxu0 0.0
    %1519 = vmatprep.subr.mxu0 0.0
    %1520 = vmatpush1.msra.mxu0 0.0
    %1521 = vmatprep.mubr.f32.mxu0 0.0
    %1522 = vmatmul.mubr.f32.gmra.mrb[0].mxu0 %v1452
    %v1523 = vpop.f32.mrb[0].mxu0
    %v1524 = vadd.f32 %v1434, %v1523
    %v1525 = vpop.f32.mrb[0].mxu0
    %1526 = vmatprep.mubr.f32.mxu0 0.0
    %1527 = vmatmul.mubr.f32.gmra.mrb[0].mxu0 %v1455
    %v1528 = vpop.f32.mrb[0].mxu0
    %v1529 = vadd.f32 %v1434, %v1528
    %v1530 = vpop.f32.mrb[0].mxu0
    %1531 = vdwg.mxu0
    %v1532 = vld [vmem:[%s3] sm:$0xff]
    %v1533 = vld [vmem:[%s3 + $0x8] sm:$0xff]
    %v1534 = vmul.f32 %v1423, 0.35355338
    %v1535 = vmul.f32 %v1428, 0.35355338
    %vm1536 = vcmp.ne.f32.partialorder %v1532, 0.0
    %vm1537 = vcmp.ne.f32.partialorder %v1533, 0.0
    %v1539 = vsel %vm151, %v1534, 0
    %v1542 = vsel %vm151, %v1535, 0
    %v1545 = vsel %vm151, %v1524, 0
    %v1548 = vsel %vm151, %v1529, 0
    %1550 = vmatprep.subr.mxu0 0.0
    %1551 = vmatpush1.xpose.msra.mxu0 %v1545
    %1552 = vmatprep.subr.mxu0 0.0
    %1553 = vmatpush1.xpose.msra.mxu0 %v1548
    %1554 = vmatprep.subr.mxu0 0.0
    %1555 = vmatpush1.xpose.msra.mxu0 0.0
    %1556 = vmatprep.subr.mxu0 0.0
    %1557 = vmatpush1.xpose.msra.mxu0 0.0
    %1558 = vmatprep.subr.mxu0 0.0
    %1559 = vmatpush1.xpose.msra.mxu0 0.0
    %1560 = vmatprep.subr.mxu0 0.0
    %1561 = vmatpush1.xpose.msra.mxu0 0.0
    %1562 = vmatprep.subr.mxu0 0.0
    %1563 = vmatpush1.xpose.msra.mxu0 0.0
    %1564 = vmatprep.subr.mxu0 0.0
    %1565 = vmatpush1.xpose.msra.mxu0 0.0
    %1566 = vmatprep.subr.mxu0 0.0
    %1567 = vmatpush1.xpose.msra.mxu0 0.0
    %1568 = vmatprep.subr.mxu0 0.0
    %1569 = vmatpush1.xpose.msra.mxu0 0.0
    %1570 = vmatprep.subr.mxu0 0.0
    %1571 = vmatpush1.xpose.msra.mxu0 0.0
    %1572 = vmatprep.subr.mxu0 0.0
    %1573 = vmatpush1.xpose.msra.mxu0 0.0
    %1574 = vmatprep.subr.mxu0 0.0
    %1575 = vmatpush1.xpose.msra.mxu0 0.0
    %1576 = vmatprep.subr.mxu0 0.0
    %1577 = vmatpush1.xpose.msra.mxu0 0.0
    %1578 = vmatprep.subr.mxu0 0.0
    %1579 = vmatpush1.xpose.msra.mxu0 0.0
    %1580 = vmatprep.subr.mxu0 0.0
    %1581 = vmatpush1.xpose.msra.mxu0 0.0
    %1582 = vmatprep.subr.mxu0 0.0
    %1583 = vmatpush1.xpose.msra.mxu0 0.0
    %1584 = vmatprep.subr.mxu0 0.0
    %1585 = vmatpush1.xpose.msra.mxu0 0.0
    %1586 = vmatprep.subr.mxu0 0.0
    %1587 = vmatpush1.xpose.msra.mxu0 0.0
    %1588 = vmatprep.subr.mxu0 0.0
    %1589 = vmatpush1.xpose.msra.mxu0 0.0
    %1590 = vmatprep.subr.mxu0 0.0
    %1591 = vmatpush1.xpose.msra.mxu0 0.0
    %1592 = vmatprep.subr.mxu0 0.0
    %1593 = vmatpush1.xpose.msra.mxu0 0.0
    %1594 = vmatprep.subr.mxu0 0.0
    %1595 = vmatpush1.xpose.msra.mxu0 0.0
    %1596 = vmatprep.subr.mxu0 0.0
    %1597 = vmatpush1.xpose.msra.mxu0 0.0
    %1598 = vmatprep.subr.mxu0 0.0
    %1599 = vmatpush1.xpose.msra.mxu0 0.0
    %1600 = vmatprep.subr.mxu0 0.0
    %1601 = vmatpush1.xpose.msra.mxu0 0.0
    %1602 = vmatprep.subr.mxu0 0.0
    %1603 = vmatpush1.xpose.msra.mxu0 0.0
    %1604 = vmatprep.subr.mxu0 0.0
    %1605 = vmatpush1.xpose.msra.mxu0 0.0
    %1606 = vmatprep.subr.mxu0 0.0
    %1607 = vmatpush1.xpose.msra.mxu0 0.0
    %1608 = vmatprep.subr.mxu0 0.0
    %1609 = vmatpush1.xpose.msra.mxu0 0.0
    %1610 = vmatprep.subr.mxu0 0.0
    %1611 = vmatpush1.xpose.msra.mxu0 0.0
    %1612 = vmatprep.subr.mxu0 0.0
    %1613 = vmatpush1.xpose.msra.mxu0 0.0
    %1614 = vmatprep.mubr.f32.mxu0 0.0
    %1615 = vmatmul.mubr.f32.gmra.mrb[0].mxu0 %v1539
    %v1616 = vpop.f32.mrb[0].mxu0
    %v1617 = vadd.f32 0.0, %v1616
    %v1618 = vpop.f32.mrb[0].mxu0
    %1619 = vmatprep.mubr.f32.mxu0 0.0
    %1620 = vmatmul.mubr.f32.gmra.mrb[0].mxu0 %v1542
    %v1621 = vpop.f32.mrb[0].mxu0
    %v1622 = vadd.f32 0.0, %v1621
    %v1623 = vpop.f32.mrb[0].mxu0
    %1624 = vdwg.mxu0
    %v1625 = vsel %vm1536, %v1617, -10000.0
    %v1626 = vsel %vm1537, %v1622, -10000.0
    %v1627 = vsel %vm239, %v1625, -inf
    %1628 = vmax.xlane.f32.xlu0 %v1627
    %v1629 = vpop.xlane.xlu0 %1628
    %v1630 = vsel %vm239, %v1626, -inf
    %1631 = vmax.xlane.f32.xlu0 %v1630
    %v1632 = vpop.xlane.xlu0 %1631
    %v1633 = vsub.f32 %v1625, %v1629
    %v1634 = vsub.f32 %v1626, %v1632
    %v1635 = vmul.f32 %v1633, 1.442695
    %v1636 = vpow.pop %v1635
    %v1637 = vmul.f32 %v1634, 1.442695
    %v1638 = vpow.pop %v1637
    %v1639 = vsel %vm239, %v1636, 0.0
    %1640 = vadd.xlane.f32.xlu0 %v1639
    %v1641 = vpop.xlane.xlu0 %1640
    %v1642 = vsel %vm239, %v1638, 0.0
    %1643 = vadd.xlane.f32.xlu0 %v1642
    %v1644 = vpop.xlane.xlu0 %1643
    %v1645 = vrcp.pop %v1641
    %v1646 = vrcp.pop %v1644
    %v1647 = vmul.f32 %v1636, %v1645
    %v1648 = vmul.f32 %v1638, %v1646
    %1649 = vrot.lane.b32.xlu0 %v1524, 96
    %v1650 = vpop.permute.xlu0 %1649
    %1651 = vrot.lane.b32.xlu0 %v1529, 96
    %v1652 = vpop.permute.xlu0 %1651
    %v1656 = vsel %vm239, %v1647, 0
    %v1659 = vsel %vm239, %v1648, 0
    %1661 = vmatprep.subr.mxu0 0.0
    %1662 = vmatpush1.msra.mxu0 %v1650
    %1663 = vmatprep.subr.mxu0 0.0
    %1664 = vmatpush1.msra.mxu0 %v1652
    %1665 = vmatprep.subr.mxu0 0.0
    %1666 = vmatpush1.msra.mxu0 0.0
    %1667 = vmatprep.subr.mxu0 0.0
    %1668 = vmatpush1.msra.mxu0 0.0
    %1669 = vmatprep.subr.mxu0 0.0
    %1670 = vmatpush1.msra.mxu0 0.0
    %1671 = vmatprep.subr.mxu0 0.0
    %1672 = vmatpush1.msra.mxu0 0.0
    %1673 = vmatprep.subr.mxu0 0.0
    %1674 = vmatpush1.msra.mxu0 0.0
    %1675 = vmatprep.subr.mxu0 0.0
    %1676 = vmatpush1.msra.mxu0 0.0
    %1677 = vmatprep.subr.mxu0 0.0
    %1678 = vmatpush1.msra.mxu0 0.0
    %1679 = vmatprep.subr.mxu0 0.0
    %1680 = vmatpush1.msra.mxu0 0.0
    %1681 = vmatprep.subr.mxu0 0.0
    %1682 = vmatpush1.msra.mxu0 0.0
    %1683 = vmatprep.subr.mxu0 0.0
    %1684 = vmatpush1.msra.mxu0 0.0
    %1685 = vmatprep.subr.mxu0 0.0
    %1686 = vmatpush1.msra.mxu0 0.0
    %1687 = vmatprep.subr.mxu0 0.0
    %1688 = vmatpush1.msra.mxu0 0.0
    %1689 = vmatprep.subr.mxu0 0.0
    %1690 = vmatpush1.msra.mxu0 0.0
    %1691 = vmatprep.subr.mxu0 0.0
    %1692 = vmatpush1.msra.mxu0 0.0
    %1693 = vmatprep.subr.mxu0 0.0
    %1694 = vmatpush1.msra.mxu0 0.0
    %1695 = vmatprep.subr.mxu0 0.0
    %1696 = vmatpush1.msra.mxu0 0.0
    %1697 = vmatprep.subr.mxu0 0.0
    %1698 = vmatpush1.msra.mxu0 0.0
    %1699 = vmatprep.subr.mxu0 0.0
    %1700 = vmatpush1.msra.mxu0 0.0
    %1701 = vmatprep.subr.mxu0 0.0
    %1702 = vmatpush1.msra.mxu0 0.0
    %1703 = vmatprep.subr.mxu0 0.0
    %1704 = vmatpush1.msra.mxu0 0.0
    %1705 = vmatprep.subr.mxu0 0.0
    %1706 = vmatpush1.msra.mxu0 0.0
    %1707 = vmatprep.subr.mxu0 0.0
    %1708 = vmatpush1.msra.mxu0 0.0
    %1709 = vmatprep.subr.mxu0 0.0
    %1710 = vmatpush1.msra.mxu0 0.0
    %1711 = vmatprep.subr.mxu0 0.0
    %1712 = vmatpush1.msra.mxu0 0.0
    %1713 = vmatprep.subr.mxu0 0.0
    %1714 = vmatpush1.msra.mxu0 0.0
    %1715 = vmatprep.subr.mxu0 0.0
    %1716 = vmatpush1.msra.mxu0 0.0
    %1717 = vmatprep.subr.mxu0 0.0
    %1718 = vmatpush1.msra.mxu0 0.0
    %1719 = vmatprep.subr.mxu0 0.0
    %1720 = vmatpush1.msra.mxu0 0.0
    %1721 = vmatprep.subr.mxu0 0.0
    %1722 = vmatpush1.msra.mxu0 0.0
    %1723 = vmatprep.subr.mxu0 0.0
    %1724 = vmatpush1.msra.mxu0 0.0
    %1725 = vmatprep.mubr.f32.mxu0 0.0
    %1726 = vmatmul.mubr.f32.gmra.mrb[0].mxu0 %v1656
    %v1727 = vpop.f32.mrb[0].mxu0
    %v1728 = vadd.f32 0.0, %v1727
    %v1729 = vpop.f32.mrb[0].mxu0
    %1730 = vmatprep.mubr.f32.mxu0 0.0
    %1731 = vmatmul.mubr.f32.gmra.mrb[0].mxu0 %v1659
    %v1732 = vpop.f32.mrb[0].mxu0
    %v1733 = vadd.f32 0.0, %v1732
    %v1734 = vpop.f32.mrb[0].mxu0
    %1735 = vdwg.mxu0
    %1736 = vrot.lane.b32.xlu0 %v1534, 120
    %v1737 = vpop.permute.xlu0 %1736
    %1738 = vrot.lane.b32.xlu0 %v1535, 120
    %v1739 = vpop.permute.xlu0 %1738
    %1740 = vrot.lane.b32.xlu0 %v1524, 120
    %v1741 = vpop.permute.xlu0 %1740
    %1742 = vrot.lane.b32.xlu0 %v1529, 120
    %v1743 = vpop.permute.xlu0 %1742
    %v1744 = vsel %vm151, %v1737, 0
    %v1746 = vsel %vm151, %v1739, 0
    %v1748 = vsel %vm151, %v1741, 0
    %v1750 = vsel %vm151, %v1743, 0
    %1752 = vmatprep.subr.mxu0 0.0
    %1753 = vmatpush1.xpose.msra.mxu0 %v1748
    %1754 = vmatprep.subr.mxu0 0.0
    %1755 = vmatpush1.xpose.msra.mxu0 %v1750
    %1756 = vmatprep.subr.mxu0 0.0
    %1757 = vmatpush1.xpose.msra.mxu0 0.0
    %1758 = vmatprep.subr.mxu0 0.0
    %1759 = vmatpush1.xpose.msra.mxu0 0.0
    %1760 = vmatprep.subr.mxu0 0.0
    %1761 = vmatpush1.xpose.msra.mxu0 0.0
    %1762 = vmatprep.subr.mxu0 0.0
    %1763 = vmatpush1.xpose.msra.mxu0 0.0
    %1764 = vmatprep.subr.mxu0 0.0
    %1765 = vmatpush1.xpose.msra.mxu0 0.0
    %1766 = vmatprep.subr.mxu0 0.0
    %1767 = vmatpush1.xpose.msra.mxu0 0.0
    %1768 = vmatprep.subr.mxu0 0.0
    %1769 = vmatpush1.xpose.msra.mxu0 0.0
    %1770 = vmatprep.subr.mxu0 0.0
    %1771 = vmatpush1.xpose.msra.mxu0 0.0
    %1772 = vmatprep.subr.mxu0 0.0
    %1773 = vmatpush1.xpose.msra.mxu0 0.0
    %1774 = vmatprep.subr.mxu0 0.0
    %1775 = vmatpush1.xpose.msra.mxu0 0.0
    %1776 = vmatprep.subr.mxu0 0.0
    %1777 = vmatpush1.xpose.msra.mxu0 0.0
    %1778 = vmatprep.subr.mxu0 0.0
    %1779 = vmatpush1.xpose.msra.mxu0 0.0
    %1780 = vmatprep.subr.mxu0 0.0
    %1781 = vmatpush1.xpose.msra.mxu0 0.0
    %1782 = vmatprep.subr.mxu0 0.0
    %1783 = vmatpush1.xpose.msra.mxu0 0.0
    %1784 = vmatprep.subr.mxu0 0.0
    %1785 = vmatpush1.xpose.msra.mxu0 0.0
    %1786 = vmatprep.subr.mxu0 0.0
    %1787 = vmatpush1.xpose.msra.mxu0 0.0
    %1788 = vmatprep.subr.mxu0 0.0
    %1789 = vmatpush1.xpose.msra.mxu0 0.0
    %1790 = vmatprep.subr.mxu0 0.0
    %1791 = vmatpush1.xpose.msra.mxu0 0.0
    %1792 = vmatprep.subr.mxu0 0.0
    %1793 = vmatpush1.xpose.msra.mxu0 0.0
    %1794 = vmatprep.subr.mxu0 0.0
    %1795 = vmatpush1.xpose.msra.mxu0 0.0
    %1796 = vmatprep.subr.mxu0 0.0
    %1797 = vmatpush1.xpose.msra.mxu0 0.0
    %1798 = vmatprep.subr.mxu0 0.0
    %1799 = vmatpush1.xpose.msra.mxu0 0.0
    %1800 = vmatprep.subr.mxu0 0.0
    %1801 = vmatpush1.xpose.msra.mxu0 0.0
    %1802 = vmatprep.subr.mxu0 0.0
    %1803 = vmatpush1.xpose.msra.mxu0 0.0
    %1804 = vmatprep.subr.mxu0 0.0
    %1805 = vmatpush1.xpose.msra.mxu0 0.0
    %1806 = vmatprep.subr.mxu0 0.0
    %1807 = vmatpush1.xpose.msra.mxu0 0.0
    %1808 = vmatprep.subr.mxu0 0.0
    %1809 = vmatpush1.xpose.msra.mxu0 0.0
    %1810 = vmatprep.subr.mxu0 0.0
    %1811 = vmatpush1.xpose.msra.mxu0 0.0
    %1812 = vmatprep.subr.mxu0 0.0
    %1813 = vmatpush1.xpose.msra.mxu0 0.0
    %1814 = vmatprep.subr.mxu0 0.0
    %1815 = vmatpush1.xpose.msra.mxu0 0.0
    %1816 = vmatprep.mubr.f32.mxu0 0.0
    %1817 = vmatmul.mubr.f32.gmra.mrb[0].mxu0 %v1744
    %v1818 = vpop.f32.mrb[0].mxu0
    %v1819 = vadd.f32 0.0, %v1818
    %v1820 = vpop.f32.mrb[0].mxu0
    %1821 = vmatprep.mubr.f32.mxu0 0.0
    %1822 = vmatmul.mubr.f32.gmra.mrb[0].mxu0 %v1746
    %v1823 = vpop.f32.mrb[0].mxu0
    %v1824 = vadd.f32 0.0, %v1823
    %v1825 = vpop.f32.mrb[0].mxu0
    %1826 = vdwg.mxu0
    %v1827 = vsel %vm1536, %v1819, -10000.0
    %v1828 = vsel %vm1537, %v1824, -10000.0
    %v1829 = vsel %vm239, %v1827, -inf
    %1830 = vmax.xlane.f32.xlu0 %v1829
    %v1831 = vpop.xlane.xlu0 %1830
    %v1832 = vsel %vm239, %v1828, -inf
    %1833 = vmax.xlane.f32.xlu0 %v1832
    %v1834 = vpop.xlane.xlu0 %1833
    %v1835 = vsub.f32 %v1827, %v1831
    %v1836 = vsub.f32 %v1828, %v1834
    %v1837 = vmul.f32 %v1835, 1.442695
    %v1838 = vpow.pop %v1837
    %v1839 = vmul.f32 %v1836, 1.442695
    %v1840 = vpow.pop %v1839
    %v1841 = vsel %vm239, %v1838, 0.0
    %1842 = vadd.xlane.f32.xlu0 %v1841
    %v1843 = vpop.xlane.xlu0 %1842
    %v1844 = vsel %vm239, %v1840, 0.0
    %1845 = vadd.xlane.f32.xlu0 %v1844
    %v1846 = vpop.xlane.xlu0 %1845
    %v1847 = vrcp.pop %v1843
    %v1848 = vrcp.pop %v1846
    %v1849 = vmul.f32 %v1838, %v1847
    %v1850 = vmul.f32 %v1840, %v1848
    %1851 = vrot.lane.b32.xlu0 %v1524, 88
    %v1852 = vpop.permute.xlu0 %1851
    %1853 = vrot.lane.b32.xlu0 %v1529, 88
    %v1854 = vpop.permute.xlu0 %1853
    %v1858 = vsel %vm239, %v1849, 0
    %v1861 = vsel %vm239, %v1850, 0
    %1863 = vmatprep.subr.mxu0 0.0
    %1864 = vmatpush1.msra.mxu0 %v1852
    %1865 = vmatprep.subr.mxu0 0.0
    %1866 = vmatpush1.msra.mxu0 %v1854
    %1867 = vmatprep.subr.mxu0 0.0
    %1868 = vmatpush1.msra.mxu0 0.0
    %1869 = vmatprep.subr.mxu0 0.0
    %1870 = vmatpush1.msra.mxu0 0.0
    %1871 = vmatprep.subr.mxu0 0.0
    %1872 = vmatpush1.msra.mxu0 0.0
    %1873 = vmatprep.subr.mxu0 0.0
    %1874 = vmatpush1.msra.mxu0 0.0
    %1875 = vmatprep.subr.mxu0 0.0
    %1876 = vmatpush1.msra.mxu0 0.0
    %1877 = vmatprep.subr.mxu0 0.0
    %1878 = vmatpush1.msra.mxu0 0.0
    %1879 = vmatprep.subr.mxu0 0.0
    %1880 = vmatpush1.msra.mxu0 0.0
    %1881 = vmatprep.subr.mxu0 0.0
    %1882 = vmatpush1.msra.mxu0 0.0
    %1883 = vmatprep.subr.mxu0 0.0
    %1884 = vmatpush1.msra.mxu0 0.0
    %1885 = vmatprep.subr.mxu0 0.0
    %1886 = vmatpush1.msra.mxu0 0.0
    %1887 = vmatprep.subr.mxu0 0.0
    %1888 = vmatpush1.msra.mxu0 0.0
    %1889 = vmatprep.subr.mxu0 0.0
    %1890 = vmatpush1.msra.mxu0 0.0
    %1891 = vmatprep.subr.mxu0 0.0
    %1892 = vmatpush1.msra.mxu0 0.0
    %1893 = vmatprep.subr.mxu0 0.0
    %1894 = vmatpush1.msra.mxu0 0.0
    %1895 = vmatprep.subr.mxu0 0.0
    %1896 = vmatpush1.msra.mxu0 0.0
    %1897 = vmatprep.subr.mxu0 0.0
    %1898 = vmatpush1.msra.mxu0 0.0
    %1899 = vmatprep.subr.mxu0 0.0
    %1900 = vmatpush1.msra.mxu0 0.0
    %1901 = vmatprep.subr.mxu0 0.0
    %1902 = vmatpush1.msra.mxu0 0.0
    %1903 = vmatprep.subr.mxu0 0.0
    %1904 = vmatpush1.msra.mxu0 0.0
    %1905 = vmatprep.subr.mxu0 0.0
    %1906 = vmatpush1.msra.mxu0 0.0
    %1907 = vmatprep.subr.mxu0 0.0
    %1908 = vmatpush1.msra.mxu0 0.0
    %1909 = vmatprep.subr.mxu0 0.0
    %1910 = vmatpush1.msra.mxu0 0.0
    %1911 = vmatprep.subr.mxu0 0.0
    %1912 = vmatpush1.msra.mxu0 0.0
    %1913 = vmatprep.subr.mxu0 0.0
    %1914 = vmatpush1.msra.mxu0 0.0
    %1915 = vmatprep.subr.mxu0 0.0
    %1916 = vmatpush1.msra.mxu0 0.0
    %1917 = vmatprep.subr.mxu0 0.0
    %1918 = vmatpush1.msra.mxu0 0.0
    %1919 = vmatprep.subr.mxu0 0.0
    %1920 = vmatpush1.msra.mxu0 0.0
    %1921 = vmatprep.subr.mxu0 0.0
    %1922 = vmatpush1.msra.mxu0 0.0
    %1923 = vmatprep.subr.mxu0 0.0
    %1924 = vmatpush1.msra.mxu0 0.0
    %1925 = vmatprep.subr.mxu0 0.0
    %1926 = vmatpush1.msra.mxu0 0.0
    %1927 = vmatprep.mubr.f32.mxu0 0.0
    %1928 = vmatmul.mubr.f32.gmra.mrb[0].mxu0 %v1858
    %v1929 = vpop.f32.mrb[0].mxu0
    %v1930 = vadd.f32 0.0, %v1929
    %v1931 = vpop.f32.mrb[0].mxu0
    %1932 = vmatprep.mubr.f32.mxu0 0.0
    %1933 = vmatmul.mubr.f32.gmra.mrb[0].mxu0 %v1861
    %v1934 = vpop.f32.mrb[0].mxu0
    %v1935 = vadd.f32 0.0, %v1934
    %v1936 = vpop.f32.mrb[0].mxu0
    %1937 = vdwg.mxu0
    %1938 = vrot.lane.b32.xlu0 %v35, 32
    %v1939 = vpop.permute.xlu0 %1938
    %v1942 = vsel %vm151, %v1930, 0
    %v1945 = vsel %vm151, %v1935, 0
    %1947 = vmatprep.subr.mxu0 0.0
    %1948 = vmatpush1.msra.mxu0 %v1939
    %1949 = vmatprep.subr.mxu0 0.0
    %1950 = vmatpush1.msra.mxu0 0.0
    %1951 = vmatprep.subr.mxu0 0.0
    %1952 = vmatpush1.msra.mxu0 0.0
    %1953 = vmatprep.subr.mxu0 0.0
    %1954 = vmatpush1.msra.mxu0 0.0
    %1955 = vmatprep.subr.mxu0 0.0
    %1956 = vmatpush1.msra.mxu0 0.0
    %1957 = vmatprep.subr.mxu0 0.0
    %1958 = vmatpush1.msra.mxu0 0.0
    %1959 = vmatprep.subr.mxu0 0.0
    %1960 = vmatpush1.msra.mxu0 0.0
    %1961 = vmatprep.subr.mxu0 0.0
    %1962 = vmatpush1.msra.mxu0 0.0
    %1963 = vmatprep.subr.mxu0 0.0
    %1964 = vmatpush1.msra.mxu0 0.0
    %1965 = vmatprep.subr.mxu0 0.0
    %1966 = vmatpush1.msra.mxu0 0.0
    %1967 = vmatprep.subr.mxu0 0.0
    %1968 = vmatpush1.msra.mxu0 0.0
    %1969 = vmatprep.subr.mxu0 0.0
    %1970 = vmatpush1.msra.mxu0 0.0
    %1971 = vmatprep.subr.mxu0 0.0
    %1972 = vmatpush1.msra.mxu0 0.0
    %1973 = vmatprep.subr.mxu0 0.0
    %1974 = vmatpush1.msra.mxu0 0.0
    %1975 = vmatprep.subr.mxu0 0.0
    %1976 = vmatpush1.msra.mxu0 0.0
    %1977 = vmatprep.subr.mxu0 0.0
    %1978 = vmatpush1.msra.mxu0 0.0
    %1979 = vmatprep.subr.mxu0 0.0
    %1980 = vmatpush1.msra.mxu0 0.0
    %1981 = vmatprep.subr.mxu0 0.0
    %1982 = vmatpush1.msra.mxu0 0.0
    %1983 = vmatprep.subr.mxu0 0.0
    %1984 = vmatpush1.msra.mxu0 0.0
    %1985 = vmatprep.subr.mxu0 0.0
    %1986 = vmatpush1.msra.mxu0 0.0
    %1987 = vmatprep.subr.mxu0 0.0
    %1988 = vmatpush1.msra.mxu0 0.0
    %1989 = vmatprep.subr.mxu0 0.0
    %1990 = vmatpush1.msra.mxu0 0.0
    %1991 = vmatprep.subr.mxu0 0.0
    %1992 = vmatpush1.msra.mxu0 0.0
    %1993 = vmatprep.subr.mxu0 0.0
    %1994 = vmatpush1.msra.mxu0 0.0
    %1995 = vmatprep.subr.mxu0 0.0
    %1996 = vmatpush1.msra.mxu0 0.0
    %1997 = vmatprep.subr.mxu0 0.0
    %1998 = vmatpush1.msra.mxu0 0.0
    %1999 = vmatprep.subr.mxu0 0.0
    %2000 = vmatpush1.msra.mxu0 0.0
    %2001 = vmatprep.subr.mxu0 0.0
    %2002 = vmatpush1.msra.mxu0 0.0
    %2003 = vmatprep.subr.mxu0 0.0
    %2004 = vmatpush1.msra.mxu0 0.0
    %2005 = vmatprep.subr.mxu0 0.0
    %2006 = vmatpush1.msra.mxu0 0.0
    %2007 = vmatprep.subr.mxu0 0.0
    %2008 = vmatpush1.msra.mxu0 0.0
    %2009 = vmatprep.subr.mxu0 0.0
    %2010 = vmatpush1.msra.mxu0 0.0
    %2011 = vmatprep.mubr.f32.mxu0 0.0
    %2012 = vmatmul.mubr.f32.gmra.mrb[0].mxu0 %v1942
    %v2013 = vpop.f32.mrb[0].mxu0
    %v2014 = vadd.f32 0.0, %v2013
    %v2015 = vpop.f32.mrb[0].mxu0
    %2016 = vmatprep.mubr.f32.mxu0 0.0
    %2017 = vmatmul.mubr.f32.gmra.mrb[0].mxu0 %v1945
    %v2018 = vpop.f32.mrb[0].mxu0
    %v2019 = vadd.f32 0.0, %v2018
    %v2020 = vpop.f32.mrb[0].mxu0
    %2021 = vdwg.mxu0
    %2022 = vrot.lane.b32.xlu0 %v32, 32
    %v2023 = vpop.permute.xlu0 %2022
    %v2026 = vsel %vm151, %v1728, 0
    %v2029 = vsel %vm151, %v1733, 0
    %2031 = vmatprep.subr.mxu0 0.0
    %2032 = vmatpush1.msra.mxu0 %v2023
    %2033 = vmatprep.subr.mxu0 0.0
    %2034 = vmatpush1.msra.mxu0 0.0
    %2035 = vmatprep.subr.mxu0 0.0
    %2036 = vmatpush1.msra.mxu0 0.0
    %2037 = vmatprep.subr.mxu0 0.0
    %2038 = vmatpush1.msra.mxu0 0.0
    %2039 = vmatprep.subr.mxu0 0.0
    %2040 = vmatpush1.msra.mxu0 0.0
    %2041 = vmatprep.subr.mxu0 0.0
    %2042 = vmatpush1.msra.mxu0 0.0
    %2043 = vmatprep.subr.mxu0 0.0
    %2044 = vmatpush1.msra.mxu0 0.0
    %2045 = vmatprep.subr.mxu0 0.0
    %2046 = vmatpush1.msra.mxu0 0.0
    %2047 = vmatprep.subr.mxu0 0.0
    %2048 = vmatpush1.msra.mxu0 0.0
    %2049 = vmatprep.subr.mxu0 0.0
    %2050 = vmatpush1.msra.mxu0 0.0
    %2051 = vmatprep.subr.mxu0 0.0
    %2052 = vmatpush1.msra.mxu0 0.0
    %2053 = vmatprep.subr.mxu0 0.0
    %2054 = vmatpush1.msra.mxu0 0.0
    %2055 = vmatprep.subr.mxu0 0.0
    %2056 = vmatpush1.msra.mxu0 0.0
    %2057 = vmatprep.subr.mxu0 0.0
    %2058 = vmatpush1.msra.mxu0 0.0
    %2059 = vmatprep.subr.mxu0 0.0
    %2060 = vmatpush1.msra.mxu0 0.0
    %2061 = vmatprep.subr.mxu0 0.0
    %2062 = vmatpush1.msra.mxu0 0.0
    %2063 = vmatprep.subr.mxu0 0.0
    %2064 = vmatpush1.msra.mxu0 0.0
    %2065 = vmatprep.subr.mxu0 0.0
    %2066 = vmatpush1.msra.mxu0 0.0
    %2067 = vmatprep.subr.mxu0 0.0
    %2068 = vmatpush1.msra.mxu0 0.0
    %2069 = vmatprep.subr.mxu0 0.0
    %2070 = vmatpush1.msra.mxu0 0.0
    %2071 = vmatprep.subr.mxu0 0.0
    %2072 = vmatpush1.msra.mxu0 0.0
    %2073 = vmatprep.subr.mxu0 0.0
    %2074 = vmatpush1.msra.mxu0 0.0
    %2075 = vmatprep.subr.mxu0 0.0
    %2076 = vmatpush1.msra.mxu0 0.0
    %2077 = vmatprep.subr.mxu0 0.0
    %2078 = vmatpush1.msra.mxu0 0.0
    %2079 = vmatprep.subr.mxu0 0.0
    %2080 = vmatpush1.msra.mxu0 0.0
    %2081 = vmatprep.subr.mxu0 0.0
    %2082 = vmatpush1.msra.mxu0 0.0
    %2083 = vmatprep.subr.mxu0 0.0
    %2084 = vmatpush1.msra.mxu0 0.0
    %2085 = vmatprep.subr.mxu0 0.0
    %2086 = vmatpush1.msra.mxu0 0.0
    %2087 = vmatprep.subr.mxu0 0.0
    %2088 = vmatpush1.msra.mxu0 0.0
    %2089 = vmatprep.subr.mxu0 0.0
    %2090 = vmatpush1.msra.mxu0 0.0
    %2091 = vmatprep.subr.mxu0 0.0
    %2092 = vmatpush1.msra.mxu0 0.0
    %2093 = vmatprep.subr.mxu0 0.0
    %2094 = vmatpush1.msra.mxu0 0.0
    %2095 = vmatprep.mubr.f32.mxu0 0.0
    %2096 = vmatmul.mubr.f32.gmra.mrb[0].mxu0 %v2026
    %v2097 = vpop.f32.mrb[0].mxu0
    %v2098 = vadd.f32 %v2014, %v2097
    %v2099 = vpop.f32.mrb[0].mxu0
    %2100 = vmatprep.mubr.f32.mxu0 0.0
    %2101 = vmatmul.mubr.f32.gmra.mrb[0].mxu0 %v2029
    %v2102 = vpop.f32.mrb[0].mxu0
    %v2103 = vadd.f32 %v2019, %v2102
    %v2104 = vpop.f32.mrb[0].mxu0
    %2105 = vdwg.mxu0
    %2106 = vrot.lane.b32.xlu0 %v1534, 112
    %v2107 = vpop.permute.xlu0 %2106
    %2108 = vrot.lane.b32.xlu0 %v1535, 112
    %v2109 = vpop.permute.xlu0 %2108
    %2110 = vrot.lane.b32.xlu0 %v1524, 112
    %v2111 = vpop.permute.xlu0 %2110
    %2112 = vrot.lane.b32.xlu0 %v1529, 112
    %v2113 = vpop.permute.xlu0 %2112
    %v2114 = vsel %vm151, %v2107, 0
    %v2116 = vsel %vm151, %v2109, 0
    %v2118 = vsel %vm151, %v2111, 0
    %v2120 = vsel %vm151, %v2113, 0
    %2122 = vmatprep.subr.mxu0 0.0
    %2123 = vmatpush1.xpose.msra.mxu0 %v2118
    %2124 = vmatprep.subr.mxu0 0.0
    %2125 = vmatpush1.xpose.msra.mxu0 %v2120
    %2126 = vmatprep.subr.mxu0 0.0
    %2127 = vmatpush1.xpose.msra.mxu0 0.0
    %2128 = vmatprep.subr.mxu0 0.0
    %2129 = vmatpush1.xpose.msra.mxu0 0.0
    %2130 = vmatprep.subr.mxu0 0.0
    %2131 = vmatpush1.xpose.msra.mxu0 0.0
    %2132 = vmatprep.subr.mxu0 0.0
    %2133 = vmatpush1.xpose.msra.mxu0 0.0
    %2134 = vmatprep.subr.mxu0 0.0
    %2135 = vmatpush1.xpose.msra.mxu0 0.0
    %2136 = vmatprep.subr.mxu0 0.0
    %2137 = vmatpush1.xpose.msra.mxu0 0.0
    %2138 = vmatprep.subr.mxu0 0.0
    %2139 = vmatpush1.xpose.msra.mxu0 0.0
    %2140 = vmatprep.subr.mxu0 0.0
    %2141 = vmatpush1.xpose.msra.mxu0 0.0
    %2142 = vmatprep.subr.mxu0 0.0
    %2143 = vmatpush1.xpose.msra.mxu0 0.0
    %2144 = vmatprep.subr.mxu0 0.0
    %2145 = vmatpush1.xpose.msra.mxu0 0.0
    %2146 = vmatprep.subr.mxu0 0.0
    %2147 = vmatpush1.xpose.msra.mxu0 0.0
    %2148 = vmatprep.subr.mxu0 0.0
    %2149 = vmatpush1.xpose.msra.mxu0 0.0
    %2150 = vmatprep.subr.mxu0 0.0
    %2151 = vmatpush1.xpose.msra.mxu0 0.0
    %2152 = vmatprep.subr.mxu0 0.0
    %2153 = vmatpush1.xpose.msra.mxu0 0.0
    %2154 = vmatprep.subr.mxu0 0.0
    %2155 = vmatpush1.xpose.msra.mxu0 0.0
    %2156 = vmatprep.subr.mxu0 0.0
    %2157 = vmatpush1.xpose.msra.mxu0 0.0
    %2158 = vmatprep.subr.mxu0 0.0
    %2159 = vmatpush1.xpose.msra.mxu0 0.0
    %2160 = vmatprep.subr.mxu0 0.0
    %2161 = vmatpush1.xpose.msra.mxu0 0.0
    %2162 = vmatprep.subr.mxu0 0.0
    %2163 = vmatpush1.xpose.msra.mxu0 0.0
    %2164 = vmatprep.subr.mxu0 0.0
    %2165 = vmatpush1.xpose.msra.mxu0 0.0
    %2166 = vmatprep.subr.mxu0 0.0
    %2167 = vmatpush1.xpose.msra.mxu0 0.0
    %2168 = vmatprep.subr.mxu0 0.0
    %2169 = vmatpush1.xpose.msra.mxu0 0.0
    %2170 = vmatprep.subr.mxu0 0.0
    %2171 = vmatpush1.xpose.msra.mxu0 0.0
    %2172 = vmatprep.subr.mxu0 0.0
    %2173 = vmatpush1.xpose.msra.mxu0 0.0
    %2174 = vmatprep.subr.mxu0 0.0
    %2175 = vmatpush1.xpose.msra.mxu0 0.0
    %2176 = vmatprep.subr.mxu0 0.0
    %2177 = vmatpush1.xpose.msra.mxu0 0.0
    %2178 = vmatprep.subr.mxu0 0.0
    %2179 = vmatpush1.xpose.msra.mxu0 0.0
    %2180 = vmatprep.subr.mxu0 0.0
    %2181 = vmatpush1.xpose.msra.mxu0 0.0
    %2182 = vmatprep.subr.mxu0 0.0
    %2183 = vmatpush1.xpose.msra.mxu0 0.0
    %2184 = vmatprep.subr.mxu0 0.0
    %2185 = vmatpush1.xpose.msra.mxu0 0.0
    %2186 = vmatprep.mubr.f32.mxu0 0.0
    %2187 = vmatmul.mubr.f32.gmra.mrb[0].mxu0 %v2114
    %v2188 = vpop.f32.mrb[0].mxu0
    %v2189 = vadd.f32 0.0, %v2188
    %v2190 = vpop.f32.mrb[0].mxu0
    %2191 = vmatprep.mubr.f32.mxu0 0.0
    %2192 = vmatmul.mubr.f32.gmra.mrb[0].mxu0 %v2116
    %v2193 = vpop.f32.mrb[0].mxu0
    %v2194 = vadd.f32 0.0, %v2193
    %v2195 = vpop.f32.mrb[0].mxu0
    %2196 = vdwg.mxu0
    %v2197 = vsel %vm1536, %v2189, -10000.0
    %v2198 = vsel %vm1537, %v2194, -10000.0
    %v2199 = vsel %vm239, %v2197, -inf
    %2200 = vmax.xlane.f32.xlu0 %v2199
    %v2201 = vpop.xlane.xlu0 %2200
    %v2202 = vsel %vm239, %v2198, -inf
    %2203 = vmax.xlane.f32.xlu0 %v2202
    %v2204 = vpop.xlane.xlu0 %2203
    %v2205 = vsub.f32 %v2197, %v2201
    %v2206 = vsub.f32 %v2198, %v2204
    %v2207 = vmul.f32 %v2205, 1.442695
    %v2208 = vpow.pop %v2207
    %v2209 = vmul.f32 %v2206, 1.442695
    %v2210 = vpow.pop %v2209
    %v2211 = vsel %vm239, %v2208, 0.0
    %2212 = vadd.xlane.f32.xlu0 %v2211
    %v2213 = vpop.xlane.xlu0 %2212
    %v2214 = vsel %vm239, %v2210, 0.0
    %2215 = vadd.xlane.f32.xlu0 %v2214
    %v2216 = vpop.xlane.xlu0 %2215
    %v2217 = vrcp.pop %v2213
    %v2218 = vrcp.pop %v2216
    %v2219 = vmul.f32 %v2208, %v2217
    %v2220 = vmul.f32 %v2210, %v2218
    %2221 = vrot.lane.b32.xlu0 %v1524, 80
    %v2222 = vpop.permute.xlu0 %2221
    %2223 = vrot.lane.b32.xlu0 %v1529, 80
    %v2224 = vpop.permute.xlu0 %2223
    %v2228 = vsel %vm239, %v2219, 0
    %v2231 = vsel %vm239, %v2220, 0
    %2233 = vmatprep.subr.mxu0 0.0
    %2234 = vmatpush1.msra.mxu0 %v2222
    %2235 = vmatprep.subr.mxu0 0.0
    %2236 = vmatpush1.msra.mxu0 %v2224
    %2237 = vmatprep.subr.mxu0 0.0
    %2238 = vmatpush1.msra.mxu0 0.0
    %2239 = vmatprep.subr.mxu0 0.0
    %2240 = vmatpush1.msra.mxu0 0.0
    %2241 = vmatprep.subr.mxu0 0.0
    %2242 = vmatpush1.msra.mxu0 0.0
    %2243 = vmatprep.subr.mxu0 0.0
    %2244 = vmatpush1.msra.mxu0 0.0
    %2245 = vmatprep.subr.mxu0 0.0
    %2246 = vmatpush1.msra.mxu0 0.0
    %2247 = vmatprep.subr.mxu0 0.0
    %2248 = vmatpush1.msra.mxu0 0.0
    %2249 = vmatprep.subr.mxu0 0.0
    %2250 = vmatpush1.msra.mxu0 0.0
    %2251 = vmatprep.subr.mxu0 0.0
    %2252 = vmatpush1.msra.mxu0 0.0
    %2253 = vmatprep.subr.mxu0 0.0
    %2254 = vmatpush1.msra.mxu0 0.0
    %2255 = vmatprep.subr.mxu0 0.0
    %2256 = vmatpush1.msra.mxu0 0.0
    %2257 = vmatprep.subr.mxu0 0.0
    %2258 = vmatpush1.msra.mxu0 0.0
    %2259 = vmatprep.subr.mxu0 0.0
    %2260 = vmatpush1.msra.mxu0 0.0
    %2261 = vmatprep.subr.mxu0 0.0
    %2262 = vmatpush1.msra.mxu0 0.0
    %2263 = vmatprep.subr.mxu0 0.0
    %2264 = vmatpush1.msra.mxu0 0.0
    %2265 = vmatprep.subr.mxu0 0.0
    %2266 = vmatpush1.msra.mxu0 0.0
    %2267 = vmatprep.subr.mxu0 0.0
    %2268 = vmatpush1.msra.mxu0 0.0
    %2269 = vmatprep.subr.mxu0 0.0
    %2270 = vmatpush1.msra.mxu0 0.0
    %2271 = vmatprep.subr.mxu0 0.0
    %2272 = vmatpush1.msra.mxu0 0.0
    %2273 = vmatprep.subr.mxu0 0.0
    %2274 = vmatpush1.msra.mxu0 0.0
    %2275 = vmatprep.subr.mxu0 0.0
    %2276 = vmatpush1.msra.mxu0 0.0
    %2277 = vmatprep.subr.mxu0 0.0
    %2278 = vmatpush1.msra.mxu0 0.0
    %2279 = vmatprep.subr.mxu0 0.0
    %2280 = vmatpush1.msra.mxu0 0.0
    %2281 = vmatprep.subr.mxu0 0.0
    %2282 = vmatpush1.msra.mxu0 0.0
    %2283 = vmatprep.subr.mxu0 0.0
    %2284 = vmatpush1.msra.mxu0 0.0
    %2285 = vmatprep.subr.mxu0 0.0
    %2286 = vmatpush1.msra.mxu0 0.0
    %2287 = vmatprep.subr.mxu0 0.0
    %2288 = vmatpush1.msra.mxu0 0.0
    %2289 = vmatprep.subr.mxu0 0.0
    %2290 = vmatpush1.msra.mxu0 0.0
    %2291 = vmatprep.subr.mxu0 0.0
    %2292 = vmatpush1.msra.mxu0 0.0
    %2293 = vmatprep.subr.mxu0 0.0
    %2294 = vmatpush1.msra.mxu0 0.0
    %2295 = vmatprep.subr.mxu0 0.0
    %2296 = vmatpush1.msra.mxu0 0.0
    %2297 = vmatprep.mubr.f32.mxu0 0.0
    %2298 = vmatmul.mubr.f32.gmra.mrb[0].mxu0 %v2228
    %v2299 = vpop.f32.mrb[0].mxu0
    %v2300 = vadd.f32 0.0, %v2299
    %v2301 = vpop.f32.mrb[0].mxu0
    %2302 = vmatprep.mubr.f32.mxu0 0.0
    %2303 = vmatmul.mubr.f32.gmra.mrb[0].mxu0 %v2231
    %v2304 = vpop.f32.mrb[0].mxu0
    %v2305 = vadd.f32 0.0, %v2304
    %v2306 = vpop.f32.mrb[0].mxu0
    %2307 = vdwg.mxu0
    %2308 = vrot.lane.b32.xlu0 %v38, 32
    %v2309 = vpop.permute.xlu0 %2308
    %v2312 = vsel %vm151, %v2300, 0
    %v2315 = vsel %vm151, %v2305, 0
    %2317 = vmatprep.subr.mxu0 0.0
    %2318 = vmatpush1.msra.mxu0 %v2309
    %2319 = vmatprep.subr.mxu0 0.0
    %2320 = vmatpush1.msra.mxu0 0.0
    %2321 = vmatprep.subr.mxu0 0.0
    %2322 = vmatpush1.msra.mxu0 0.0
    %2323 = vmatprep.subr.mxu0 0.0
    %2324 = vmatpush1.msra.mxu0 0.0
    %2325 = vmatprep.subr.mxu0 0.0
    %2326 = vmatpush1.msra.mxu0 0.0
    %2327 = vmatprep.subr.mxu0 0.0
    %2328 = vmatpush1.msra.mxu0 0.0
    %2329 = vmatprep.subr.mxu0 0.0
    %2330 = vmatpush1.msra.mxu0 0.0
    %2331 = vmatprep.subr.mxu0 0.0
    %2332 = vmatpush1.msra.mxu0 0.0
    %2333 = vmatprep.subr.mxu0 0.0
    %2334 = vmatpush1.msra.mxu0 0.0
    %2335 = vmatprep.subr.mxu0 0.0
    %2336 = vmatpush1.msra.mxu0 0.0
    %2337 = vmatprep.subr.mxu0 0.0
    %2338 = vmatpush1.msra.mxu0 0.0
    %2339 = vmatprep.subr.mxu0 0.0
    %2340 = vmatpush1.msra.mxu0 0.0
    %2341 = vmatprep.subr.mxu0 0.0
    %2342 = vmatpush1.msra.mxu0 0.0
    %2343 = vmatprep.subr.mxu0 0.0
    %2344 = vmatpush1.msra.mxu0 0.0
    %2345 = vmatprep.subr.mxu0 0.0
    %2346 = vmatpush1.msra.mxu0 0.0
    %2347 = vmatprep.subr.mxu0 0.0
    %2348 = vmatpush1.msra.mxu0 0.0
    %2349 = vmatprep.subr.mxu0 0.0
    %2350 = vmatpush1.msra.mxu0 0.0
    %2351 = vmatprep.subr.mxu0 0.0
    %2352 = vmatpush1.msra.mxu0 0.0
    %2353 = vmatprep.subr.mxu0 0.0
    %2354 = vmatpush1.msra.mxu0 0.0
    %2355 = vmatprep.subr.mxu0 0.0
    %2356 = vmatpush1.msra.mxu0 0.0
    %2357 = vmatprep.subr.mxu0 0.0
    %2358 = vmatpush1.msra.mxu0 0.0
    %2359 = vmatprep.subr.mxu0 0.0
    %2360 = vmatpush1.msra.mxu0 0.0
    %2361 = vmatprep.subr.mxu0 0.0
    %2362 = vmatpush1.msra.mxu0 0.0
    %2363 = vmatprep.subr.mxu0 0.0
    %2364 = vmatpush1.msra.mxu0 0.0
    %2365 = vmatprep.subr.mxu0 0.0
    %2366 = vmatpush1.msra.mxu0 0.0
    %2367 = vmatprep.subr.mxu0 0.0
    %2368 = vmatpush1.msra.mxu0 0.0
    %2369 = vmatprep.subr.mxu0 0.0
    %2370 = vmatpush1.msra.mxu0 0.0
    %2371 = vmatprep.subr.mxu0 0.0
    %2372 = vmatpush1.msra.mxu0 0.0
    %2373 = vmatprep.subr.mxu0 0.0
    %2374 = vmatpush1.msra.mxu0 0.0
    %2375 = vmatprep.subr.mxu0 0.0
    %2376 = vmatpush1.msra.mxu0 0.0
    %2377 = vmatprep.subr.mxu0 0.0
    %2378 = vmatpush1.msra.mxu0 0.0
    %2379 = vmatprep.subr.mxu0 0.0
    %2380 = vmatpush1.msra.mxu0 0.0
    %2381 = vmatprep.mubr.f32.mxu0 0.0
    %2382 = vmatmul.mubr.f32.gmra.mrb[0].mxu0 %v2312
    %v2383 = vpop.f32.mrb[0].mxu0
    %v2384 = vadd.f32 0.0, %v2383
    %v2385 = vpop.f32.mrb[0].mxu0
    %2386 = vmatprep.mubr.f32.mxu0 0.0
    %2387 = vmatmul.mubr.f32.gmra.mrb[0].mxu0 %v2315
    %v2388 = vpop.f32.mrb[0].mxu0
    %v2389 = vadd.f32 0.0, %v2388
    %v2390 = vpop.f32.mrb[0].mxu0
    %2391 = vdwg.mxu0
    %v2392 = vadd.f32 %v2098, %v2384
    %v2393 = vadd.f32 %v2103, %v2389
    %2394 = vrot.lane.b32.xlu0 %v1534, 104
    %v2395 = vpop.permute.xlu0 %2394
    %2396 = vrot.lane.b32.xlu0 %v1535, 104
    %v2397 = vpop.permute.xlu0 %2396
    %2398 = vrot.lane.b32.xlu0 %v1524, 104
    %v2399 = vpop.permute.xlu0 %2398
    %2400 = vrot.lane.b32.xlu0 %v1529, 104
    %v2401 = vpop.permute.xlu0 %2400
    %v2402 = vsel %vm151, %v2395, 0
    %v2404 = vsel %vm151, %v2397, 0
    %v2406 = vsel %vm151, %v2399, 0
    %v2408 = vsel %vm151, %v2401, 0
    %2410 = vmatprep.subr.mxu0 0.0
    %2411 = vmatpush1.xpose.msra.mxu0 %v2406
    %2412 = vmatprep.subr.mxu0 0.0
    %2413 = vmatpush1.xpose.msra.mxu0 %v2408
    %2414 = vmatprep.subr.mxu0 0.0
    %2415 = vmatpush1.xpose.msra.mxu0 0.0
    %2416 = vmatprep.subr.mxu0 0.0
    %2417 = vmatpush1.xpose.msra.mxu0 0.0
    %2418 = vmatprep.subr.mxu0 0.0
    %2419 = vmatpush1.xpose.msra.mxu0 0.0
    %2420 = vmatprep.subr.mxu0 0.0
    %2421 = vmatpush1.xpose.msra.mxu0 0.0
    %2422 = vmatprep.subr.mxu0 0.0
    %2423 = vmatpush1.xpose.msra.mxu0 0.0
    %2424 = vmatprep.subr.mxu0 0.0
    %2425 = vmatpush1.xpose.msra.mxu0 0.0
    %2426 = vmatprep.subr.mxu0 0.0
    %2427 = vmatpush1.xpose.msra.mxu0 0.0
    %2428 = vmatprep.subr.mxu0 0.0
    %2429 = vmatpush1.xpose.msra.mxu0 0.0
    %2430 = vmatprep.subr.mxu0 0.0
    %2431 = vmatpush1.xpose.msra.mxu0 0.0
    %2432 = vmatprep.subr.mxu0 0.0
    %2433 = vmatpush1.xpose.msra.mxu0 0.0
    %2434 = vmatprep.subr.mxu0 0.0
    %2435 = vmatpush1.xpose.msra.mxu0 0.0
    %2436 = vmatprep.subr.mxu0 0.0
    %2437 = vmatpush1.xpose.msra.mxu0 0.0
    %2438 = vmatprep.subr.mxu0 0.0
    %2439 = vmatpush1.xpose.msra.mxu0 0.0
    %2440 = vmatprep.subr.mxu0 0.0
    %2441 = vmatpush1.xpose.msra.mxu0 0.0
    %2442 = vmatprep.subr.mxu0 0.0
    %2443 = vmatpush1.xpose.msra.mxu0 0.0
    %2444 = vmatprep.subr.mxu0 0.0
    %2445 = vmatpush1.xpose.msra.mxu0 0.0
    %2446 = vmatprep.subr.mxu0 0.0
    %2447 = vmatpush1.xpose.msra.mxu0 0.0
    %2448 = vmatprep.subr.mxu0 0.0
    %2449 = vmatpush1.xpose.msra.mxu0 0.0
    %2450 = vmatprep.subr.mxu0 0.0
    %2451 = vmatpush1.xpose.msra.mxu0 0.0
    %2452 = vmatprep.subr.mxu0 0.0
    %2453 = vmatpush1.xpose.msra.mxu0 0.0
    %2454 = vmatprep.subr.mxu0 0.0
    %2455 = vmatpush1.xpose.msra.mxu0 0.0
    %2456 = vmatprep.subr.mxu0 0.0
    %2457 = vmatpush1.xpose.msra.mxu0 0.0
    %2458 = vmatprep.subr.mxu0 0.0
    %2459 = vmatpush1.xpose.msra.mxu0 0.0
    %2460 = vmatprep.subr.mxu0 0.0
    %2461 = vmatpush1.xpose.msra.mxu0 0.0
    %2462 = vmatprep.subr.mxu0 0.0
    %2463 = vmatpush1.xpose.msra.mxu0 0.0
    %2464 = vmatprep.subr.mxu0 0.0
    %2465 = vmatpush1.xpose.msra.mxu0 0.0
    %2466 = vmatprep.subr.mxu0 0.0
    %2467 = vmatpush1.xpose.msra.mxu0 0.0
    %2468 = vmatprep.subr.mxu0 0.0
    %2469 = vmatpush1.xpose.msra.mxu0 0.0
    %2470 = vmatprep.subr.mxu0 0.0
    %2471 = vmatpush1.xpose.msra.mxu0 0.0
    %2472 = vmatprep.subr.mxu0 0.0
    %2473 = vmatpush1.xpose.msra.mxu0 0.0
    %2474 = vmatprep.mubr.f32.mxu0 0.0
    %2475 = vmatmul.mubr.f32.gmra.mrb[0].mxu0 %v2402
    %v2476 = vpop.f32.mrb[0].mxu0
    %v2477 = vadd.f32 0.0, %v2476
    %v2478 = vpop.f32.mrb[0].mxu0
    %2479 = vmatprep.mubr.f32.mxu0 0.0
    %2480 = vmatmul.mubr.f32.gmra.mrb[0].mxu0 %v2404
    %v2481 = vpop.f32.mrb[0].mxu0
    %v2482 = vadd.f32 0.0, %v2481
    %v2483 = vpop.f32.mrb[0].mxu0
    %2484 = vdwg.mxu0
    %v2485 = vsel %vm1536, %v2477, -10000.0
    %v2486 = vsel %vm1537, %v2482, -10000.0
    %v2487 = vsel %vm239, %v2485, -inf
    %2488 = vmax.xlane.f32.xlu0 %v2487
    %v2489 = vpop.xlane.xlu0 %2488
    %v2490 = vsel %vm239, %v2486, -inf
    %2491 = vmax.xlane.f32.xlu0 %v2490
    %v2492 = vpop.xlane.xlu0 %2491
    %v2493 = vsub.f32 %v2485, %v2489
    %v2494 = vsub.f32 %v2486, %v2492
    %v2495 = vmul.f32 %v2493, 1.442695
    %v2496 = vpow.pop %v2495
    %v2497 = vmul.f32 %v2494, 1.442695
    %v2498 = vpow.pop %v2497
    %v2499 = vsel %vm239, %v2496, 0.0
    %2500 = vadd.xlane.f32.xlu0 %v2499
    %v2501 = vpop.xlane.xlu0 %2500
    %v2502 = vsel %vm239, %v2498, 0.0
    %2503 = vadd.xlane.f32.xlu0 %v2502
    %v2504 = vpop.xlane.xlu0 %2503
    %v2505 = vrcp.pop %v2501
    %v2506 = vrcp.pop %v2504
    %v2507 = vmul.f32 %v2496, %v2505
    %v2508 = vmul.f32 %v2498, %v2506
    %2509 = vrot.lane.b32.xlu0 %v1524, 72
    %v2510 = vpop.permute.xlu0 %2509
    %2511 = vrot.lane.b32.xlu0 %v1529, 72
    %v2512 = vpop.permute.xlu0 %2511
    %v2516 = vsel %vm239, %v2507, 0
    %v2519 = vsel %vm239, %v2508, 0
    %2521 = vmatprep.subr.mxu0 0.0
    %2522 = vmatpush1.msra.mxu0 %v2510
    %2523 = vmatprep.subr.mxu0 0.0
    %2524 = vmatpush1.msra.mxu0 %v2512
    %2525 = vmatprep.subr.mxu0 0.0
    %2526 = vmatpush1.msra.mxu0 0.0
    %2527 = vmatprep.subr.mxu0 0.0
    %2528 = vmatpush1.msra.mxu0 0.0
    %2529 = vmatprep.subr.mxu0 0.0
    %2530 = vmatpush1.msra.mxu0 0.0
    %2531 = vmatprep.subr.mxu0 0.0
    %2532 = vmatpush1.msra.mxu0 0.0
    %2533 = vmatprep.subr.mxu0 0.0
    %2534 = vmatpush1.msra.mxu0 0.0
    %2535 = vmatprep.subr.mxu0 0.0
    %2536 = vmatpush1.msra.mxu0 0.0
    %2537 = vmatprep.subr.mxu0 0.0
    %2538 = vmatpush1.msra.mxu0 0.0
    %2539 = vmatprep.subr.mxu0 0.0
    %2540 = vmatpush1.msra.mxu0 0.0
    %2541 = vmatprep.subr.mxu0 0.0
    %2542 = vmatpush1.msra.mxu0 0.0
    %2543 = vmatprep.subr.mxu0 0.0
    %2544 = vmatpush1.msra.mxu0 0.0
    %2545 = vmatprep.subr.mxu0 0.0
    %2546 = vmatpush1.msra.mxu0 0.0
    %2547 = vmatprep.subr.mxu0 0.0
    %2548 = vmatpush1.msra.mxu0 0.0
    %2549 = vmatprep.subr.mxu0 0.0
    %2550 = vmatpush1.msra.mxu0 0.0
    %2551 = vmatprep.subr.mxu0 0.0
    %2552 = vmatpush1.msra.mxu0 0.0
    %2553 = vmatprep.subr.mxu0 0.0
    %2554 = vmatpush1.msra.mxu0 0.0
    %2555 = vmatprep.subr.mxu0 0.0
    %2556 = vmatpush1.msra.mxu0 0.0
    %2557 = vmatprep.subr.mxu0 0.0
    %2558 = vmatpush1.msra.mxu0 0.0
    %2559 = vmatprep.subr.mxu0 0.0
    %2560 = vmatpush1.msra.mxu0 0.0
    %2561 = vmatprep.subr.mxu0 0.0
    %2562 = vmatpush1.msra.mxu0 0.0
    %2563 = vmatprep.subr.mxu0 0.0
    %2564 = vmatpush1.msra.mxu0 0.0
    %2565 = vmatprep.subr.mxu0 0.0
    %2566 = vmatpush1.msra.mxu0 0.0
    %2567 = vmatprep.subr.mxu0 0.0
    %2568 = vmatpush1.msra.mxu0 0.0
    %2569 = vmatprep.subr.mxu0 0.0
    %2570 = vmatpush1.msra.mxu0 0.0
    %2571 = vmatprep.subr.mxu0 0.0
    %2572 = vmatpush1.msra.mxu0 0.0
    %2573 = vmatprep.subr.mxu0 0.0
    %2574 = vmatpush1.msra.mxu0 0.0
    %2575 = vmatprep.subr.mxu0 0.0
    %2576 = vmatpush1.msra.mxu0 0.0
    %2577 = vmatprep.subr.mxu0 0.0
    %2578 = vmatpush1.msra.mxu0 0.0
    %2579 = vmatprep.subr.mxu0 0.0
    %2580 = vmatpush1.msra.mxu0 0.0
    %2581 = vmatprep.subr.mxu0 0.0
    %2582 = vmatpush1.msra.mxu0 0.0
    %2583 = vmatprep.subr.mxu0 0.0
    %2584 = vmatpush1.msra.mxu0 0.0
    %2585 = vmatprep.mubr.f32.mxu0 0.0
    %2586 = vmatmul.mubr.f32.gmra.mrb[0].mxu0 %v2516
    %v2587 = vpop.f32.mrb[0].mxu0
    %v2588 = vadd.f32 0.0, %v2587
    %v2589 = vpop.f32.mrb[0].mxu0
    %2590 = vmatprep.mubr.f32.mxu0 0.0
    %2591 = vmatmul.mubr.f32.gmra.mrb[0].mxu0 %v2519
    %v2592 = vpop.f32.mrb[0].mxu0
    %v2593 = vadd.f32 0.0, %v2592
    %v2594 = vpop.f32.mrb[0].mxu0
    %2595 = vdwg.mxu0
    %2596 = vrot.lane.b32.xlu0 %v41, 32
    %v2597 = vpop.permute.xlu0 %2596
    %v2600 = vsel %vm151, %v2588, 0
    %v2603 = vsel %vm151, %v2593, 0
    %2605 = vmatprep.subr.mxu0 0.0
    %2606 = vmatpush1.msra.mxu0 %v2597
    %2607 = vmatprep.subr.mxu0 0.0
    %2608 = vmatpush1.msra.mxu0 0.0
    %2609 = vmatprep.subr.mxu0 0.0
    %2610 = vmatpush1.msra.mxu0 0.0
    %2611 = vmatprep.subr.mxu0 0.0
    %2612 = vmatpush1.msra.mxu0 0.0
    %2613 = vmatprep.subr.mxu0 0.0
    %2614 = vmatpush1.msra.mxu0 0.0
    %2615 = vmatprep.subr.mxu0 0.0
    %2616 = vmatpush1.msra.mxu0 0.0
    %2617 = vmatprep.subr.mxu0 0.0
    %2618 = vmatpush1.msra.mxu0 0.0
    %2619 = vmatprep.subr.mxu0 0.0
    %2620 = vmatpush1.msra.mxu0 0.0
    %2621 = vmatprep.subr.mxu0 0.0
    %2622 = vmatpush1.msra.mxu0 0.0
    %2623 = vmatprep.subr.mxu0 0.0
    %2624 = vmatpush1.msra.mxu0 0.0
    %2625 = vmatprep.subr.mxu0 0.0
    %2626 = vmatpush1.msra.mxu0 0.0
    %2627 = vmatprep.subr.mxu0 0.0
    %2628 = vmatpush1.msra.mxu0 0.0
    %2629 = vmatprep.subr.mxu0 0.0
    %2630 = vmatpush1.msra.mxu0 0.0
    %2631 = vmatprep.subr.mxu0 0.0
    %2632 = vmatpush1.msra.mxu0 0.0
    %2633 = vmatprep.subr.mxu0 0.0
    %2634 = vmatpush1.msra.mxu0 0.0
    %2635 = vmatprep.subr.mxu0 0.0
    %2636 = vmatpush1.msra.mxu0 0.0
    %2637 = vmatprep.subr.mxu0 0.0
    %2638 = vmatpush1.msra.mxu0 0.0
    %2639 = vmatprep.subr.mxu0 0.0
    %2640 = vmatpush1.msra.mxu0 0.0
    %2641 = vmatprep.subr.mxu0 0.0
    %2642 = vmatpush1.msra.mxu0 0.0
    %2643 = vmatprep.subr.mxu0 0.0
    %2644 = vmatpush1.msra.mxu0 0.0
    %2645 = vmatprep.subr.mxu0 0.0
    %2646 = vmatpush1.msra.mxu0 0.0
    %2647 = vmatprep.subr.mxu0 0.0
    %2648 = vmatpush1.msra.mxu0 0.0
    %2649 = vmatprep.subr.mxu0 0.0
    %2650 = vmatpush1.msra.mxu0 0.0
    %2651 = vmatprep.subr.mxu0 0.0
    %2652 = vmatpush1.msra.mxu0 0.0
    %2653 = vmatprep.subr.mxu0 0.0
    %2654 = vmatpush1.msra.mxu0 0.0
    %2655 = vmatprep.subr.mxu0 0.0
    %2656 = vmatpush1.msra.mxu0 0.0
    %2657 = vmatprep.subr.mxu0 0.0
    %2658 = vmatpush1.msra.mxu0 0.0
    %2659 = vmatprep.subr.mxu0 0.0
    %2660 = vmatpush1.msra.mxu0 0.0
    %2661 = vmatprep.subr.mxu0 0.0
    %2662 = vmatpush1.msra.mxu0 0.0
    %2663 = vmatprep.subr.mxu0 0.0
    %2664 = vmatpush1.msra.mxu0 0.0
    %2665 = vmatprep.subr.mxu0 0.0
    %2666 = vmatpush1.msra.mxu0 0.0
    %2667 = vmatprep.subr.mxu0 0.0
    %2668 = vmatpush1.msra.mxu0 0.0
    %2669 = vmatprep.mubr.f32.mxu0 0.0
    %2670 = vmatmul.mubr.f32.gmra.mrb[0].mxu0 %v2600
    %v2671 = vpop.f32.mrb[0].mxu0
    %v2672 = vadd.f32 0.0, %v2671
    %v2673 = vpop.f32.mrb[0].mxu0
    %2674 = vmatprep.mubr.f32.mxu0 0.0
    %2675 = vmatmul.mubr.f32.gmra.mrb[0].mxu0 %v2603
    %v2676 = vpop.f32.mrb[0].mxu0
    %v2677 = vadd.f32 0.0, %v2676
    %v2678 = vpop.f32.mrb[0].mxu0
    %2679 = vdwg.mxu0
    %v2680 = vadd.f32 %v2392, %v2672
    %v2681 = vadd.f32 %v2393, %v2677
    %v2682 = vlaneseq
    %v2683 = vshrl.u32 %v2682, 7
    %v2684 = vsub.s32 4, %v2683
    %v2685 = vrot.slane %v51, %v2684
    %v2686 = vadd.f32 %v2680, %v2685
    %v2687 = vadd.f32 %v2681, %v2685
    %v2688 = vadd.f32 %v2686, %v1344
    %v2689 = vadd.f32 %v2687, %v1345
    %v2690 = vsel %vm57, %v2688, 0.0
    %2691 = vadd.xlane.f32.xlu0 %v2690
    %v2692 = vpop.xlane.xlu0 %2691
    %v2693 = vsel %vm57, %v2689, 0.0
    %2694 = vadd.xlane.f32.xlu0 %v2693
    %v2695 = vpop.xlane.xlu0 %2694
    %v2696 = vmul.f32 %v2692, %v1313
    %v2697 = vmul.f32 %v2695, %v1313
    %v2698 = vsub.f32 %v2688, %v2696
    %v2699 = vsub.f32 %v2689, %v2697
    %v2700 = vmul.f32 %v2698, %v2698
    %v2701 = vmul.f32 %v2699, %v2699
    %v2702 = vsel %vm57, %v2700, 0.0
    %2703 = vadd.xlane.f32.xlu0 %v2702
    %v2704 = vpop.xlane.xlu0 %2703
    %v2705 = vsel %vm57, %v2701, 0.0
    %2706 = vadd.xlane.f32.xlu0 %v2705
    %v2707 = vpop.xlane.xlu0 %2706
    %v2708 = vmul.f32 %v2704, %v1313
    %v2709 = vmul.f32 %v2707, %v1313
    %v2710 = vadd.f32 %v2708, 1e-12
    %v2711 = vadd.f32 %v2709, 1e-12
    %v2712 = vrsqrt.pop %v2710
    %v2713 = vrsqrt.pop %v2711
    %v2714 = vmul.f32 %v2698, %v2712
    %v2715 = vmul.f32 %v2699, %v2713
    %v2716 = vlaneseq
    %v2717 = vshrl.u32 %v2716, 7
    %v2718 = vsub.s32 1, %v2717
    %v2719 = vrot.slane %v52, %v2718
    %v2720 = vmul.f32 %v2714, %v2719
    %v2721 = vmul.f32 %v2715, %v2719
    %v2722 = vlaneseq
    %v2723 = vshrl.u32 %v2722, 7
    %v2724 = vsub.s32 2, %v2723
    %v2725 = vrot.slane %v52, %v2724
    %v2726 = vadd.f32 %v2720, %v2725
    %v2727 = vadd.f32 %v2721, %v2725
    %v2728 = vlaneseq
    %v2729 = vshrl.u32 %v2728, 7
    %v2730 = vsub.s32 5, %v2729
    %v2731 = vrot.slane %v51, %v2730
    %v2733 = vsel %vm57, %v2726, 0
    %v2736 = vsel %vm57, %v2727, 0
    %2738 = vmatprep.subr.mxu0 0.0
    %2739 = vmatpush1.msra.mxu0 %v33
    %2740 = vmatprep.subr.mxu0 0.0
    %2741 = vmatpush1.msra.mxu0 %v36
    %2742 = vmatprep.subr.mxu0 0.0
    %2743 = vmatpush1.msra.mxu0 %v39
    %2744 = vmatprep.subr.mxu0 0.0
    %2745 = vmatpush1.msra.mxu0 %v42
    %2746 = vmatprep.subr.mxu0 0.0
    %2747 = vmatpush1.msra.mxu0 0.0
    %2748 = vmatprep.subr.mxu0 0.0
    %2749 = vmatpush1.msra.mxu0 0.0
    %2750 = vmatprep.subr.mxu0 0.0
    %2751 = vmatpush1.msra.mxu0 0.0
    %2752 = vmatprep.subr.mxu0 0.0
    %2753 = vmatpush1.msra.mxu0 0.0
    %2754 = vmatprep.subr.mxu0 0.0
    %2755 = vmatpush1.msra.mxu0 0.0
    %2756 = vmatprep.subr.mxu0 0.0
    %2757 = vmatpush1.msra.mxu0 0.0
    %2758 = vmatprep.subr.mxu0 0.0
    %2759 = vmatpush1.msra.mxu0 0.0
    %2760 = vmatprep.subr.mxu0 0.0
    %2761 = vmatpush1.msra.mxu0 0.0
    %2762 = vmatprep.subr.mxu0 0.0
    %2763 = vmatpush1.msra.mxu0 0.0
    %2764 = vmatprep.subr.mxu0 0.0
    %2765 = vmatpush1.msra.mxu0 0.0
    %2766 = vmatprep.subr.mxu0 0.0
    %2767 = vmatpush1.msra.mxu0 0.0
    %2768 = vmatprep.subr.mxu0 0.0
    %2769 = vmatpush1.msra.mxu0 0.0
    %2770 = vmatprep.subr.mxu0 0.0
    %2771 = vmatpush1.msra.mxu0 0.0
    %2772 = vmatprep.subr.mxu0 0.0
    %2773 = vmatpush1.msra.mxu0 0.0
    %2774 = vmatprep.subr.mxu0 0.0
    %2775 = vmatpush1.msra.mxu0 0.0
    %2776 = vmatprep.subr.mxu0 0.0
    %2777 = vmatpush1.msra.mxu0 0.0
    %2778 = vmatprep.subr.mxu0 0.0
    %2779 = vmatpush1.msra.mxu0 0.0
    %2780 = vmatprep.subr.mxu0 0.0
    %2781 = vmatpush1.msra.mxu0 0.0
    %2782 = vmatprep.subr.mxu0 0.0
    %2783 = vmatpush1.msra.mxu0 0.0
    %2784 = vmatprep.subr.mxu0 0.0
    %2785 = vmatpush1.msra.mxu0 0.0
    %2786 = vmatprep.subr.mxu0 0.0
    %2787 = vmatpush1.msra.mxu0 0.0
    %2788 = vmatprep.subr.mxu0 0.0
    %2789 = vmatpush1.msra.mxu0 0.0
    %2790 = vmatprep.subr.mxu0 0.0
    %2791 = vmatpush1.msra.mxu0 0.0
    %2792 = vmatprep.subr.mxu0 0.0
    %2793 = vmatpush1.msra.mxu0 0.0
    %2794 = vmatprep.subr.mxu0 0.0
    %2795 = vmatpush1.msra.mxu0 0.0
    %2796 = vmatprep.subr.mxu0 0.0
    %2797 = vmatpush1.msra.mxu0 0.0
    %2798 = vmatprep.subr.mxu0 0.0
    %2799 = vmatpush1.msra.mxu0 0.0
    %2800 = vmatprep.subr.mxu0 0.0
    %2801 = vmatpush1.msra.mxu0 0.0
    %2802 = vmatprep.mubr.f32.mxu0 0.0
    %2803 = vmatmul.mubr.f32.gmra.mrb[0].mxu0 %v2733
    %v2804 = vpop.f32.mrb[0].mxu0
    %v2805 = vadd.f32 %v2731, %v2804
    %v2806 = vpop.f32.mrb[0].mxu0
    %2807 = vmatprep.mubr.f32.mxu0 0.0
    %2808 = vmatmul.mubr.f32.gmra.mrb[0].mxu0 %v2736
    %v2809 = vpop.f32.mrb[0].mxu0
    %v2810 = vadd.f32 %v2731, %v2809
    %v2811 = vpop.f32.mrb[0].mxu0
    %2812 = vdwg.mxu0
    %v2813 = vmax.f32 %v2805, 0.0
    %v2814 = vmax.f32 %v2810, 0.0
    %v2815 = vlaneseq
    %v2816 = vshrl.u32 %v2815, 7
    %v2817 = vsub.s32 6, %v2816
    %v2818 = vrot.slane %v51, %v2817
    %vm2819 = vcmask 523264
    %v2821 = vsel %vm2819, %v2813, 0
    %v2824 = vsel %vm2819, %v2814, 0
    %2826 = vmatprep.subr.mxu0 0.0
    %2827 = vmatpush1.msra.mxu0 %v43
    %2828 = vmatprep.subr.mxu0 0.0
    %2829 = vmatpush1.msra.mxu0 %v44
    %2830 = vmatprep.subr.mxu0 0.0
    %2831 = vmatpush1.msra.mxu0 %v45
    %2832 = vmatprep.subr.mxu0 0.0
    %2833 = vmatpush1.msra.mxu0 %v46
    %2834 = vmatprep.subr.mxu0 0.0
    %2835 = vmatpush1.msra.mxu0 %v47
    %2836 = vmatprep.subr.mxu0 0.0
    %2837 = vmatpush1.msra.mxu0 %v48
    %2838 = vmatprep.subr.mxu0 0.0
    %2839 = vmatpush1.msra.mxu0 %v49
    %2840 = vmatprep.subr.mxu0 0.0
    %2841 = vmatpush1.msra.mxu0 %v50
    %2842 = vmatprep.subr.mxu0 0.0
    %2843 = vmatpush1.msra.mxu0 0.0
    %2844 = vmatprep.subr.mxu0 0.0
    %2845 = vmatpush1.msra.mxu0 0.0
    %2846 = vmatprep.subr.mxu0 0.0
    %2847 = vmatpush1.msra.mxu0 0.0
    %2848 = vmatprep.subr.mxu0 0.0
    %2849 = vmatpush1.msra.mxu0 0.0
    %2850 = vmatprep.subr.mxu0 0.0
    %2851 = vmatpush1.msra.mxu0 0.0
    %2852 = vmatprep.subr.mxu0 0.0
    %2853 = vmatpush1.msra.mxu0 0.0
    %2854 = vmatprep.subr.mxu0 0.0
    %2855 = vmatpush1.msra.mxu0 0.0
    %2856 = vmatprep.subr.mxu0 0.0
    %2857 = vmatpush1.msra.mxu0 0.0
    %2858 = vmatprep.subr.mxu0 0.0
    %2859 = vmatpush1.msra.mxu0 0.0
    %2860 = vmatprep.subr.mxu0 0.0
    %2861 = vmatpush1.msra.mxu0 0.0
    %2862 = vmatprep.subr.mxu0 0.0
    %2863 = vmatpush1.msra.mxu0 0.0
    %2864 = vmatprep.subr.mxu0 0.0
    %2865 = vmatpush1.msra.mxu0 0.0
    %2866 = vmatprep.subr.mxu0 0.0
    %2867 = vmatpush1.msra.mxu0 0.0
    %2868 = vmatprep.subr.mxu0 0.0
    %2869 = vmatpush1.msra.mxu0 0.0
    %2870 = vmatprep.subr.mxu0 0.0
    %2871 = vmatpush1.msra.mxu0 0.0
    %2872 = vmatprep.subr.mxu0 0.0
    %2873 = vmatpush1.msra.mxu0 0.0
    %2874 = vmatprep.subr.mxu0 0.0
    %2875 = vmatpush1.msra.mxu0 0.0
    %2876 = vmatprep.subr.mxu0 0.0
    %2877 = vmatpush1.msra.mxu0 0.0
    %2878 = vmatprep.subr.mxu0 0.0
    %2879 = vmatpush1.msra.mxu0 0.0
    %2880 = vmatprep.subr.mxu0 0.0
    %2881 = vmatpush1.msra.mxu0 0.0
    %2882 = vmatprep.subr.mxu0 0.0
    %2883 = vmatpush1.msra.mxu0 0.0
    %2884 = vmatprep.subr.mxu0 0.0
    %2885 = vmatpush1.msra.mxu0 0.0
    %2886 = vmatprep.subr.mxu0 0.0
    %2887 = vmatpush1.msra.mxu0 0.0
    %2888 = vmatprep.subr.mxu0 0.0
    %2889 = vmatpush1.msra.mxu0 0.0
    %2890 = vmatprep.mubr.f32.mxu0 0.0
    %2891 = vmatmul.mubr.f32.gmra.mrb[0].mxu0 %v2821
    %v2892 = vpop.f32.mrb[0].mxu0
    %v2893 = vadd.f32 %v2818, %v2892
    %v2894 = vpop.f32.mrb[0].mxu0
    %2895 = vmatprep.mubr.f32.mxu0 0.0
    %2896 = vmatmul.mubr.f32.gmra.mrb[0].mxu0 %v2824
    %v2897 = vpop.f32.mrb[0].mxu0
    %v2898 = vadd.f32 %v2818, %v2897
    %v2899 = vpop.f32.mrb[0].mxu0
    %2900 = vdwg.mxu0
    %v2901 = vadd.f32 %v2893, %v2726
    %v2902 = vadd.f32 %v2898, %v2727
    %v2903 = vsel %vm57, %v2901, 0.0
    %2904 = vadd.xlane.f32.xlu0 %v2903
    %v2905 = vpop.xlane.xlu0 %2904
    %v2906 = vsel %vm57, %v2902, 0.0
    %2907 = vadd.xlane.f32.xlu0 %v2906
    %v2908 = vpop.xlane.xlu0 %2907
    %v2909 = vmul.f32 %v2905, %v1313
    %v2910 = vmul.f32 %v2908, %v1313
    %v2911 = vsub.f32 %v2901, %v2909
    %v2912 = vsub.f32 %v2902, %v2910
    %v2913 = vmul.f32 %v2911, %v2911
    %v2914 = vmul.f32 %v2912, %v2912
    %v2915 = vsel %vm57, %v2913, 0.0
    %2916 = vadd.xlane.f32.xlu0 %v2915
    %v2917 = vpop.xlane.xlu0 %2916
    %v2918 = vsel %vm57, %v2914, 0.0
    %2919 = vadd.xlane.f32.xlu0 %v2918
    %v2920 = vpop.xlane.xlu0 %2919
    %v2921 = vmul.f32 %v2917, %v1313
    %v2922 = vmul.f32 %v2920, %v1313
    %v2923 = vadd.f32 %v2921, 1e-12
    %v2924 = vadd.f32 %v2922, 1e-12
    %v2925 = vrsqrt.pop %v2923
    %v2926 = vrsqrt.pop %v2924
    %v2927 = vmul.f32 %v2911, %v2925
    %v2928 = vmul.f32 %v2912, %v2926
    %v2929 = vlaneseq
    %v2930 = vshrl.u32 %v2929, 7
    %v2931 = vsub.s32 3, %v2930
    %v2932 = vrot.slane %v52, %v2931
    %v2933 = vmul.f32 %v2927, %v2932
    %v2934 = vmul.f32 %v2928, %v2932
    %v2935 = vlaneseq
    %v2936 = vshrl.u32 %v2935, 7
    %v2937 = vsub.s32 4, %v2936
    %v2938 = vrot.slane %v52, %v2937
    %v2939 = vadd.f32 %v2933, %v2938
    %v2940 = vadd.f32 %v2934, %v2938
    %2941 = vst.msk [vmem:[#allocation2] sm:$0xff] %vm57, %v2939
    %2942 = vst.msk [vmem:[#allocation2 + $0x8] sm:$0xff] %vm57, %v2940
    // Predicated region
    $region30: #{decoder_layer.1} parent=1 // pred_check
      _
    $region31: #{decoder_layer.1} parent=1 // pred_check_branch
      %2944 = sbr.rel (0) target = $region33
    $region32: #{decoder_layer.1} parent=1 // pred_region
      %s2946 = ssub.s32 256, 256
      %2947 = vsyncadd [#allocation3], %s2946
      %s2948 = sshll.u32 [#allocation2], 4
      %s2949 = int_to_ptr.vmem [resolvable:$true] %s2948
      %2954 = dma.vmem_to_hbm [thread:$0]  %s2949, 256, %s7, [#allocation3], 128, 128, 8
    $region33: #{decoder_layer.1} parent=1 // pred_fallthru
      _
    // Predicated region
    $region34: #{decoder_layer.1} parent=1 // pred_check
      _
    $region35: #{decoder_layer.1} parent=1 // pred_check_branch
      %2956 = sbr.rel (0) target = $region37
    $region36: #{decoder_layer.1} parent=1 // pred_region
      %2957 = dma.done [#allocation3], 256
    $region37: #{decoder_layer.1} parent=1 // pred_fallthru
      _
    %2958 = vsyncpa [#allocation3], 1

</llo_original>
